<compile_context>
chip_gen: v7x
topology: tpu7x:2x2x1
jax: 0.10.0
libtpu: 0.0.40
codegen_flags: <defaults>
</compile_context>

<pallas_src>
import functools
import math

import jax
import jax.numpy as jnp
from jax.experimental import pallas as pl
from jax.experimental.pallas import tpu as pltpu


# ---------------------------------------------------------------------------
# small in-kernel helpers
# ---------------------------------------------------------------------------
def _silu(x):
    # sigmoid via EUP exp + EUP approximate reciprocal (keeps the VPU free)
    return x * pl.reciprocal(1.0 + jnp.exp(-x), approx=True)


def _softplus(x):
    return jnp.maximum(x, 0.0) + jnp.log1p(jnp.exp(-jnp.abs(x)))


def _layernorm(x, w, b, eps):
    mu = jnp.mean(x, axis=-1, keepdims=True)
    var = jnp.mean((x - mu) ** 2, axis=-1, keepdims=True)
    return (x - mu) * jax.lax.rsqrt(var + eps) * w + b


# ---------------------------------------------------------------------------
# VMEM budget helpers (generation-aware)
# ---------------------------------------------------------------------------
def _vmem_budget_bytes():
    cap = 128 * 1024 * 1024
    try:
        info = pltpu.get_tpu_info()
        cap = int(getattr(info, "vmem_capacity_bytes", cap))
    except Exception:
        pass
    if cap <= 64 * 1024 * 1024:          # v7x: 64 MiB physical per TensorCore
        return 48 * 1024 * 1024
    return 96 * 1024 * 1024              # v5e / v6e: 128 MiB physical


def _estimate_vmem_bytes(seq_tile, D, d_inner, d_state, d_conv, wx_cols,
                         dt_rank, chunk):
    # double-buffered activation streams: hidden bf16 in/out, residual f32 in/out
    act = 2 * seq_tile * D * (2 + 4 + 2 + 4)
    # single-buffered weights
    w = (D * 2 * d_inner * 2 + d_inner * wx_cols * 2 + dt_rank * d_inner * 2
         + d_inner * D * 2 + d_conv * d_inner * 4 + 8 * d_inner * 4
         + 4 * D * 4 + d_state * d_inner * 4)
    # scratch: state, conv halo buffer, delta, du, bc, 3 chunk slabs
    scr = (d_state * d_inner * 4 + (seq_tile + 8) * d_inner * 4
           + 2 * seq_tile * d_inner * 4 + seq_tile * 2 * d_state * 4
           + 3 * chunk * d_state * d_inner * 4)
    return act + w + scr


def _choose_seq_tile(L, D, d_inner, d_state, d_conv, wx_cols, dt_rank, budget):
    for t in (1024, 512, 256, 128, 64, 32, 16, 8):
        if L % t == 0:
            chunk = 8 if t % 8 == 0 else t
            if _estimate_vmem_bytes(t, D, d_inner, d_state, d_conv, wx_cols,
                                    dt_rank, chunk) <= budget:
                return t
    return L     # short sequences: one tile (block == full dim is always legal)


# ---------------------------------------------------------------------------
# Pallas kernel: one Block (Add + LayerNorm + Mamba mixer), tiled over (B, L)
# ---------------------------------------------------------------------------
def _mamba_block_kernel(h_ref, r_ref, lnw_ref, lnb_ref, win_ref, convw_ref,
                        convb_ref, wx_ref, dtup_ref, dtb_ref, a_ref, dpar_ref,
                        wout_ref,
                        hout_ref, rout_ref,
                        state_ref, xext_ref, delta_ref, du_ref, bc_ref,
                        decay_ref, dbu_ref, cb_ref,
                        *, d_inner, d_conv, d_state, dt_rank, seq_tile, chunk,
                        eps):
    l = pl.program_id(1)
    halo = d_conv - 1
    pad = 8                               # sublane-aligned conv input offset

    # reset the per-sequence carries (scan state, conv halo) at the first tile
    @pl.when(l == 0)
    def _():
        state_ref[...] = jnp.zeros_like(state_ref)
        xext_ref[0:pad, :] = jnp.zeros((pad, d_inner), xext_ref.dtype)

    # ---- Add -> LayerNorm (prenorm residual stream, fp32) ----
    resid = h_ref[0].astype(jnp.float32) + r_ref[0].astype(jnp.float32)
    rout_ref[0] = resid.astype(rout_ref.dtype)
    hn = _layernorm(resid, lnw_ref[...], lnb_ref[...], eps)

    # ---- in_proj: (tL, D) @ (D, 2*d_inner), bf16 operands, f32 accumulate ----
    xz = jnp.dot(hn.astype(jnp.bfloat16), win_ref[...],
                 preferred_element_type=jnp.float32)
    x = xz[:, :d_inner]
    z = xz[:, d_inner:]

    # ---- depthwise causal conv1d; sublane-aligned store, halo carried in VMEM ----
    xext_ref[pad:pad + seq_tile, :] = x                  # aligned big store
    acc = jnp.zeros((seq_tile, d_inner), jnp.float32)
    for k in range(d_conv):                              # d_conv is tiny (4): static
        acc = acc + (xext_ref[pad - halo + k:pad - halo + k + seq_tile, :]
                     * convw_ref[k:k + 1, :])
    # save the last d_conv-1 conv inputs as the halo for the next L-tile
    xext_ref[pad - halo:pad, :] = xext_ref[pad + seq_tile - halo:pad + seq_tile, :]
    x_conv = _silu(acc + convb_ref[...])

    # ---- fused x_proj (width zero-padded to a multiple of 128): [B | C | dt_low | 0]
    xdbc = jnp.dot(x_conv.astype(jnp.bfloat16), wx_ref[...],
                   preferred_element_type=jnp.float32)
    bc_ref[...] = xdbc[:, :2 * d_state]                  # (tL, 2*d_state)
    dt = jnp.dot(xdbc[:, 2 * d_state:2 * d_state + dt_rank].astype(jnp.bfloat16),
                 dtup_ref[...], preferred_element_type=jnp.float32)
    delta = _softplus(dt + dtb_ref[...])
    delta_ref[...] = delta
    du_ref[...] = delta * x_conv

    # ---- selective scan: vectorized over d_state, exp/dBu hoisted per chunk ----
    a_full = a_ref[...]                                  # (d_state, d_inner)

    def chunk_body(c, carry):
        t0 = pl.multiple_of(c * chunk, chunk)
        d_c = delta_ref[pl.ds(t0, chunk), :]             # (chunk, d_inner)
        du_c = du_ref[pl.ds(t0, chunk), :]               # (chunk, d_inner)
        bc_c = bc_ref[pl.ds(t0, chunk), :]               # (chunk, 2*d_state)
        # state-independent terms, batched over the whole chunk (full occupancy)
        decay_ref[...] = jnp.exp(d_c[:, None, :] * a_full[None, :, :])
        dbu_ref[...] = du_c[:, None, :] * bc_c[:, :d_state, None]
        cb_ref[...] = jnp.broadcast_to(bc_c[:, d_state:2 * d_state, None],
                                       (chunk, d_state, d_inner))
        # serial recurrence: pure multiply/add + sublane reduction
        for t in range(chunk):                           # chunk is small: static unroll
            s = decay_ref[t] * state_ref[...] + dbu_ref[t]
            state_ref[...] = s
            y_t = jnp.sum(s * cb_ref[t], axis=0, keepdims=True)   # (1, d_inner)
            du_ref[pl.ds(t0 + t, 1), :] = y_t            # reuse du_ref as scan output
        return carry

    jax.lax.fori_loop(0, seq_tile // chunk, chunk_body, 0)

    # ---- D*u skip, output gate, out_proj ----
    y = du_ref[...] + x_conv * dpar_ref[...]
    y = y * _silu(z)
    out = jnp.dot(y.astype(jnp.bfloat16), wout_ref[...],
                  preferred_element_type=jnp.float32)    # (tL, D)
    hout_ref[0] = out.astype(hout_ref.dtype)


def mamba_block_call(hidden, residual, p, *, d_conv, d_state, eps, seq_tile,
                     vmem_limit):
    B, L, D = hidden.shape
    d_inner = p["a_t"].shape[1]
    dt_rank = p["dtup"].shape[0]
    n_lt = L // seq_tile
    chunk = 8 if seq_tile % 8 == 0 else seq_tile
    kernel = functools.partial(_mamba_block_kernel, d_inner=d_inner,
                               d_conv=d_conv, d_state=d_state, dt_rank=dt_rank,
                               seq_tile=seq_tile, chunk=chunk, eps=eps)
    act_spec = pl.BlockSpec((1, seq_tile, D), lambda b, l: (b, l, 0))

    def wspec(a):
        # constant-index weights: single-buffered (no gain from double buffering)
        return pl.BlockSpec(a.shape, lambda b, l, n=a.ndim: (0,) * n,
                            pipeline_mode=pl.Buffered(1))

    # TODO(synk): at very large d_model/d_inner, also tile win/wout along
    # d_inner (extra grid axis or in-kernel pltpu.emit_pipeline) instead of
    # keeping them fully VMEM-resident.
    weights = [p["lnw"], p["lnb"], p["win"], p["convw"], p["convb"], p["wx"],
               p["dtup"], p["dtb"], p["a_t"], p["dpar"], p["wout"]]
    return pl.pallas_call(
        kernel,
        grid=(B, n_lt),
        in_specs=[act_spec, act_spec] + [wspec(a) for a in weights],
        out_specs=[act_spec, act_spec],
        out_shape=[jax.ShapeDtypeStruct((B, L, D), jnp.bfloat16),   # hidden (bf16)
                   jax.ShapeDtypeStruct((B, L, D), jnp.float32)],   # residual (fp32)
        scratch_shapes=[
            pltpu.VMEM((d_state, d_inner), jnp.float32),                # scan state
            pltpu.VMEM((seq_tile + 8, d_inner), jnp.float32),           # conv in + halo
            pltpu.VMEM((seq_tile, d_inner), jnp.float32),               # delta
            pltpu.VMEM((seq_tile, d_inner), jnp.float32),               # delta*u / y
            pltpu.VMEM((seq_tile, 2 * d_state), jnp.float32),           # [B | C]
            pltpu.VMEM((chunk, d_state, d_inner), jnp.float32),         # exp(dA)
            pltpu.VMEM((chunk, d_state, d_inner), jnp.float32),         # dBu
            pltpu.VMEM((chunk, d_state, d_inner), jnp.float32),         # C broadcast
        ],
        input_output_aliases={0: 0, 1: 1},
        compiler_params=pltpu.CompilerParams(
            dimension_semantics=("parallel", "arbitrary"),
            vmem_limit_bytes=vmem_limit),
    )(hidden, residual, *weights)


# ---------------------------------------------------------------------------
# Pallas kernel: final Add + LayerNorm (tiled over (B, L))
# ---------------------------------------------------------------------------
def _final_norm_kernel(h_ref, r_ref, w_ref, b_ref, o_ref, *, eps):
    resid = h_ref[0].astype(jnp.float32) + r_ref[0].astype(jnp.float32)
    o_ref[0] = _layernorm(resid, w_ref[...], b_ref[...], eps).astype(o_ref.dtype)


def final_norm_call(hidden, residual, w, b, eps, seq_tile, vmem_limit):
    B, L, D = hidden.shape
    n_lt = L // seq_tile
    act_spec = pl.BlockSpec((1, seq_tile, D), lambda bb, l: (bb, l, 0))
    vec_spec = pl.BlockSpec((1, D), lambda bb, l: (0, 0),
                            pipeline_mode=pl.Buffered(1))
    return pl.pallas_call(
        functools.partial(_final_norm_kernel, eps=eps),
        grid=(B, n_lt),
        in_specs=[act_spec, act_spec, vec_spec, vec_spec],
        out_specs=act_spec,
        out_shape=jax.ShapeDtypeStruct((B, L, D), jnp.float32),
        compiler_params=pltpu.CompilerParams(
            dimension_semantics=("parallel", "parallel"),
            vmem_limit_bytes=vmem_limit),
    )(hidden, residual, w, b)


# ---------------------------------------------------------------------------
# deterministic parameter construction (shapes match MixerModel.__init__)
# ---------------------------------------------------------------------------
def init_mixer_model_params(key, *, d_model, n_layer, vocab_size,
                            d_state=16, d_conv=4, expand=2,
                            dt_min=0.001, dt_max=0.1, dt_init_floor=1e-4,
                            dt_scale=1.0):
    d_inner = int(expand * d_model)
    dt_rank = math.ceil(d_model / 16)
    keys = jax.random.split(key, 1 + n_layer)
    params = {"embedding": 0.02 * jax.random.normal(
        keys[0], (vocab_size, d_model), jnp.float32)}
    layers = []
    for i in range(n_layer):
        k = jax.random.split(keys[1 + i], 8)
        bound_in = 1.0 / math.sqrt(d_model)
        in_proj_w = jax.random.uniform(k[0], (2 * d_inner, d_model),
                                       jnp.float32, -bound_in, bound_in)
        bound_conv = 1.0 / math.sqrt(d_conv)
        conv_w = jax.random.uniform(k[1], (d_inner, d_conv), jnp.float32,
                                    -bound_conv, bound_conv)
        conv_b = jax.random.uniform(k[2], (d_inner,), jnp.float32,
                                    -bound_conv, bound_conv)
        bound_x = 1.0 / math.sqrt(d_inner)
        x_proj_w = jax.random.uniform(k[3], (dt_rank + 2 * d_state, d_inner),
                                      jnp.float32, -bound_x, bound_x)
        dt_init_std = dt_rank ** (-0.5) * dt_scale
        # TODO(synk): init_mode='random' would use uniform(-std, std) here.
        dt_proj_w = jnp.full((d_inner, dt_rank), dt_init_std, jnp.float32)
        dt = jnp.exp(jax.random.uniform(k[4], (d_inner,), jnp.float32)
                     * (math.log(dt_max) - math.log(dt_min)) + math.log(dt_min))
        dt = jnp.clip(dt, dt_init_floor)
        dt_bias = dt + jnp.log(-jnp.expm1(-dt))                # inv_dt
        A_log = jnp.log(jnp.tile(
            jnp.arange(1, d_state + 1, dtype=jnp.float32)[None, :], (d_inner, 1)))
        D_par = jnp.ones((d_inner,), jnp.float32)
        bound_out = 1.0 / math.sqrt(d_inner)
        out_proj_w = (jax.random.uniform(k[5], (d_model, d_inner), jnp.float32,
                                         -bound_out, bound_out)
                      / math.sqrt(n_layer))                    # _init_weights rescale

        # derived / pre-transposed tensors for the kernel
        x_proj_w_t = x_proj_w.T                                # (d_inner, dt_rank+2*d_state)
        dt_down = x_proj_w_t[:, :dt_rank]
        WB = x_proj_w_t[:, dt_rank:dt_rank + d_state]
        WC = x_proj_w_t[:, dt_rank + d_state:]
        wx_fused = jnp.concatenate([WB, WC, dt_down], axis=1)  # [B | C | dt_low]
        # zero-pad the fused width up to a multiple of 128 lanes (clean MXU tiles)
        wx_cols = 2 * d_state + dt_rank
        wx_pad = ((wx_cols + 127) // 128) * 128
        if wx_pad > wx_cols:
            wx_fused = jnp.concatenate(
                [wx_fused, jnp.zeros((d_inner, wx_pad - wx_cols), jnp.float32)],
                axis=1)

        layers.append({
            "lnw": jnp.ones((1, d_model), jnp.float32),
            "lnb": jnp.zeros((1, d_model), jnp.float32),
            "win": in_proj_w.T.astype(jnp.bfloat16),           # (d_model, 2*d_inner)
            "convw": conv_w.T,                                 # (d_conv, d_inner)
            "convb": conv_b[None, :],
            "wx": wx_fused.astype(jnp.bfloat16),               # (d_inner, pad128(2*d_state+dt_rank))
            "dtup": dt_proj_w.T.astype(jnp.bfloat16),          # (dt_rank, d_inner)
            "dtb": dt_bias[None, :],
            "a_t": (-jnp.exp(A_log)).T,                        # A^T: (d_state, d_inner)
            "dpar": D_par[None, :],
            "wout": out_proj_w.T.astype(jnp.bfloat16),         # (d_inner, d_model)
        })
    params["layers"] = layers
    params["norm_f_w"] = jnp.ones((1, d_model), jnp.float32)
    params["norm_f_b"] = jnp.zeros((1, d_model), jnp.float32)
    dims = dict(d_inner=d_inner, dt_rank=dt_rank, d_state=d_state, d_conv=d_conv)
    return params, dims


# ---------------------------------------------------------------------------
# MixerModel.forward
# ---------------------------------------------------------------------------
def mixer_model_forward(input_ids, params, *, d_conv, d_state, eps=1e-5):
    # embedding lookup (gather) kept as plain-JAX glue; hidden stream in bf16
    hidden = params["embedding"][input_ids].astype(jnp.bfloat16)  # (B, L, D)
    residual = jnp.zeros(hidden.shape, jnp.float32)     # first block: residual = hidden
    B, L, D = hidden.shape
    layer0 = params["layers"][0]
    d_inner = layer0["a_t"].shape[1]
    dt_rank = layer0["dtup"].shape[0]
    wx_cols = layer0["wx"].shape[1]
    budget = _vmem_budget_bytes()
    seq_tile = _choose_seq_tile(L, D, d_inner, d_state, d_conv, wx_cols,
                                dt_rank, budget)
    for layer_p in params["layers"]:
        hidden, residual = mamba_block_call(hidden, residual, layer_p,
                                            d_conv=d_conv, d_state=d_state,
                                            eps=eps, seq_tile=seq_tile,
                                            vmem_limit=budget)
    return final_norm_call(hidden, residual,
                           params["norm_f_w"], params["norm_f_b"], eps,
                           seq_tile, budget)
    # TODO(synk): inference cache / single-token step path and the (unused, None)
    # adapter update paths are not implemented.


if __name__ == "__main__":
    d_model, n_layer, vocab_size = 32, 2, 100
    B, L = 2, 8
    key = jax.random.PRNGKey(0)
    pkey, ikey = jax.random.split(key)
    params, dims = init_mixer_model_params(pkey, d_model=d_model,
                                           n_layer=n_layer,
                                           vocab_size=vocab_size)
    input_ids = jax.random.randint(ikey, (B, L), 0, vocab_size)
    fwd = jax.jit(functools.partial(mixer_model_forward,
                                    d_conv=dims["d_conv"],
                                    d_state=dims["d_state"]))
    out = fwd(input_ids, params)
    out = jax.block_until_ready(out)
    assert out.shape == (B, L, d_model) and out.dtype == jnp.float32
    print("KERNEL_OK")
</pallas_src>

<mosaic_0001>
module attributes {stable_mosaic.version = 11 : i64} {
  func.func @_final_norm_kernel(%arg0: i32, %arg1: i32, %arg2: memref<1x8x32xbf16, #tpu.memory_space<vmem>>, %arg3: memref<1x8x32xf32, #tpu.memory_space<vmem>>, %arg4: memref<1x32xf32, #tpu.memory_space<vmem>>, %arg5: memref<1x32xf32, #tpu.memory_space<vmem>>, %arg6: memref<1x8x32xf32, #tpu.memory_space<vmem>>) attributes {dimension_semantics = [#tpu.dimension_semantics<parallel>, #tpu.dimension_semantics<parallel>], iteration_bounds = array<i64: 2, 1>, scalar_prefetch = 0 : i64, scratch_operands = 0 : i64, tpu.core_type = #tpu.core_type<tc>, window_params = [{transform_indices = @transform_0, window_bounds = array<i64: 1, 8, 32>}, {transform_indices = @transform_1, window_bounds = array<i64: 1, 8, 32>}, {pipeline_mode = #tpu.pipeline_mode<synchronous>, transform_indices = @transform_2, window_bounds = array<i64: 1, 32>}, {pipeline_mode = #tpu.pipeline_mode<synchronous>, transform_indices = @transform_3, window_bounds = array<i64: 1, 32>}, {transform_indices = @transform_4, window_bounds = array<i64: 1, 8, 32>}]} {
    %c0 = arith.constant 0 : index
    %c0_0 = arith.constant 0 : index
    %c0_1 = arith.constant 0 : index
    %0 = vector.load %arg2[%c0, %c0_0, %c0_1] : memref<1x8x32xbf16, #tpu.memory_space<vmem>>, vector<1x8x32xbf16>
    %1 = vector.shape_cast %0 : vector<1x8x32xbf16> to vector<8x32xbf16>
    %2 = arith.extf %1 : vector<8x32xbf16> to vector<8x32xf32>
    %c0_2 = arith.constant 0 : index
    %c0_3 = arith.constant 0 : index
    %c0_4 = arith.constant 0 : index
    %3 = vector.load %arg3[%c0_2, %c0_3, %c0_4] : memref<1x8x32xf32, #tpu.memory_space<vmem>>, vector<1x8x32xf32>
    %4 = vector.shape_cast %3 : vector<1x8x32xf32> to vector<8x32xf32>
    %5 = arith.addf %2, %4 : vector<8x32xf32>
    %c0_5 = arith.constant 0 : index
    %c0_6 = arith.constant 0 : index
    %6 = vector.load %arg4[%c0_5, %c0_6] : memref<1x32xf32, #tpu.memory_space<vmem>>, vector<1x32xf32>
    %c0_7 = arith.constant 0 : index
    %c0_8 = arith.constant 0 : index
    %7 = vector.load %arg5[%c0_7, %c0_8] : memref<1x32xf32, #tpu.memory_space<vmem>>, vector<1x32xf32>
    %cst = arith.constant dense<0.000000e+00> : vector<8xf32>
    %8 = vector.multi_reduction <add>, %5, %cst [1] : vector<8x32xf32> to vector<8xf32>
    %9 = vector.shape_cast %8 : vector<8xf32> to vector<8x1xf32>
    %cst_9 = arith.constant 3.200000e+01 : f32
    %10 = vector.broadcast %cst_9 : f32 to vector<8x1xf32>
    %11 = arith.divf %9, %10 : vector<8x1xf32>
    %12 = vector.broadcast %11 : vector<8x1xf32> to vector<8x32xf32>
    %13 = arith.subf %5, %12 : vector<8x32xf32>
    %14 = arith.mulf %13, %13 : vector<8x32xf32>
    %cst_10 = arith.constant dense<0.000000e+00> : vector<8xf32>
    %15 = vector.multi_reduction <add>, %14, %cst_10 [1] : vector<8x32xf32> to vector<8xf32>
    %16 = vector.shape_cast %15 : vector<8xf32> to vector<8x1xf32>
    %cst_11 = arith.constant 3.200000e+01 : f32
    %17 = vector.broadcast %cst_11 : f32 to vector<8x1xf32>
    %18 = arith.divf %16, %17 : vector<8x1xf32>
    %19 = vector.broadcast %11 : vector<8x1xf32> to vector<8x32xf32>
    %20 = arith.subf %5, %19 : vector<8x32xf32>
    %cst_12 = arith.constant 9.99999974E-6 : f32
    %21 = vector.broadcast %cst_12 : f32 to vector<8x1xf32>
    %22 = arith.addf %18, %21 : vector<8x1xf32>
    %23 = math.rsqrt %22 : vector<8x1xf32>
    %24 = vector.broadcast %23 : vector<8x1xf32> to vector<8x32xf32>
    %25 = arith.mulf %20, %24 : vector<8x32xf32>
    %26 = vector.broadcast %6 : vector<1x32xf32> to vector<8x32xf32>
    %27 = arith.mulf %25, %26 : vector<8x32xf32>
    %28 = vector.broadcast %7 : vector<1x32xf32> to vector<8x32xf32>
    %29 = arith.addf %27, %28 : vector<8x32xf32>
    %c0_13 = arith.constant 0 : index
    %c0_14 = arith.constant 0 : index
    %c0_15 = arith.constant 0 : index
    %30 = vector.load %arg6[%c0_13, %c0_14, %c0_15] : memref<1x8x32xf32, #tpu.memory_space<vmem>>, vector<1x8x32xf32>
    %31 = vector.shape_cast %30 : vector<1x8x32xf32> to vector<8x32xf32>
    %32 = vector.shape_cast %29 : vector<8x32xf32> to vector<1x8x32xf32>
    tpu.vector_store %arg6[%c0_13, %c0_14, %c0_15], %32 {strides = array<i32>} : memref<1x8x32xf32, #tpu.memory_space<vmem>>, vector<1x8x32xf32>,
    return
  }
  func.func @transform_0(%arg0: i32, %arg1: i32) -> (i32, i32, i32) {
    %c0_i32 = arith.constant 0 : i32
    %c0_i32_0 = arith.constant 0 : i32
    return %arg0, %arg1, %c0_i32 : i32, i32, i32
  }
  func.func @transform_1(%arg0: i32, %arg1: i32) -> (i32, i32, i32) {
    %c0_i32 = arith.constant 0 : i32
    %c0_i32_0 = arith.constant 0 : i32
    return %arg0, %arg1, %c0_i32 : i32, i32, i32
  }
  func.func @transform_2(%arg0: i32, %arg1: i32) -> (i32, i32) {
    %c0_i32 = arith.constant 0 : i32
    %c0_i32_0 = arith.constant 0 : i32
    %c0_i32_1 = arith.constant 0 : i32
    return %c0_i32, %c0_i32_0 : i32, i32
  }
  func.func @transform_3(%arg0: i32, %arg1: i32) -> (i32, i32) {
    %c0_i32 = arith.constant 0 : i32
    %c0_i32_0 = arith.constant 0 : i32
    %c0_i32_1 = arith.constant 0 : i32
    return %c0_i32, %c0_i32_0 : i32, i32
  }
  func.func @transform_4(%arg0: i32, %arg1: i32) -> (i32, i32, i32) {
    %c0_i32 = arith.constant 0 : i32
    %c0_i32_0 = arith.constant 0 : i32
    return %arg0, %arg1, %c0_i32 : i32, i32, i32
  }
}

module attributes {stable_mosaic.version = 11 : i64} {
  func.func @_mamba_block_kernel(%arg0: i32, %arg1: i32, %arg2: memref<1x8x32xbf16, #tpu.memory_space<vmem>>, %arg3: memref<1x8x32xf32, #tpu.memory_space<vmem>>, %arg4: memref<1x32xf32, #tpu.memory_space<vmem>>, %arg5: memref<1x32xf32, #tpu.memory_space<vmem>>, %arg6: memref<32x128xbf16, #tpu.memory_space<vmem>>, %arg7: memref<4x64xf32, #tpu.memory_space<vmem>>, %arg8: memref<1x64xf32, #tpu.memory_space<vmem>>, %arg9: memref<64x128xbf16, #tpu.memory_space<vmem>>, %arg10: memref<2x64xbf16, #tpu.memory_space<vmem>>, %arg11: memref<1x64xf32, #tpu.memory_space<vmem>>, %arg12: memref<16x64xf32, #tpu.memory_space<vmem>>, %arg13: memref<1x64xf32, #tpu.memory_space<vmem>>, %arg14: memref<64x32xbf16, #tpu.memory_space<vmem>>, %arg15: memref<1x8x32xbf16, #tpu.memory_space<vmem>>, %arg16: memref<1x8x32xf32, #tpu.memory_space<vmem>>, %arg17: memref<16x64xf32, #tpu.memory_space<vmem>>, %arg18: memref<16x64xf32, #tpu.memory_space<vmem>>, %arg19: memref<8x64xf32, #tpu.memory_space<vmem>>, %arg20: memref<8x64xf32, #tpu.memory_space<vmem>>, %arg21: memref<8x32xf32, #tpu.memory_space<vmem>>, %arg22: memref<8x16x64xf32, #tpu.memory_space<vmem>>, %arg23: memref<8x16x64xf32, #tpu.memory_space<vmem>>, %arg24: memref<8x16x64xf32, #tpu.memory_space<vmem>>) attributes {dimension_semantics = [#tpu.dimension_semantics<parallel>, #tpu.dimension_semantics<arbitrary>], iteration_bounds = array<i64: 2, 1>, scalar_prefetch = 0 : i64, scratch_operands = 8 : i64, tpu.core_type = #tpu.core_type<tc>, window_params = [{transform_indices = @transform_0, window_bounds = array<i64: 1, 8, 32>}, {transform_indices = @transform_1, window_bounds = array<i64: 1, 8, 32>}, {pipeline_mode = #tpu.pipeline_mode<synchronous>, transform_indices = @transform_2, window_bounds = array<i64: 1, 32>}, {pipeline_mode = #tpu.pipeline_mode<synchronous>, transform_indices = @transform_3, window_bounds = array<i64: 1, 32>}, {pipeline_mode = #tpu.pipeline_mode<synchronous>, transform_indices = @transform_4, window_bounds = array<i64: 32, 128>}, {pipeline_mode = #tpu.pipeline_mode<synchronous>, transform_indices = @transform_5, window_bounds = array<i64: 4, 64>}, {pipeline_mode = #tpu.pipeline_mode<synchronous>, transform_indices = @transform_6, window_bounds = array<i64: 1, 64>}, {pipeline_mode = #tpu.pipeline_mode<synchronous>, transform_indices = @transform_7, window_bounds = array<i64: 64, 128>}, {pipeline_mode = #tpu.pipeline_mode<synchronous>, transform_indices = @transform_8, window_bounds = array<i64: 2, 64>}, {pipeline_mode = #tpu.pipeline_mode<synchronous>, transform_indices = @transform_9, window_bounds = array<i64: 1, 64>}, {pipeline_mode = #tpu.pipeline_mode<synchronous>, transform_indices = @transform_10, window_bounds = array<i64: 16, 64>}, {pipeline_mode = #tpu.pipeline_mode<synchronous>, transform_indices = @transform_11, window_bounds = array<i64: 1, 64>}, {pipeline_mode = #tpu.pipeline_mode<synchronous>, transform_indices = @transform_12, window_bounds = array<i64: 64, 32>}, {transform_indices = @transform_13, window_bounds = array<i64: 1, 8, 32>}, {transform_indices = @transform_14, window_bounds = array<i64: 1, 8, 32>}]} {
    %c0_i32 = arith.constant 0 : i32
    %0 = arith.cmpi eq, %arg1, %c0_i32 : i32
    %1 = arith.extui %0 : i1 to i32
    %c0_i32_0 = arith.constant 0 : i32
    %2 = arith.cmpi ne, %1, %c0_i32_0 : i32
    scf.if %2 {
      %cst_203 = arith.constant 0.000000e+00 : f32
      %274 = vector.broadcast %cst_203 : f32 to vector<16x64xf32>
      %c0_204 = arith.constant 0 : index
      %c0_205 = arith.constant 0 : index
      %275 = vector.load %arg17[%c0_204, %c0_205] : memref<16x64xf32, #tpu.memory_space<vmem>>, vector<16x64xf32>
      tpu.vector_store %arg17[%c0_204, %c0_205], %274 {strides = array<i32>} : memref<16x64xf32, #tpu.memory_space<vmem>>, vector<16x64xf32>,
      %cst_206 = arith.constant 0.000000e+00 : f32
      %276 = vector.broadcast %cst_206 : f32 to vector<8x64xf32>
      %c0_207 = arith.constant 0 : index
      %c0_208 = arith.constant 0 : index
      %277 = vector.load %arg18[%c0_207, %c0_208] : memref<16x64xf32, #tpu.memory_space<vmem>>, vector<8x64xf32>
      tpu.vector_store %arg18[%c0_207, %c0_208], %276 {strides = array<i32>} : memref<16x64xf32, #tpu.memory_space<vmem>>, vector<8x64xf32>,
    } else {
    }
    %c0 = arith.constant 0 : index
    %c0_1 = arith.constant 0 : index
    %c0_2 = arith.constant 0 : index
    %3 = vector.load %arg2[%c0, %c0_1, %c0_2] : memref<1x8x32xbf16, #tpu.memory_space<vmem>>, vector<1x8x32xbf16>
    %4 = vector.shape_cast %3 : vector<1x8x32xbf16> to vector<8x32xbf16>
    %5 = arith.extf %4 : vector<8x32xbf16> to vector<8x32xf32>
    %c0_3 = arith.constant 0 : index
    %c0_4 = arith.constant 0 : index
    %c0_5 = arith.constant 0 : index
    %6 = vector.load %arg3[%c0_3, %c0_4, %c0_5] : memref<1x8x32xf32, #tpu.memory_space<vmem>>, vector<1x8x32xf32>
    %7 = vector.shape_cast %6 : vector<1x8x32xf32> to vector<8x32xf32>
    %8 = arith.addf %5, %7 : vector<8x32xf32>
    %c0_6 = arith.constant 0 : index
    %c0_7 = arith.constant 0 : index
    %c0_8 = arith.constant 0 : index
    %9 = vector.load %arg16[%c0_6, %c0_7, %c0_8] : memref<1x8x32xf32, #tpu.memory_space<vmem>>, vector<1x8x32xf32>
    %10 = vector.shape_cast %9 : vector<1x8x32xf32> to vector<8x32xf32>
    %11 = vector.shape_cast %8 : vector<8x32xf32> to vector<1x8x32xf32>
    tpu.vector_store %arg16[%c0_6, %c0_7, %c0_8], %11 {strides = array<i32>} : memref<1x8x32xf32, #tpu.memory_space<vmem>>, vector<1x8x32xf32>,
    %c0_9 = arith.constant 0 : index
    %c0_10 = arith.constant 0 : index
    %12 = vector.load %arg4[%c0_9, %c0_10] : memref<1x32xf32, #tpu.memory_space<vmem>>, vector<1x32xf32>
    %c0_11 = arith.constant 0 : index
    %c0_12 = arith.constant 0 : index
    %13 = vector.load %arg5[%c0_11, %c0_12] : memref<1x32xf32, #tpu.memory_space<vmem>>, vector<1x32xf32>
    %cst = arith.constant dense<0.000000e+00> : vector<8xf32>
    %14 = vector.multi_reduction <add>, %8, %cst [1] : vector<8x32xf32> to vector<8xf32>
    %15 = vector.shape_cast %14 : vector<8xf32> to vector<8x1xf32>
    %cst_13 = arith.constant 3.200000e+01 : f32
    %16 = vector.broadcast %cst_13 : f32 to vector<8x1xf32>
    %17 = arith.divf %15, %16 : vector<8x1xf32>
    %18 = vector.broadcast %17 : vector<8x1xf32> to vector<8x32xf32>
    %19 = arith.subf %8, %18 : vector<8x32xf32>
    %20 = arith.mulf %19, %19 : vector<8x32xf32>
    %cst_14 = arith.constant dense<0.000000e+00> : vector<8xf32>
    %21 = vector.multi_reduction <add>, %20, %cst_14 [1] : vector<8x32xf32> to vector<8xf32>
    %22 = vector.shape_cast %21 : vector<8xf32> to vector<8x1xf32>
    %cst_15 = arith.constant 3.200000e+01 : f32
    %23 = vector.broadcast %cst_15 : f32 to vector<8x1xf32>
    %24 = arith.divf %22, %23 : vector<8x1xf32>
    %25 = vector.broadcast %17 : vector<8x1xf32> to vector<8x32xf32>
    %26 = arith.subf %8, %25 : vector<8x32xf32>
    %cst_16 = arith.constant 9.99999974E-6 : f32
    %27 = vector.broadcast %cst_16 : f32 to vector<8x1xf32>
    %28 = arith.addf %24, %27 : vector<8x1xf32>
    %29 = math.rsqrt %28 : vector<8x1xf32>
    %30 = vector.broadcast %29 : vector<8x1xf32> to vector<8x32xf32>
    %31 = arith.mulf %26, %30 : vector<8x32xf32>
    %32 = vector.broadcast %12 : vector<1x32xf32> to vector<8x32xf32>
    %33 = arith.mulf %31, %32 : vector<8x32xf32>
    %34 = vector.broadcast %13 : vector<1x32xf32> to vector<8x32xf32>
    %35 = arith.addf %33, %34 : vector<8x32xf32>
    %36 = arith.truncf %35 : vector<8x32xf32> to vector<8x32xbf16>
    %c0_17 = arith.constant 0 : index
    %c0_18 = arith.constant 0 : index
    %37 = vector.load %arg6[%c0_17, %c0_18] : memref<32x128xbf16, #tpu.memory_space<vmem>>, vector<32x128xbf16>
    %cst_19 = arith.constant dense<0.000000e+00> : vector<8x128xf32>
    %38 = tpu.matmul %36, %37, %cst_19 {dimension_numbers = #tpu.dot_dimension_numbers<[1], [0], [0], [1], [0, 0, 1, 1], [], []>} : vector<8x32xbf16>, vector<32x128xbf16>, vector<8x128xf32> -> vector<8x128xf32>
    %39 = vector.extract_strided_slice %38 {offsets = [0, 0], sizes = [8, 64], strides = [1, 1]} : vector<8x128xf32> to vector<8x64xf32>
    %40 = vector.extract_strided_slice %38 {offsets = [0, 64], sizes = [8, 64], strides = [1, 1]} : vector<8x128xf32> to vector<8x64xf32>
    %c8 = arith.constant 8 : index
    %c0_20 = arith.constant 0 : index
    %41 = vector.load %arg18[%c8, %c0_20] : memref<16x64xf32, #tpu.memory_space<vmem>>, vector<8x64xf32>
    tpu.vector_store %arg18[%c8, %c0_20], %39 {strides = array<i32>} : memref<16x64xf32, #tpu.memory_space<vmem>>, vector<8x64xf32>,
    %cst_21 = arith.constant 0.000000e+00 : f32
    %42 = vector.broadcast %cst_21 : f32 to vector<8x64xf32>
    %c5 = arith.constant 5 : index
    %c0_22 = arith.constant 0 : index
    %43 = vector.load %arg18[%c5, %c0_22] : memref<16x64xf32, #tpu.memory_space<vmem>>, vector<8x64xf32>
    %c0_23 = arith.constant 0 : index
    %c0_24 = arith.constant 0 : index
    %44 = vector.load %arg7[%c0_23, %c0_24] : memref<4x64xf32, #tpu.memory_space<vmem>>, vector<1x64xf32>
    %45 = vector.broadcast %44 : vector<1x64xf32> to vector<8x64xf32>
    %46 = arith.mulf %43, %45 : vector<8x64xf32>
    %47 = arith.addf %42, %46 : vector<8x64xf32>
    %c6 = arith.constant 6 : index
    %c0_25 = arith.constant 0 : index
    %48 = vector.load %arg18[%c6, %c0_25] : memref<16x64xf32, #tpu.memory_space<vmem>>, vector<8x64xf32>
    %c1 = arith.constant 1 : index
    %c0_26 = arith.constant 0 : index
    %49 = vector.load %arg7[%c1, %c0_26] : memref<4x64xf32, #tpu.memory_space<vmem>>, vector<1x64xf32>
    %50 = vector.broadcast %49 : vector<1x64xf32> to vector<8x64xf32>
    %51 = arith.mulf %48, %50 : vector<8x64xf32>
    %52 = arith.addf %47, %51 : vector<8x64xf32>
    %c7 = arith.constant 7 : index
    %c0_27 = arith.constant 0 : index
    %53 = vector.load %arg18[%c7, %c0_27] : memref<16x64xf32, #tpu.memory_space<vmem>>, vector<8x64xf32>
    %c2 = arith.constant 2 : index
    %c0_28 = arith.constant 0 : index
    %54 = vector.load %arg7[%c2, %c0_28] : memref<4x64xf32, #tpu.memory_space<vmem>>, vector<1x64xf32>
    %55 = vector.broadcast %54 : vector<1x64xf32> to vector<8x64xf32>
    %56 = arith.mulf %53, %55 : vector<8x64xf32>
    %57 = arith.addf %52, %56 : vector<8x64xf32>
    %c8_29 = arith.constant 8 : index
    %c0_30 = arith.constant 0 : index
    %58 = vector.load %arg18[%c8_29, %c0_30] : memref<16x64xf32, #tpu.memory_space<vmem>>, vector<8x64xf32>
    %c3 = arith.constant 3 : index
    %c0_31 = arith.constant 0 : index
    %59 = vector.load %arg7[%c3, %c0_31] : memref<4x64xf32, #tpu.memory_space<vmem>>, vector<1x64xf32>
    %60 = vector.broadcast %59 : vector<1x64xf32> to vector<8x64xf32>
    %61 = arith.mulf %58, %60 : vector<8x64xf32>
    %62 = arith.addf %57, %61 : vector<8x64xf32>
    %c13 = arith.constant 13 : index
    %c0_32 = arith.constant 0 : index
    %63 = vector.load %arg18[%c13, %c0_32] : memref<16x64xf32, #tpu.memory_space<vmem>>, vector<3x64xf32>
    %c5_33 = arith.constant 5 : index
    %c0_34 = arith.constant 0 : index
    %64 = vector.load %arg18[%c5_33, %c0_34] : memref<16x64xf32, #tpu.memory_space<vmem>>, vector<3x64xf32>
    tpu.vector_store %arg18[%c5_33, %c0_34], %63 {strides = array<i32>} : memref<16x64xf32, #tpu.memory_space<vmem>>, vector<3x64xf32>,
    %c0_35 = arith.constant 0 : index
    %c0_36 = arith.constant 0 : index
    %65 = vector.load %arg8[%c0_35, %c0_36] : memref<1x64xf32, #tpu.memory_space<vmem>>, vector<1x64xf32>
    %66 = vector.broadcast %65 : vector<1x64xf32> to vector<8x64xf32>
    %67 = arith.addf %62, %66 : vector<8x64xf32>
    %cst_37 = arith.constant 0.000000e+00 : f32
    %68 = vector.broadcast %cst_37 : f32 to vector<8x64xf32>
    %69 = arith.subf %68, %67 : vector<8x64xf32>
    %70 = math.exp %69 : vector<8x64xf32>
    %cst_38 = arith.constant 1.000000e+00 : f32
    %71 = vector.broadcast %cst_38 : f32 to vector<8x64xf32>
    %72 = arith.addf %71, %70 : vector<8x64xf32>
    %73 = tpu.reciprocal %72 {approx = true} : vector<8x64xf32> -> vector<8x64xf32>
    %74 = arith.mulf %67, %73 : vector<8x64xf32>
    %75 = arith.truncf %74 : vector<8x64xf32> to vector<8x64xbf16>
    %c0_39 = arith.constant 0 : index
    %c0_40 = arith.constant 0 : index
    %76 = vector.load %arg9[%c0_39, %c0_40] : memref<64x128xbf16, #tpu.memory_space<vmem>>, vector<64x128xbf16>
    %cst_41 = arith.constant dense<0.000000e+00> : vector<8x128xf32>
    %77 = tpu.matmul %75, %76, %cst_41 {dimension_numbers = #tpu.dot_dimension_numbers<[1], [0], [0], [1], [0, 0, 1, 1], [], []>} : vector<8x64xbf16>, vector<64x128xbf16>, vector<8x128xf32> -> vector<8x128xf32>
    %78 = vector.extract_strided_slice %77 {offsets = [0, 0], sizes = [8, 32], strides = [1, 1]} : vector<8x128xf32> to vector<8x32xf32>
    %c0_42 = arith.constant 0 : index
    %c0_43 = arith.constant 0 : index
    %79 = vector.load %arg21[%c0_42, %c0_43] : memref<8x32xf32, #tpu.memory_space<vmem>>, vector<8x32xf32>
    tpu.vector_store %arg21[%c0_42, %c0_43], %78 {strides = array<i32>} : memref<8x32xf32, #tpu.memory_space<vmem>>, vector<8x32xf32>,
    %80 = vector.extract_strided_slice %77 {offsets = [0, 32], sizes = [8, 2], strides = [1, 1]} : vector<8x128xf32> to vector<8x2xf32>
    %81 = arith.truncf %80 : vector<8x2xf32> to vector<8x2xbf16>
    %c0_44 = arith.constant 0 : index
    %c0_45 = arith.constant 0 : index
    %82 = vector.load %arg10[%c0_44, %c0_45] : memref<2x64xbf16, #tpu.memory_space<vmem>>, vector<2x64xbf16>
    %cst_46 = arith.constant dense<0.000000e+00> : vector<8x64xf32>
    %83 = tpu.matmul %81, %82, %cst_46 {dimension_numbers = #tpu.dot_dimension_numbers<[1], [0], [0], [1], [0, 0, 1, 1], [], []>} : vector<8x2xbf16>, vector<2x64xbf16>, vector<8x64xf32> -> vector<8x64xf32>
    %c0_47 = arith.constant 0 : index
    %c0_48 = arith.constant 0 : index
    %84 = vector.load %arg11[%c0_47, %c0_48] : memref<1x64xf32, #tpu.memory_space<vmem>>, vector<1x64xf32>
    %85 = vector.broadcast %84 : vector<1x64xf32> to vector<8x64xf32>
    %86 = arith.addf %83, %85 : vector<8x64xf32>
    %cst_49 = arith.constant 0.000000e+00 : f32
    %87 = vector.broadcast %cst_49 : f32 to vector<8x64xf32>
    %88 = arith.maximumf %86, %87 : vector<8x64xf32>
    %89 = math.absf %86 : vector<8x64xf32>
    %cst_50 = arith.constant 0.000000e+00 : f32
    %90 = vector.broadcast %cst_50 : f32 to vector<8x64xf32>
    %91 = arith.subf %90, %89 : vector<8x64xf32>
    %92 = math.exp %91 : vector<8x64xf32>
    %93 = math.log1p %92 : vector<8x64xf32>
    %94 = arith.addf %88, %93 : vector<8x64xf32>
    %c0_51 = arith.constant 0 : index
    %c0_52 = arith.constant 0 : index
    %95 = vector.load %arg19[%c0_51, %c0_52] : memref<8x64xf32, #tpu.memory_space<vmem>>, vector<8x64xf32>
    tpu.vector_store %arg19[%c0_51, %c0_52], %94 {strides = array<i32>} : memref<8x64xf32, #tpu.memory_space<vmem>>, vector<8x64xf32>,
    %96 = arith.mulf %94, %74 : vector<8x64xf32>
    %c0_53 = arith.constant 0 : index
    %c0_54 = arith.constant 0 : index
    %97 = vector.load %arg20[%c0_53, %c0_54] : memref<8x64xf32, #tpu.memory_space<vmem>>, vector<8x64xf32>
    tpu.vector_store %arg20[%c0_53, %c0_54], %96 {strides = array<i32>} : memref<8x64xf32, #tpu.memory_space<vmem>>, vector<8x64xf32>,
    %c0_55 = arith.constant 0 : index
    %c0_56 = arith.constant 0 : index
    %98 = vector.load %arg12[%c0_55, %c0_56] : memref<16x64xf32, #tpu.memory_space<vmem>>, vector<16x64xf32>
    %c0_i32_57 = arith.constant 0 : i32
    %c8_i32 = arith.constant 8 : i32
    %99 = arith.muli %c0_i32_57, %c8_i32 : i32
    %100 = tpu.assume_multiple %99, 8 : i32
    %101 = arith.index_cast %100 : i32 to index
    %c0_58 = arith.constant 0 : index
    %102 = vector.load %arg19[%101, %c0_58] : memref<8x64xf32, #tpu.memory_space<vmem>>, vector<8x64xf32>
    %103 = arith.index_cast %100 : i32 to index
    %c0_59 = arith.constant 0 : index
    %104 = vector.load %arg20[%103, %c0_59] : memref<8x64xf32, #tpu.memory_space<vmem>>, vector<8x64xf32>
    %105 = arith.index_cast %100 : i32 to index
    %c0_60 = arith.constant 0 : index
    %106 = vector.load %arg21[%105, %c0_60] : memref<8x32xf32, #tpu.memory_space<vmem>>, vector<8x32xf32>
    %107 = vector.shape_cast %102 : vector<8x64xf32> to vector<8x1x64xf32>
    %108 = vector.shape_cast %98 : vector<16x64xf32> to vector<1x16x64xf32>
    %109 = vector.broadcast %107 : vector<8x1x64xf32> to vector<8x16x64xf32>
    %110 = vector.broadcast %108 : vector<1x16x64xf32> to vector<8x16x64xf32>
    %111 = arith.mulf %109, %110 : vector<8x16x64xf32>
    %112 = math.exp %111 : vector<8x16x64xf32>
    %c0_61 = arith.constant 0 : index
    %c0_62 = arith.constant 0 : index
    %c0_63 = arith.constant 0 : index
    %113 = vector.load %arg22[%c0_61, %c0_62, %c0_63] : memref<8x16x64xf32, #tpu.memory_space<vmem>>, vector<8x16x64xf32>
    tpu.vector_store %arg22[%c0_61, %c0_62, %c0_63], %112 {strides = array<i32>} : memref<8x16x64xf32, #tpu.memory_space<vmem>>, vector<8x16x64xf32>,
    %114 = vector.shape_cast %104 : vector<8x64xf32> to vector<8x1x64xf32>
    %115 = vector.extract_strided_slice %106 {offsets = [0, 0], sizes = [8, 16], strides = [1, 1]} : vector<8x32xf32> to vector<8x16xf32>
    %116 = vector.shape_cast %115 : vector<8x16xf32> to vector<8x16x1xf32>
    %117 = vector.broadcast %114 : vector<8x1x64xf32> to vector<8x16x64xf32>
    %118 = vector.broadcast %116 : vector<8x16x1xf32> to vector<8x16x64xf32>
    %119 = arith.mulf %117, %118 : vector<8x16x64xf32>
    %c0_64 = arith.constant 0 : index
    %c0_65 = arith.constant 0 : index
    %c0_66 = arith.constant 0 : index
    %120 = vector.load %arg23[%c0_64, %c0_65, %c0_66] : memref<8x16x64xf32, #tpu.memory_space<vmem>>, vector<8x16x64xf32>
    tpu.vector_store %arg23[%c0_64, %c0_65, %c0_66], %119 {strides = array<i32>} : memref<8x16x64xf32, #tpu.memory_space<vmem>>, vector<8x16x64xf32>,
    %121 = vector.extract_strided_slice %106 {offsets = [0, 16], sizes = [8, 16], strides = [1, 1]} : vector<8x32xf32> to vector<8x16xf32>
    %122 = vector.shape_cast %121 : vector<8x16xf32> to vector<8x16x1xf32>
    %123 = vector.shape_cast %122 : vector<8x16x1xf32> to vector<8x16x1xf32>
    %124 = vector.broadcast %123 : vector<8x16x1xf32> to vector<8x16x64xf32>
    %c0_67 = arith.constant 0 : index
    %c0_68 = arith.constant 0 : index
    %c0_69 = arith.constant 0 : index
    %125 = vector.load %arg24[%c0_67, %c0_68, %c0_69] : memref<8x16x64xf32, #tpu.memory_space<vmem>>, vector<8x16x64xf32>
    tpu.vector_store %arg24[%c0_67, %c0_68, %c0_69], %124 {strides = array<i32>} : memref<8x16x64xf32, #tpu.memory_space<vmem>>, vector<8x16x64xf32>,
    %c0_70 = arith.constant 0 : index
    %c0_71 = arith.constant 0 : index
    %c0_72 = arith.constant 0 : index
    %126 = vector.load %arg22[%c0_70, %c0_71, %c0_72] : memref<8x16x64xf32, #tpu.memory_space<vmem>>, vector<1x16x64xf32>
    %127 = vector.shape_cast %126 : vector<1x16x64xf32> to vector<16x64xf32>
    %c0_73 = arith.constant 0 : index
    %c0_74 = arith.constant 0 : index
    %128 = vector.load %arg17[%c0_73, %c0_74] : memref<16x64xf32, #tpu.memory_space<vmem>>, vector<16x64xf32>
    %129 = arith.mulf %127, %128 : vector<16x64xf32>
    %c0_75 = arith.constant 0 : index
    %c0_76 = arith.constant 0 : index
    %c0_77 = arith.constant 0 : index
    %130 = vector.load %arg23[%c0_75, %c0_76, %c0_77] : memref<8x16x64xf32, #tpu.memory_space<vmem>>, vector<1x16x64xf32>
    %131 = vector.shape_cast %130 : vector<1x16x64xf32> to vector<16x64xf32>
    %132 = arith.addf %129, %131 : vector<16x64xf32>
    %c0_78 = arith.constant 0 : index
    %c0_79 = arith.constant 0 : index
    %133 = vector.load %arg17[%c0_78, %c0_79] : memref<16x64xf32, #tpu.memory_space<vmem>>, vector<16x64xf32>
    tpu.vector_store %arg17[%c0_78, %c0_79], %132 {strides = array<i32>} : memref<16x64xf32, #tpu.memory_space<vmem>>, vector<16x64xf32>,
    %c0_80 = arith.constant 0 : index
    %c0_81 = arith.constant 0 : index
    %c0_82 = arith.constant 0 : index
    %134 = vector.load %arg24[%c0_80, %c0_81, %c0_82] : memref<8x16x64xf32, #tpu.memory_space<vmem>>, vector<1x16x64xf32>
    %135 = vector.shape_cast %134 : vector<1x16x64xf32> to vector<16x64xf32>
    %136 = arith.mulf %132, %135 : vector<16x64xf32>
    %cst_83 = arith.constant dense<0.000000e+00> : vector<64xf32>
    %137 = vector.multi_reduction <add>, %136, %cst_83 [0] : vector<16x64xf32> to vector<64xf32>
    %138 = vector.shape_cast %137 : vector<64xf32> to vector<1x64xf32>
    %c0_i32_84 = arith.constant 0 : i32
    %139 = arith.addi %100, %c0_i32_84 : i32
    %140 = arith.index_cast %139 : i32 to index
    %c0_85 = arith.constant 0 : index
    %141 = vector.load %arg20[%140, %c0_85] : memref<8x64xf32, #tpu.memory_space<vmem>>, vector<1x64xf32>
    tpu.vector_store %arg20[%140, %c0_85], %138 {strides = array<i32>} : memref<8x64xf32, #tpu.memory_space<vmem>>, vector<1x64xf32>,
    %c1_86 = arith.constant 1 : index
    %c0_87 = arith.constant 0 : index
    %c0_88 = arith.constant 0 : index
    %142 = vector.load %arg22[%c1_86, %c0_87, %c0_88] : memref<8x16x64xf32, #tpu.memory_space<vmem>>, vector<1x16x64xf32>
    %143 = vector.shape_cast %142 : vector<1x16x64xf32> to vector<16x64xf32>
    %c0_89 = arith.constant 0 : index
    %c0_90 = arith.constant 0 : index
    %144 = vector.load %arg17[%c0_89, %c0_90] : memref<16x64xf32, #tpu.memory_space<vmem>>, vector<16x64xf32>
    %145 = arith.mulf %143, %144 : vector<16x64xf32>
    %c1_91 = arith.constant 1 : index
    %c0_92 = arith.constant 0 : index
    %c0_93 = arith.constant 0 : index
    %146 = vector.load %arg23[%c1_91, %c0_92, %c0_93] : memref<8x16x64xf32, #tpu.memory_space<vmem>>, vector<1x16x64xf32>
    %147 = vector.shape_cast %146 : vector<1x16x64xf32> to vector<16x64xf32>
    %148 = arith.addf %145, %147 : vector<16x64xf32>
    %c0_94 = arith.constant 0 : index
    %c0_95 = arith.constant 0 : index
    %149 = vector.load %arg17[%c0_94, %c0_95] : memref<16x64xf32, #tpu.memory_space<vmem>>, vector<16x64xf32>
    tpu.vector_store %arg17[%c0_94, %c0_95], %148 {strides = array<i32>} : memref<16x64xf32, #tpu.memory_space<vmem>>, vector<16x64xf32>,
    %c1_96 = arith.constant 1 : index
    %c0_97 = arith.constant 0 : index
    %c0_98 = arith.constant 0 : index
    %150 = vector.load %arg24[%c1_96, %c0_97, %c0_98] : memref<8x16x64xf32, #tpu.memory_space<vmem>>, vector<1x16x64xf32>
    %151 = vector.shape_cast %150 : vector<1x16x64xf32> to vector<16x64xf32>
    %152 = arith.mulf %148, %151 : vector<16x64xf32>
    %cst_99 = arith.constant dense<0.000000e+00> : vector<64xf32>
    %153 = vector.multi_reduction <add>, %152, %cst_99 [0] : vector<16x64xf32> to vector<64xf32>
    %154 = vector.shape_cast %153 : vector<64xf32> to vector<1x64xf32>
    %c1_i32 = arith.constant 1 : i32
    %155 = arith.addi %100, %c1_i32 : i32
    %156 = arith.index_cast %155 : i32 to index
    %c0_100 = arith.constant 0 : index
    %157 = vector.load %arg20[%156, %c0_100] : memref<8x64xf32, #tpu.memory_space<vmem>>, vector<1x64xf32>
    tpu.vector_store %arg20[%156, %c0_100], %154 {strides = array<i32>} : memref<8x64xf32, #tpu.memory_space<vmem>>, vector<1x64xf32>,
    %c2_101 = arith.constant 2 : index
    %c0_102 = arith.constant 0 : index
    %c0_103 = arith.constant 0 : index
    %158 = vector.load %arg22[%c2_101, %c0_102, %c0_103] : memref<8x16x64xf32, #tpu.memory_space<vmem>>, vector<1x16x64xf32>
    %159 = vector.shape_cast %158 : vector<1x16x64xf32> to vector<16x64xf32>
    %c0_104 = arith.constant 0 : index
    %c0_105 = arith.constant 0 : index
    %160 = vector.load %arg17[%c0_104, %c0_105] : memref<16x64xf32, #tpu.memory_space<vmem>>, vector<16x64xf32>
    %161 = arith.mulf %159, %160 : vector<16x64xf32>
    %c2_106 = arith.constant 2 : index
    %c0_107 = arith.constant 0 : index
    %c0_108 = arith.constant 0 : index
    %162 = vector.load %arg23[%c2_106, %c0_107, %c0_108] : memref<8x16x64xf32, #tpu.memory_space<vmem>>, vector<1x16x64xf32>
    %163 = vector.shape_cast %162 : vector<1x16x64xf32> to vector<16x64xf32>
    %164 = arith.addf %161, %163 : vector<16x64xf32>
    %c0_109 = arith.constant 0 : index
    %c0_110 = arith.constant 0 : index
    %165 = vector.load %arg17[%c0_109, %c0_110] : memref<16x64xf32, #tpu.memory_space<vmem>>, vector<16x64xf32>
    tpu.vector_store %arg17[%c0_109, %c0_110], %164 {strides = array<i32>} : memref<16x64xf32, #tpu.memory_space<vmem>>, vector<16x64xf32>,
    %c2_111 = arith.constant 2 : index
    %c0_112 = arith.constant 0 : index
    %c0_113 = arith.constant 0 : index
    %166 = vector.load %arg24[%c2_111, %c0_112, %c0_113] : memref<8x16x64xf32, #tpu.memory_space<vmem>>, vector<1x16x64xf32>
    %167 = vector.shape_cast %166 : vector<1x16x64xf32> to vector<16x64xf32>
    %168 = arith.mulf %164, %167 : vector<16x64xf32>
    %cst_114 = arith.constant dense<0.000000e+00> : vector<64xf32>
    %169 = vector.multi_reduction <add>, %168, %cst_114 [0] : vector<16x64xf32> to vector<64xf32>
    %170 = vector.shape_cast %169 : vector<64xf32> to vector<1x64xf32>
    %c2_i32 = arith.constant 2 : i32
    %171 = arith.addi %100, %c2_i32 : i32
    %172 = arith.index_cast %171 : i32 to index
    %c0_115 = arith.constant 0 : index
    %173 = vector.load %arg20[%172, %c0_115] : memref<8x64xf32, #tpu.memory_space<vmem>>, vector<1x64xf32>
    tpu.vector_store %arg20[%172, %c0_115], %170 {strides = array<i32>} : memref<8x64xf32, #tpu.memory_space<vmem>>, vector<1x64xf32>,
    %c3_116 = arith.constant 3 : index
    %c0_117 = arith.constant 0 : index
    %c0_118 = arith.constant 0 : index
    %174 = vector.load %arg22[%c3_116, %c0_117, %c0_118] : memref<8x16x64xf32, #tpu.memory_space<vmem>>, vector<1x16x64xf32>
    %175 = vector.shape_cast %174 : vector<1x16x64xf32> to vector<16x64xf32>
    %c0_119 = arith.constant 0 : index
    %c0_120 = arith.constant 0 : index
    %176 = vector.load %arg17[%c0_119, %c0_120] : memref<16x64xf32, #tpu.memory_space<vmem>>, vector<16x64xf32>
    %177 = arith.mulf %175, %176 : vector<16x64xf32>
    %c3_121 = arith.constant 3 : index
    %c0_122 = arith.constant 0 : index
    %c0_123 = arith.constant 0 : index
    %178 = vector.load %arg23[%c3_121, %c0_122, %c0_123] : memref<8x16x64xf32, #tpu.memory_space<vmem>>, vector<1x16x64xf32>
    %179 = vector.shape_cast %178 : vector<1x16x64xf32> to vector<16x64xf32>
    %180 = arith.addf %177, %179 : vector<16x64xf32>
    %c0_124 = arith.constant 0 : index
    %c0_125 = arith.constant 0 : index
    %181 = vector.load %arg17[%c0_124, %c0_125] : memref<16x64xf32, #tpu.memory_space<vmem>>, vector<16x64xf32>
    tpu.vector_store %arg17[%c0_124, %c0_125], %180 {strides = array<i32>} : memref<16x64xf32, #tpu.memory_space<vmem>>, vector<16x64xf32>,
    %c3_126 = arith.constant 3 : index
    %c0_127 = arith.constant 0 : index
    %c0_128 = arith.constant 0 : index
    %182 = vector.load %arg24[%c3_126, %c0_127, %c0_128] : memref<8x16x64xf32, #tpu.memory_space<vmem>>, vector<1x16x64xf32>
    %183 = vector.shape_cast %182 : vector<1x16x64xf32> to vector<16x64xf32>
    %184 = arith.mulf %180, %183 : vector<16x64xf32>
    %cst_129 = arith.constant dense<0.000000e+00> : vector<64xf32>
    %185 = vector.multi_reduction <add>, %184, %cst_129 [0] : vector<16x64xf32> to vector<64xf32>
    %186 = vector.shape_cast %185 : vector<64xf32> to vector<1x64xf32>
    %c3_i32 = arith.constant 3 : i32
    %187 = arith.addi %100, %c3_i32 : i32
    %188 = arith.index_cast %187 : i32 to index
    %c0_130 = arith.constant 0 : index
    %189 = vector.load %arg20[%188, %c0_130] : memref<8x64xf32, #tpu.memory_space<vmem>>, vector<1x64xf32>
    tpu.vector_store %arg20[%188, %c0_130], %186 {strides = array<i32>} : memref<8x64xf32, #tpu.memory_space<vmem>>, vector<1x64xf32>,
    %c4 = arith.constant 4 : index
    %c0_131 = arith.constant 0 : index
    %c0_132 = arith.constant 0 : index
    %190 = vector.load %arg22[%c4, %c0_131, %c0_132] : memref<8x16x64xf32, #tpu.memory_space<vmem>>, vector<1x16x64xf32>
    %191 = vector.shape_cast %190 : vector<1x16x64xf32> to vector<16x64xf32>
    %c0_133 = arith.constant 0 : index
    %c0_134 = arith.constant 0 : index
    %192 = vector.load %arg17[%c0_133, %c0_134] : memref<16x64xf32, #tpu.memory_space<vmem>>, vector<16x64xf32>
    %193 = arith.mulf %191, %192 : vector<16x64xf32>
    %c4_135 = arith.constant 4 : index
    %c0_136 = arith.constant 0 : index
    %c0_137 = arith.constant 0 : index
    %194 = vector.load %arg23[%c4_135, %c0_136, %c0_137] : memref<8x16x64xf32, #tpu.memory_space<vmem>>, vector<1x16x64xf32>
    %195 = vector.shape_cast %194 : vector<1x16x64xf32> to vector<16x64xf32>
    %196 = arith.addf %193, %195 : vector<16x64xf32>
    %c0_138 = arith.constant 0 : index
    %c0_139 = arith.constant 0 : index
    %197 = vector.load %arg17[%c0_138, %c0_139] : memref<16x64xf32, #tpu.memory_space<vmem>>, vector<16x64xf32>
    tpu.vector_store %arg17[%c0_138, %c0_139], %196 {strides = array<i32>} : memref<16x64xf32, #tpu.memory_space<vmem>>, vector<16x64xf32>,
    %c4_140 = arith.constant 4 : index
    %c0_141 = arith.constant 0 : index
    %c0_142 = arith.constant 0 : index
    %198 = vector.load %arg24[%c4_140, %c0_141, %c0_142] : memref<8x16x64xf32, #tpu.memory_space<vmem>>, vector<1x16x64xf32>
    %199 = vector.shape_cast %198 : vector<1x16x64xf32> to vector<16x64xf32>
    %200 = arith.mulf %196, %199 : vector<16x64xf32>
    %cst_143 = arith.constant dense<0.000000e+00> : vector<64xf32>
    %201 = vector.multi_reduction <add>, %200, %cst_143 [0] : vector<16x64xf32> to vector<64xf32>
    %202 = vector.shape_cast %201 : vector<64xf32> to vector<1x64xf32>
    %c4_i32 = arith.constant 4 : i32
    %203 = arith.addi %100, %c4_i32 : i32
    %204 = arith.index_cast %203 : i32 to index
    %c0_144 = arith.constant 0 : index
    %205 = vector.load %arg20[%204, %c0_144] : memref<8x64xf32, #tpu.memory_space<vmem>>, vector<1x64xf32>
    tpu.vector_store %arg20[%204, %c0_144], %202 {strides = array<i32>} : memref<8x64xf32, #tpu.memory_space<vmem>>, vector<1x64xf32>,
    %c5_145 = arith.constant 5 : index
    %c0_146 = arith.constant 0 : index
    %c0_147 = arith.constant 0 : index
    %206 = vector.load %arg22[%c5_145, %c0_146, %c0_147] : memref<8x16x64xf32, #tpu.memory_space<vmem>>, vector<1x16x64xf32>
    %207 = vector.shape_cast %206 : vector<1x16x64xf32> to vector<16x64xf32>
    %c0_148 = arith.constant 0 : index
    %c0_149 = arith.constant 0 : index
    %208 = vector.load %arg17[%c0_148, %c0_149] : memref<16x64xf32, #tpu.memory_space<vmem>>, vector<16x64xf32>
    %209 = arith.mulf %207, %208 : vector<16x64xf32>
    %c5_150 = arith.constant 5 : index
    %c0_151 = arith.constant 0 : index
    %c0_152 = arith.constant 0 : index
    %210 = vector.load %arg23[%c5_150, %c0_151, %c0_152] : memref<8x16x64xf32, #tpu.memory_space<vmem>>, vector<1x16x64xf32>
    %211 = vector.shape_cast %210 : vector<1x16x64xf32> to vector<16x64xf32>
    %212 = arith.addf %209, %211 : vector<16x64xf32>
    %c0_153 = arith.constant 0 : index
    %c0_154 = arith.constant 0 : index
    %213 = vector.load %arg17[%c0_153, %c0_154] : memref<16x64xf32, #tpu.memory_space<vmem>>, vector<16x64xf32>
    tpu.vector_store %arg17[%c0_153, %c0_154], %212 {strides = array<i32>} : memref<16x64xf32, #tpu.memory_space<vmem>>, vector<16x64xf32>,
    %c5_155 = arith.constant 5 : index
    %c0_156 = arith.constant 0 : index
    %c0_157 = arith.constant 0 : index
    %214 = vector.load %arg24[%c5_155, %c0_156, %c0_157] : memref<8x16x64xf32, #tpu.memory_space<vmem>>, vector<1x16x64xf32>
    %215 = vector.shape_cast %214 : vector<1x16x64xf32> to vector<16x64xf32>
    %216 = arith.mulf %212, %215 : vector<16x64xf32>
    %cst_158 = arith.constant dense<0.000000e+00> : vector<64xf32>
    %217 = vector.multi_reduction <add>, %216, %cst_158 [0] : vector<16x64xf32> to vector<64xf32>
    %218 = vector.shape_cast %217 : vector<64xf32> to vector<1x64xf32>
    %c5_i32 = arith.constant 5 : i32
    %219 = arith.addi %100, %c5_i32 : i32
    %220 = arith.index_cast %219 : i32 to index
    %c0_159 = arith.constant 0 : index
    %221 = vector.load %arg20[%220, %c0_159] : memref<8x64xf32, #tpu.memory_space<vmem>>, vector<1x64xf32>
    tpu.vector_store %arg20[%220, %c0_159], %218 {strides = array<i32>} : memref<8x64xf32, #tpu.memory_space<vmem>>, vector<1x64xf32>,
    %c6_160 = arith.constant 6 : index
    %c0_161 = arith.constant 0 : index
    %c0_162 = arith.constant 0 : index
    %222 = vector.load %arg22[%c6_160, %c0_161, %c0_162] : memref<8x16x64xf32, #tpu.memory_space<vmem>>, vector<1x16x64xf32>
    %223 = vector.shape_cast %222 : vector<1x16x64xf32> to vector<16x64xf32>
    %c0_163 = arith.constant 0 : index
    %c0_164 = arith.constant 0 : index
    %224 = vector.load %arg17[%c0_163, %c0_164] : memref<16x64xf32, #tpu.memory_space<vmem>>, vector<16x64xf32>
    %225 = arith.mulf %223, %224 : vector<16x64xf32>
    %c6_165 = arith.constant 6 : index
    %c0_166 = arith.constant 0 : index
    %c0_167 = arith.constant 0 : index
    %226 = vector.load %arg23[%c6_165, %c0_166, %c0_167] : memref<8x16x64xf32, #tpu.memory_space<vmem>>, vector<1x16x64xf32>
    %227 = vector.shape_cast %226 : vector<1x16x64xf32> to vector<16x64xf32>
    %228 = arith.addf %225, %227 : vector<16x64xf32>
    %c0_168 = arith.constant 0 : index
    %c0_169 = arith.constant 0 : index
    %229 = vector.load %arg17[%c0_168, %c0_169] : memref<16x64xf32, #tpu.memory_space<vmem>>, vector<16x64xf32>
    tpu.vector_store %arg17[%c0_168, %c0_169], %228 {strides = array<i32>} : memref<16x64xf32, #tpu.memory_space<vmem>>, vector<16x64xf32>,
    %c6_170 = arith.constant 6 : index
    %c0_171 = arith.constant 0 : index
    %c0_172 = arith.constant 0 : index
    %230 = vector.load %arg24[%c6_170, %c0_171, %c0_172] : memref<8x16x64xf32, #tpu.memory_space<vmem>>, vector<1x16x64xf32>
    %231 = vector.shape_cast %230 : vector<1x16x64xf32> to vector<16x64xf32>
    %232 = arith.mulf %228, %231 : vector<16x64xf32>
    %cst_173 = arith.constant dense<0.000000e+00> : vector<64xf32>
    %233 = vector.multi_reduction <add>, %232, %cst_173 [0] : vector<16x64xf32> to vector<64xf32>
    %234 = vector.shape_cast %233 : vector<64xf32> to vector<1x64xf32>
    %c6_i32 = arith.constant 6 : i32
    %235 = arith.addi %100, %c6_i32 : i32
    %236 = arith.index_cast %235 : i32 to index
    %c0_174 = arith.constant 0 : index
    %237 = vector.load %arg20[%236, %c0_174] : memref<8x64xf32, #tpu.memory_space<vmem>>, vector<1x64xf32>
    tpu.vector_store %arg20[%236, %c0_174], %234 {strides = array<i32>} : memref<8x64xf32, #tpu.memory_space<vmem>>, vector<1x64xf32>,
    %c7_175 = arith.constant 7 : index
    %c0_176 = arith.constant 0 : index
    %c0_177 = arith.constant 0 : index
    %238 = vector.load %arg22[%c7_175, %c0_176, %c0_177] : memref<8x16x64xf32, #tpu.memory_space<vmem>>, vector<1x16x64xf32>
    %239 = vector.shape_cast %238 : vector<1x16x64xf32> to vector<16x64xf32>
    %c0_178 = arith.constant 0 : index
    %c0_179 = arith.constant 0 : index
    %240 = vector.load %arg17[%c0_178, %c0_179] : memref<16x64xf32, #tpu.memory_space<vmem>>, vector<16x64xf32>
    %241 = arith.mulf %239, %240 : vector<16x64xf32>
    %c7_180 = arith.constant 7 : index
    %c0_181 = arith.constant 0 : index
    %c0_182 = arith.constant 0 : index
    %242 = vector.load %arg23[%c7_180, %c0_181, %c0_182] : memref<8x16x64xf32, #tpu.memory_space<vmem>>, vector<1x16x64xf32>
    %243 = vector.shape_cast %242 : vector<1x16x64xf32> to vector<16x64xf32>
    %244 = arith.addf %241, %243 : vector<16x64xf32>
    %c0_183 = arith.constant 0 : index
    %c0_184 = arith.constant 0 : index
    %245 = vector.load %arg17[%c0_183, %c0_184] : memref<16x64xf32, #tpu.memory_space<vmem>>, vector<16x64xf32>
    tpu.vector_store %arg17[%c0_183, %c0_184], %244 {strides = array<i32>} : memref<16x64xf32, #tpu.memory_space<vmem>>, vector<16x64xf32>,
    %c7_185 = arith.constant 7 : index
    %c0_186 = arith.constant 0 : index
    %c0_187 = arith.constant 0 : index
    %246 = vector.load %arg24[%c7_185, %c0_186, %c0_187] : memref<8x16x64xf32, #tpu.memory_space<vmem>>, vector<1x16x64xf32>
    %247 = vector.shape_cast %246 : vector<1x16x64xf32> to vector<16x64xf32>
    %248 = arith.mulf %244, %247 : vector<16x64xf32>
    %cst_188 = arith.constant dense<0.000000e+00> : vector<64xf32>
    %249 = vector.multi_reduction <add>, %248, %cst_188 [0] : vector<16x64xf32> to vector<64xf32>
    %250 = vector.shape_cast %249 : vector<64xf32> to vector<1x64xf32>
    %c7_i32 = arith.constant 7 : i32
    %251 = arith.addi %100, %c7_i32 : i32
    %252 = arith.index_cast %251 : i32 to index
    %c0_189 = arith.constant 0 : index
    %253 = vector.load %arg20[%252, %c0_189] : memref<8x64xf32, #tpu.memory_space<vmem>>, vector<1x64xf32>
    tpu.vector_store %arg20[%252, %c0_189], %250 {strides = array<i32>} : memref<8x64xf32, #tpu.memory_space<vmem>>, vector<1x64xf32>,
    %c1_i32_190 = arith.constant 1 : i32
    %c0_191 = arith.constant 0 : index
    %c0_192 = arith.constant 0 : index
    %254 = vector.load %arg20[%c0_191, %c0_192] : memref<8x64xf32, #tpu.memory_space<vmem>>, vector<8x64xf32>
    %c0_193 = arith.constant 0 : index
    %c0_194 = arith.constant 0 : index
    %255 = vector.load %arg13[%c0_193, %c0_194] : memref<1x64xf32, #tpu.memory_space<vmem>>, vector<1x64xf32>
    %256 = vector.broadcast %255 : vector<1x64xf32> to vector<8x64xf32>
    %257 = arith.mulf %74, %256 : vector<8x64xf32>
    %258 = arith.addf %254, %257 : vector<8x64xf32>
    %cst_195 = arith.constant 0.000000e+00 : f32
    %259 = vector.broadcast %cst_195 : f32 to vector<8x64xf32>
    %260 = arith.subf %259, %40 : vector<8x64xf32>
    %261 = math.exp %260 : vector<8x64xf32>
    %cst_196 = arith.constant 1.000000e+00 : f32
    %262 = vector.broadcast %cst_196 : f32 to vector<8x64xf32>
    %263 = arith.addf %262, %261 : vector<8x64xf32>
    %264 = tpu.reciprocal %263 {approx = true} : vector<8x64xf32> -> vector<8x64xf32>
    %265 = arith.mulf %40, %264 : vector<8x64xf32>
    %266 = arith.mulf %258, %265 : vector<8x64xf32>
    %267 = arith.truncf %266 : vector<8x64xf32> to vector<8x64xbf16>
    %c0_197 = arith.constant 0 : index
    %c0_198 = arith.constant 0 : index
    %268 = vector.load %arg14[%c0_197, %c0_198] : memref<64x32xbf16, #tpu.memory_space<vmem>>, vector<64x32xbf16>
    %cst_199 = arith.constant dense<0.000000e+00> : vector<8x32xf32>
    %269 = tpu.matmul %267, %268, %cst_199 {dimension_numbers = #tpu.dot_dimension_numbers<[1], [0], [0], [1], [0, 0, 1, 1], [], []>} : vector<8x64xbf16>, vector<64x32xbf16>, vector<8x32xf32> -> vector<8x32xf32>
    %270 = arith.truncf %269 : vector<8x32xf32> to vector<8x32xbf16>
    %c0_200 = arith.constant 0 : index
    %c0_201 = arith.constant 0 : index
    %c0_202 = arith.constant 0 : index
    %271 = vector.load %arg15[%c0_200, %c0_201, %c0_202] : memref<1x8x32xbf16, #tpu.memory_space<vmem>>, vector<1x8x32xbf16>
    %272 = vector.shape_cast %271 : vector<1x8x32xbf16> to vector<8x32xbf16>
    %273 = vector.shape_cast %270 : vector<8x32xbf16> to vector<1x8x32xbf16>
    tpu.vector_store %arg15[%c0_200, %c0_201, %c0_202], %273 {strides = array<i32>} : memref<1x8x32xbf16, #tpu.memory_space<vmem>>, vector<1x8x32xbf16>,
    return
  }
  func.func @transform_0(%arg0: i32, %arg1: i32) -> (i32, i32, i32) {
    %c0_i32 = arith.constant 0 : i32
    %c0_i32_0 = arith.constant 0 : i32
    return %arg0, %arg1, %c0_i32 : i32, i32, i32
  }
  func.func @transform_1(%arg0: i32, %arg1: i32) -> (i32, i32, i32) {
    %c0_i32 = arith.constant 0 : i32
    %c0_i32_0 = arith.constant 0 : i32
    return %arg0, %arg1, %c0_i32 : i32, i32, i32
  }
  func.func @transform_2(%arg0: i32, %arg1: i32) -> (i32, i32) {
    %c0_i32 = arith.constant 0 : i32
    %c0_i32_0 = arith.constant 0 : i32
    %c0_i32_1 = arith.constant 0 : i32
    return %c0_i32, %c0_i32_0 : i32, i32
  }
  func.func @transform_3(%arg0: i32, %arg1: i32) -> (i32, i32) {
    %c0_i32 = arith.constant 0 : i32
    %c0_i32_0 = arith.constant 0 : i32
    %c0_i32_1 = arith.constant 0 : i32
    return %c0_i32, %c0_i32_0 : i32, i32
  }
  func.func @transform_4(%arg0: i32, %arg1: i32) -> (i32, i32) {
    %c0_i32 = arith.constant 0 : i32
    %c0_i32_0 = arith.constant 0 : i32
    %c0_i32_1 = arith.constant 0 : i32
    return %c0_i32, %c0_i32_0 : i32, i32
  }
  func.func @transform_5(%arg0: i32, %arg1: i32) -> (i32, i32) {
    %c0_i32 = arith.constant 0 : i32
    %c0_i32_0 = arith.constant 0 : i32
    %c0_i32_1 = arith.constant 0 : i32
    return %c0_i32, %c0_i32_0 : i32, i32
  }
  func.func @transform_6(%arg0: i32, %arg1: i32) -> (i32, i32) {
    %c0_i32 = arith.constant 0 : i32
    %c0_i32_0 = arith.constant 0 : i32
    %c0_i32_1 = arith.constant 0 : i32
    return %c0_i32, %c0_i32_0 : i32, i32
  }
  func.func @transform_7(%arg0: i32, %arg1: i32) -> (i32, i32) {
    %c0_i32 = arith.constant 0 : i32
    %c0_i32_0 = arith.constant 0 : i32
    %c0_i32_1 = arith.constant 0 : i32
    return %c0_i32, %c0_i32_0 : i32, i32
  }
  func.func @transform_8(%arg0: i32, %arg1: i32) -> (i32, i32) {
    %c0_i32 = arith.constant 0 : i32
    %c0_i32_0 = arith.constant 0 : i32
    %c0_i32_1 = arith.constant 0 : i32
    return %c0_i32, %c0_i32_0 : i32, i32
  }
  func.func @transform_9(%arg0: i32, %arg1: i32) -> (i32, i32) {
    %c0_i32 = arith.constant 0 : i32
    %c0_i32_0 = arith.constant 0 : i32
    %c0_i32_1 = arith.constant 0 : i32
    return %c0_i32, %c0_i32_0 : i32, i32
  }
  func.func @transform_10(%arg0: i32, %arg1: i32) -> (i32, i32) {
    %c0_i32 = arith.constant 0 : i32
    %c0_i32_0 = arith.constant 0 : i32
    %c0_i32_1 = arith.constant 0 : i32
    return %c0_i32, %c0_i32_0 : i32, i32
  }
  func.func @transform_11(%arg0: i32, %arg1: i32) -> (i32, i32) {
    %c0_i32 = arith.constant 0 : i32
    %c0_i32_0 = arith.constant 0 : i32
    %c0_i32_1 = arith.constant 0 : i32
    return %c0_i32, %c0_i32_0 : i32, i32
  }
  func.func @transform_12(%arg0: i32, %arg1: i32) -> (i32, i32) {
    %c0_i32 = arith.constant 0 : i32
    %c0_i32_0 = arith.constant 0 : i32
    %c0_i32_1 = arith.constant 0 : i32
    return %c0_i32, %c0_i32_0 : i32, i32
  }
  func.func @transform_13(%arg0: i32, %arg1: i32) -> (i32, i32, i32) {
    %c0_i32 = arith.constant 0 : i32
    %c0_i32_0 = arith.constant 0 : i32
    return %arg0, %arg1, %c0_i32 : i32, i32, i32
  }
  func.func @transform_14(%arg0: i32, %arg1: i32) -> (i32, i32, i32) {
    %c0_i32 = arith.constant 0 : i32
    %c0_i32_0 = arith.constant 0 : i32
    return %arg0, %arg1, %c0_i32 : i32, i32, i32
  }
}

</mosaic_0001>

<llo_original>
// kernel: mixer_model_forward.5
$region0: #{mixer_model_forward.5}
  #allocation0 [shape = 'u32[]', space=smem, size = 0x4, offset = 0x4, fixed_abs, tag = 'smem constant byte address 0x4 - core index']
  #allocation1 [shape = 'u32[144,128]{1,0:T(1,128)}', space=vmem, size = 0x12000, scoped, tag = 'internal scratch']
  %s0 = inlined_call_operand.hbm [shape: bf16[2,8,32], index: 0, kind: input, shape index: {}]
  %s1 = inlined_call_operand.hbm [shape: f32[2,8,32], index: 1, kind: input, shape index: {}]
  %s2 = inlined_call_operand.hbm [shape: f32[1,32], index: 2, kind: input, shape index: {}]
  %s3 = inlined_call_operand.hbm [shape: f32[1,32], index: 3, kind: input, shape index: {}]
  %s4 = inlined_call_operand.hbm [shape: f32[2,8,32], index: 4, kind: output, shape index: {}]
  %s5 = sld [smem:[#allocation0]]
  $region65: #{mixer_model_forward.5} parent=0
    _
  %s7 = ssub.s32 1, %s5
  %s8 = scalar_select 0, %s7, %s5
  $region1: #{mixer_model_forward.5} parent=0
    #allocation2 [shape = 'u8[4096]{0}', space=vmem, size = 0x1000, scoped, tag = 'input window, operand 0']
    #allocation3 [shape = 's32[2]{0}', space=sflag, size = 0x8, scoped, tag = 'scoped memory for mixer_model_forward.5']
    #allocation4 [shape = 's32[2]{0}', space=sflag, size = 0x8, scoped, tag = 'scoped memory for mixer_model_forward.5']
    #allocation5 [shape = 'u8[8192]{0}', space=vmem, size = 0x2000, scoped, tag = 'input window, operand 1']
    #allocation6 [shape = 's32[2]{0}', space=sflag, size = 0x8, scoped, tag = 'scoped memory for mixer_model_forward.5']
    #allocation7 [shape = 'u8[512]{0}', space=vmem, size = 0x400, scoped, tag = 'input window, operand 2, single buffered']
    #allocation8 [shape = 'u8[512]{0}', space=vmem, size = 0x400, scoped, tag = 'input window, operand 3, single buffered']
    #allocation9 [shape = 's32[1]{0}', space=sflag, size = 0x4, scoped, tag = 'scoped memory for mixer_model_forward.5']
    #allocation10 [shape = 'u8[8192]{0}', space=vmem, size = 0x2000, scoped, tag = 'output window, operand 0']
    %9 = vsyncpa [#allocation3], 0
    %s10 = scalar_lea.sflag [#allocation3], 1
    %11 = vsyncpa %s10, 0
    %12 = vsyncpa [#allocation6], 0
    %s13 = scalar_lea.sflag [#allocation6], 1
    %14 = vsyncpa %s13, 0
    %15 = vsyncpa [#allocation9], 0
    %16 = vsyncpa [#allocation4], 0
    %s17 = scalar_lea.sflag [#allocation4], 1
    %18 = vsyncpa %s17, 0
    loop: start=0, step=1, limit=4
    $region2: #{mixer_model_forward.5} parent=1 // loop_pre_header
      _
    $region3: #{mixer_model_forward.5} parent=1 // loop_header
      %s20 = sphi 0, %s24
      %p21 = scmp.ge.s32.totalorder %s20, 4
      %s27 = sphi 0, %s39
      %s28 = sphi 0, %s35
      %s29 = sphi 0, %s27
      %s30 = sphi 0, %s28
      %s31 = sphi 0, %s29
      %s32 = sphi 0, %s30
      %s44 = sphi 0, %s46
      %s47 = sphi 0, %s44
      %s48 = sphi 0, %s47
      %s64 = sphi 0, %s48
      %s72 = sphi 0, %s74
      %s75 = sphi 0, %s72
      %s76 = sphi 0, %s75
      %s92 = sphi 0, %s76
      %s96 = sphi 0, %s96
      %s98 = sphi 0, %s96
      %s99 = sphi 0, %s98
      %s113 = sphi 0, %s99
      %s117 = sphi 0, %s117
      %s119 = sphi 0, %s117
      %s120 = sphi 0, %s119
      %s134 = sphi 0, %s120
      %s142 = sphi 0, %s144
      %s145 = sphi 0, %s142
      %s146 = sphi 0, %s145
      %s162 = sphi 0, %s146
    $region4: #{mixer_model_forward.5} parent=1 // loop_header_branch
      %23 = sbr.rel (%p21) target = $region8
    $region5: #{mixer_model_forward.5} parent=1 // loop_body
      %s25 = ssub.s32 %s20, 1
      %s26 = ssub.s32 %s20, 2
      %s33 = sadd.s32 1, %s28
      %p34 = scmp.ge.s32.totalorder %s33, 1
      %s35 = scalar_select %p34, 0, %s33
      %s36 = sadd.s32 1, %s27
      %s37 = scalar_select %p34, %s36, %s27
      %p38 = scmp.ge.s32.totalorder %s37, 2
      %s39 = scalar_select %p38, 0, %s37
      %s40 = ssub.s32 %s27, %s39
      %s41 = ssub.s32 %s28, %s35
      %s42 = sor.u32 %s40, %s41
      %p43 = scmp.eq.s32.totalorder %s42, 0
      %s45 = sadd.s32 %s44, 1
      %s46 = scalar_select %p43, %s44, %s45
      %p49 = pneg %p43
      %p50 = scmp.eq.s32.totalorder %s20, 1
      %p51 = por %p49, %p50
      %p52 = scmp.ne.s32.totalorder %s44, %s47
      %p53 = scmp.eq.s32.totalorder %s20, 0
      %p54 = por %p52, %p53
      %p55 = scmp.ne.s32.totalorder %s44, %s47
      %p56 = scmp.eq.s32.totalorder %s25, 1
      %p57 = por %p55, %p56
      %p58 = scmp.ne.s32.totalorder %s47, %s48
      %p59 = scmp.eq.s32.totalorder %s25, 0
      %p60 = por %p58, %p59
      %p61 = scmp.ne.s32.totalorder %s47, %s48
      %p62 = scmp.eq.s32.totalorder %s26, 1
      %p63 = por %p61, %p62
      %p65 = scmp.ne.s32.totalorder %s48, %s64
      %p66 = scmp.eq.s32.totalorder %s26, 0
      %p67 = por %p65, %p66
      %s68 = ssub.s32 %s27, %s39
      %s69 = ssub.s32 %s28, %s35
      %s70 = sor.u32 %s68, %s69
      %p71 = scmp.eq.s32.totalorder %s70, 0
      %s73 = sadd.s32 %s72, 1
      %s74 = scalar_select %p71, %s72, %s73
      %p77 = pneg %p71
      %p78 = scmp.eq.s32.totalorder %s20, 1
      %p79 = por %p77, %p78
      %p80 = scmp.ne.s32.totalorder %s72, %s75
      %p81 = scmp.eq.s32.totalorder %s20, 0
      %p82 = por %p80, %p81
      %p83 = scmp.ne.s32.totalorder %s72, %s75
      %p84 = scmp.eq.s32.totalorder %s25, 1
      %p85 = por %p83, %p84
      %p86 = scmp.ne.s32.totalorder %s75, %s76
      %p87 = scmp.eq.s32.totalorder %s25, 0
      %p88 = por %p86, %p87
      %p89 = scmp.ne.s32.totalorder %s75, %s76
      %p90 = scmp.eq.s32.totalorder %s26, 1
      %p91 = por %p89, %p90
      %p93 = scmp.ne.s32.totalorder %s76, %s92
      %p94 = scmp.eq.s32.totalorder %s26, 0
      %p95 = por %p93, %p94
      %s97 = sadd.s32 %s96, 1
      %p100 = scmp.eq.s32.totalorder %s20, 1
      %p101 = scmp.ne.s32.totalorder %s96, %s98
      %p102 = scmp.eq.s32.totalorder %s20, 0
      %p103 = por %p101, %p102
      %p104 = scmp.ne.s32.totalorder %s96, %s98
      %p105 = scmp.eq.s32.totalorder %s25, 1
      %p106 = por %p104, %p105
      %p107 = scmp.ne.s32.totalorder %s98, %s99
      %p108 = scmp.eq.s32.totalorder %s25, 0
      %p109 = por %p107, %p108
      %p110 = scmp.ne.s32.totalorder %s98, %s99
      %p111 = scmp.eq.s32.totalorder %s26, 1
      %p112 = por %p110, %p111
      %p114 = scmp.ne.s32.totalorder %s99, %s113
      %p115 = scmp.eq.s32.totalorder %s26, 0
      %p116 = por %p114, %p115
      %s118 = sadd.s32 %s117, 1
      %p121 = scmp.eq.s32.totalorder %s20, 1
      %p122 = scmp.ne.s32.totalorder %s117, %s119
      %p123 = scmp.eq.s32.totalorder %s20, 0
      %p124 = por %p122, %p123
      %p125 = scmp.ne.s32.totalorder %s117, %s119
      %p126 = scmp.eq.s32.totalorder %s25, 1
      %p127 = por %p125, %p126
      %p128 = scmp.ne.s32.totalorder %s119, %s120
      %p129 = scmp.eq.s32.totalorder %s25, 0
      %p130 = por %p128, %p129
      %p131 = scmp.ne.s32.totalorder %s119, %s120
      %p132 = scmp.eq.s32.totalorder %s26, 1
      %p133 = por %p131, %p132
      %p135 = scmp.ne.s32.totalorder %s120, %s134
      %p136 = scmp.eq.s32.totalorder %s26, 0
      %p137 = por %p135, %p136
      %s138 = ssub.s32 %s27, %s39
      %s139 = ssub.s32 %s28, %s35
      %s140 = sor.u32 %s138, %s139
      %p141 = scmp.eq.s32.totalorder %s140, 0
      %s143 = sadd.s32 %s142, 1
      %s144 = scalar_select %p141, %s142, %s143
      %p147 = pneg %p141
      %p148 = scmp.eq.s32.totalorder %s20, 1
      %p149 = por %p147, %p148
      %p150 = scmp.ne.s32.totalorder %s142, %s145
      %p151 = scmp.eq.s32.totalorder %s20, 0
      %p152 = por %p150, %p151
      %p153 = scmp.ne.s32.totalorder %s142, %s145
      %p154 = scmp.eq.s32.totalorder %s25, 1
      %p155 = por %p153, %p154
      %p156 = scmp.ne.s32.totalorder %s145, %s146
      %p157 = scmp.eq.s32.totalorder %s25, 0
      %p158 = por %p156, %p157
      %p159 = scmp.ne.s32.totalorder %s145, %s146
      %p160 = scmp.eq.s32.totalorder %s26, 1
      %p161 = por %p159, %p160
      %p163 = scmp.ne.s32.totalorder %s146, %s162
      %p164 = scmp.eq.s32.totalorder %s26, 0
      %p165 = por %p163, %p164
      %p166 = scmp.le.s32.totalorder 1, %s20
      %p167 = scmp.lt.s32.totalorder %s20, 3
      %p168 = pnand %p166, %p167
      %p169 = pneg %p168
      // Predicated region
      $region9: #{mixer_model_forward.5} parent=5 // pred_check
        _
      $region10: #{mixer_model_forward.5} parent=5 // pred_check_branch
        %171 = sbr.rel (%p168) target = $region12
      $region11: #{mixer_model_forward.5} parent=5 // pred_region
        %s172 = ssub.s32 %s20, 1
        // Predicated region
        $region13: #{mixer_model_forward.5} parent=11 // pred_check
          %p173 = pneg %p109
        $region14: #{mixer_model_forward.5} parent=11 // pred_check_branch
          %175 = sbr.rel (%p173) target = $region16
        $region15: #{mixer_model_forward.5} parent=11 // pred_region
          %s177 = ssub.s32 16, 16
          %178 = vsyncadd [#allocation6], %s177
          %s180 = sshll.u32 [#allocation7], 4
          %s181 = int_to_ptr.vmem [resolvable:$true] %s180
          %183 = dma.hbm_to_vmem [thread:$0]  %s2, 16, %s181, [#allocation6]
        $region16: #{mixer_model_forward.5} parent=11 // pred_fallthru
          _
        // Predicated region
        $region17: #{mixer_model_forward.5} parent=11 // pred_check
          %p184 = pneg %p130
        $region18: #{mixer_model_forward.5} parent=11 // pred_check_branch
          %186 = sbr.rel (%p184) target = $region20
        $region19: #{mixer_model_forward.5} parent=11 // pred_region
          %s188 = ssub.s32 16, 16
          %189 = vsyncadd [#allocation9], %s188
          %s191 = sshll.u32 [#allocation8], 4
          %s192 = int_to_ptr.vmem [resolvable:$true] %s191
          %194 = dma.hbm_to_vmem [thread:$0]  %s3, 16, %s192, [#allocation9]
        $region20: #{mixer_model_forward.5} parent=11 // pred_fallthru
          _
      $region12: #{mixer_model_forward.5} parent=5 // pred_fallthru
        _
      %p195 = scmp.lt.s32.totalorder %s20, 2
      // Predicated region
      $region21: #{mixer_model_forward.5} parent=5 // pred_check
        %p196 = pneg %p195
      $region22: #{mixer_model_forward.5} parent=5 // pred_check_branch
        %198 = sbr.rel (%p196) target = $region24
      $region23: #{mixer_model_forward.5} parent=5 // pred_region
        // Predicated region
        $region25: #{mixer_model_forward.5} parent=23 // pred_check
          %p199 = pneg %p54
        $region26: #{mixer_model_forward.5} parent=23 // pred_check_branch
          %201 = sbr.rel (%p199) target = $region28
        $region27: #{mixer_model_forward.5} parent=23 // pred_region
          %s202 = sand.u32 %s44, 1
          %s203 = scalar_lea.sflag [#allocation3], %s202
          %s204 = sand.u32 %s44, 1
          %s205 = smul.addr %s204, 4
          %s206 = scalar_lea.vmem [#allocation2], %s205
          %s208 = ssub.s32 64, 64
          %209 = vsyncadd %s203, %s208
          %s210 = sadd.s32 %s28, %s27
          %s211 = smul.addr %s210, 64
          %s212 = scalar_lea.hbm %s0, %s211
          %s214 = sshll.u32 %s206, 4
          %s215 = int_to_ptr.vmem [resolvable:$true] %s214
          %217 = dma.hbm_to_vmem [thread:$0]  %s212, 64, %s215, %s203
        $region28: #{mixer_model_forward.5} parent=23 // pred_fallthru
          _
        // Predicated region
        $region29: #{mixer_model_forward.5} parent=23 // pred_check
          %p218 = pneg %p82
        $region30: #{mixer_model_forward.5} parent=23 // pred_check_branch
          %220 = sbr.rel (%p218) target = $region32
        $region31: #{mixer_model_forward.5} parent=23 // pred_region
          %s221 = sand.u32 %s20, 1
          %s222 = scalar_lea.sflag [#allocation6], %s221
          %s223 = sand.u32 %s72, 1
          %s224 = smul.addr %s223, 8
          %s225 = scalar_lea.vmem [#allocation5], %s224
          %s227 = ssub.s32 128, 128
          %228 = vsyncadd %s222, %s227
          %s229 = sadd.s32 %s28, %s27
          %s230 = smul.addr %s229, 128
          %s231 = scalar_lea.hbm %s1, %s230
          %s233 = sshll.u32 %s225, 4
          %s234 = int_to_ptr.vmem [resolvable:$true] %s233
          %236 = dma.hbm_to_vmem [thread:$0]  %s231, 128, %s234, %s222
        $region32: #{mixer_model_forward.5} parent=23 // pred_fallthru
          _
      $region24: #{mixer_model_forward.5} parent=5 // pred_fallthru
        _
      %p237 = scmp.le.s32.totalorder 1, %s20
      %p238 = scmp.lt.s32.totalorder %s20, 3
      %p239 = pnand %p237, %p238
      %p240 = pneg %p239
      // Predicated region
      $region33: #{mixer_model_forward.5} parent=5 // pred_check
        _
      $region34: #{mixer_model_forward.5} parent=5 // pred_check_branch
        %242 = sbr.rel (%p239) target = $region36
      $region35: #{mixer_model_forward.5} parent=5 // pred_region
        %s243 = ssub.s32 %s20, 1
        %s244 = sand.u32 %s47, 1
        %s245 = scalar_lea.sflag [#allocation3], %s244
        %s246 = sand.u32 %s47, 1
        %s247 = smul.addr %s246, 4
        %s248 = scalar_lea.vmem [#allocation2], %s247
        // Predicated region
        $region37: #{mixer_model_forward.5} parent=35 // pred_check
          %p249 = pneg %p60
        $region38: #{mixer_model_forward.5} parent=35 // pred_check_branch
          %251 = sbr.rel (%p249) target = $region40
        $region39: #{mixer_model_forward.5} parent=35 // pred_region
          %252 = dma.done %s245, 64
        $region40: #{mixer_model_forward.5} parent=35 // pred_fallthru
          _
        %s253 = sand.u32 %s25, 1
        %s254 = scalar_lea.sflag [#allocation6], %s253
        %s255 = sand.u32 %s75, 1
        %s256 = smul.addr %s255, 8
        %s257 = scalar_lea.vmem [#allocation5], %s256
        // Predicated region
        $region41: #{mixer_model_forward.5} parent=35 // pred_check
          %p258 = pneg %p88
        $region42: #{mixer_model_forward.5} parent=35 // pred_check_branch
          %260 = sbr.rel (%p258) target = $region44
        $region43: #{mixer_model_forward.5} parent=35 // pred_region
          %261 = dma.done %s254, 128
        $region44: #{mixer_model_forward.5} parent=35 // pred_fallthru
          _
        // Predicated region
        $region45: #{mixer_model_forward.5} parent=35 // pred_check
          %p262 = pneg %p109
        $region46: #{mixer_model_forward.5} parent=35 // pred_check_branch
          %264 = sbr.rel (%p262) target = $region48
        $region47: #{mixer_model_forward.5} parent=35 // pred_region
          %265 = dma.done [#allocation6], 16
        $region48: #{mixer_model_forward.5} parent=35 // pred_fallthru
          _
        // Predicated region
        $region49: #{mixer_model_forward.5} parent=35 // pred_check
          %p266 = pneg %p130
        $region50: #{mixer_model_forward.5} parent=35 // pred_check_branch
          %268 = sbr.rel (%p266) target = $region52
        $region51: #{mixer_model_forward.5} parent=35 // pred_region
          %269 = dma.done [#allocation9], 16
        $region52: #{mixer_model_forward.5} parent=35 // pred_fallthru
          _
        %s270 = sand.u32 %s47, 1
        %s271 = scalar_lea.sflag [#allocation3], %s270
        %s272 = sand.u32 %s47, 1
        %s273 = smul.addr %s272, 4
        %s274 = scalar_lea.vmem [#allocation2], %s273
        %p275 = pneg %p60
        %p276 = pneg %p57
        %s277 = sand.u32 %s25, 1
        %s278 = scalar_lea.sflag [#allocation6], %s277
        %s279 = sand.u32 %s75, 1
        %s280 = smul.addr %s279, 8
        %s281 = scalar_lea.vmem [#allocation5], %s280
        %p282 = pneg %p88
        %p283 = pneg %p85
        %p284 = pneg %p109
        %p285 = pneg %p106
        %p286 = pneg %p130
        %p287 = pneg %p127
        %p288 = pneg %p158
        %p289 = pneg %p155
        %s290 = sand.u32 %s145, 1
        %s291 = scalar_lea.sflag [#allocation4], %s290
        %s292 = sand.u32 %s145, 1
        %s293 = smul.addr %s292, 8
        %s294 = scalar_lea.vmem [#allocation10], %s293
        %v295 = vld [vmem:[%s248] sm:$0xf]
        %v296 = vunpack.c.l.bf16 %v295
        %v297 = vld [vmem:[%s257] sm:$0xff]
        %v298 = vadd.f32 %v296, %v297
        %v299 = vld [vmem:[#allocation7] sm:$0x1]
        %v300 = vld [vmem:[#allocation8] sm:$0x1]
        %vm301 = vcmask 261120
        %v302 = vsel %vm301, %v298, 0.0
        %303 = vadd.xlane.f32.xlu0 %v302
        %v304 = vpop.xlane.xlu0 %303
        %v305 = vrcp.pop 32.0
        %v306 = vmul.f32 %v304, %v305
        %v307 = vsub.f32 %v298, %v306
        %v308 = vmul.f32 %v307, %v307
        %v309 = vsel %vm301, %v308, 0.0
        %310 = vadd.xlane.f32.xlu0 %v309
        %v311 = vpop.xlane.xlu0 %310
        %v312 = vmul.f32 %v311, %v305
        %v313 = vadd.f32 %v312, 1e-05
        %v314 = vrsqrt.pop %v313
        %v315 = vmul.f32 %v307, %v314
        %v317 = vlaneseq
        %v318 = vshrl.u32 %v317, 7
        %v319 = vsub.s32 0, %v318
        %v320 = vrot.slane %v299, %v319
        %v322 = vmul.f32 %v315, %v320
        %v324 = vlaneseq
        %v325 = vshrl.u32 %v324, 7
        %v326 = vsub.s32 0, %v325
        %v327 = vrot.slane %v300, %v326
        %v329 = vadd.f32 %v322, %v327
        %330 = vst.msk [vmem:[%s294] sm:$0xff] %vm301, %v329
        %s331 = sand.u32 %s145, 1
        %s332 = scalar_lea.sflag [#allocation4], %s331
        %s333 = sand.u32 %s145, 1
        %s334 = smul.addr %s333, 8
        %s335 = scalar_lea.vmem [#allocation10], %s334
        // Predicated region
        $region53: #{mixer_model_forward.5} parent=35 // pred_check
          %p336 = pneg %p155
        $region54: #{mixer_model_forward.5} parent=35 // pred_check_branch
          %338 = sbr.rel (%p336) target = $region56
        $region55: #{mixer_model_forward.5} parent=35 // pred_region
          %s340 = ssub.s32 128, 128
          %341 = vsyncadd %s332, %s340
          %s342 = sadd.s32 %s30, %s29
          %s343 = smul.addr %s342, 128
          %s344 = scalar_lea.hbm %s4, %s343
          %s346 = sshll.u32 %s335, 4
          %s347 = int_to_ptr.vmem [resolvable:$true] %s346
          %349 = dma.vmem_to_hbm [thread:$0]  %s347, 128, %s344, %s332
        $region56: #{mixer_model_forward.5} parent=35 // pred_fallthru
          _
      $region36: #{mixer_model_forward.5} parent=5 // pred_fallthru
        _
      %p350 = scmp.le.s32.totalorder 2, %s20
      // Predicated region
      $region57: #{mixer_model_forward.5} parent=5 // pred_check
        %p351 = pneg %p350
      $region58: #{mixer_model_forward.5} parent=5 // pred_check_branch
        %353 = sbr.rel (%p351) target = $region60
      $region59: #{mixer_model_forward.5} parent=5 // pred_region
        %s354 = ssub.s32 %s20, 2
        // Predicated region
        $region61: #{mixer_model_forward.5} parent=59 // pred_check
          %p355 = pneg %p161
        $region62: #{mixer_model_forward.5} parent=59 // pred_check_branch
          %357 = sbr.rel (%p355) target = $region64
        $region63: #{mixer_model_forward.5} parent=59 // pred_region
          %s358 = sand.u32 %s146, 1
          %s359 = scalar_lea.sflag [#allocation4], %s358
          %s360 = sand.u32 %s146, 1
          %s361 = smul.addr %s360, 8
          %s362 = scalar_lea.vmem [#allocation10], %s361
          %363 = dma.done %s359, 128
        $region64: #{mixer_model_forward.5} parent=59 // pred_fallthru
          _
      $region60: #{mixer_model_forward.5} parent=5 // pred_fallthru
        _
    $region6: #{mixer_model_forward.5} parent=1 // loop_footer
      %s24 = sadd.s32 1, %s20
    $region7: #{mixer_model_forward.5} parent=1 // loop_footer_branch
      %19 = sbr.rel target = $region3
    $region8: #{mixer_model_forward.5} parent=1 // loop_exit
      _
    %364 = vsyncpa [#allocation3], 1
    %s365 = scalar_lea.sflag [#allocation3], 1
    %366 = vsyncpa %s365, 1
    %367 = vsyncpa [#allocation6], 1
    %s368 = scalar_lea.sflag [#allocation6], 1
    %369 = vsyncpa %s368, 1
    %370 = vsyncpa [#allocation9], 1
    %371 = vsyncpa [#allocation4], 1
    %s372 = scalar_lea.sflag [#allocation4], 1
    %373 = vsyncpa %s372, 1

// kernel: mixer_model_forward.3
$region0: #{mixer_model_forward.3}
  #allocation0 [shape = 'u32[]', space=smem, size = 0x4, offset = 0x4, fixed_abs, tag = 'smem constant byte address 0x4 - core index']
  #allocation1 [shape = 'u32[144,128]{1,0:T(1,128)}', space=vmem, size = 0x12000, scoped, tag = 'internal scratch']
  #allocation2 [shape = 'f32[16,64]{1,0:T(8,128)}', space=vmem, size = 0x2000, scoped, tag = 'scratch operand']
  #allocation3 [shape = 'f32[16,64]{1,0:T(8,128)}', space=vmem, size = 0x2000, scoped, tag = 'scratch operand']
  #allocation4 [shape = 'f32[8,64]{1,0:T(8,128)}', space=vmem, size = 0x1000, scoped, tag = 'scratch operand']
  #allocation5 [shape = 'f32[8,64]{1,0:T(8,128)}', space=vmem, size = 0x1000, scoped, tag = 'scratch operand']
  #allocation6 [shape = 'f32[8,32]{1,0:T(8,128)}', space=vmem, size = 0x1000, scoped, tag = 'scratch operand']
  #allocation7 [shape = 'f32[8,16,64]{2,1,0:T(8,128)}', space=vmem, size = 0x10000, scoped, tag = 'scratch operand']
  #allocation8 [shape = 'f32[8,16,64]{2,1,0:T(8,128)}', space=vmem, size = 0x10000, scoped, tag = 'scratch operand']
  #allocation9 [shape = 'f32[8,16,64]{2,1,0:T(8,128)}', space=vmem, size = 0x10000, scoped, tag = 'scratch operand']
  %s0 = inlined_call_operand.hbm [shape: bf16[2,8,32], index: 0, kind: input, shape index: {}, may-alias: {0,13}]
  %s1 = inlined_call_operand.hbm [shape: f32[2,8,32], index: 1, kind: input, shape index: {}, may-alias: {1,14}]
  %s2 = inlined_call_operand.hbm [shape: f32[1,32], index: 2, kind: input, shape index: {}]
  %s3 = inlined_call_operand.hbm [shape: f32[1,32], index: 3, kind: input, shape index: {}]
  %s4 = inlined_call_operand.hbm [shape: bf16[32,128], index: 4, kind: input, shape index: {}]
  %s5 = inlined_call_operand.hbm [shape: f32[4,64], index: 5, kind: input, shape index: {}]
  %s6 = inlined_call_operand.hbm [shape: f32[1,64], index: 6, kind: input, shape index: {}]
  %s7 = inlined_call_operand.hbm [shape: bf16[64,128], index: 7, kind: input, shape index: {}]
  %s8 = inlined_call_operand.hbm [shape: bf16[2,64], index: 8, kind: input, shape index: {}]
  %s9 = inlined_call_operand.hbm [shape: f32[1,64], index: 9, kind: input, shape index: {}]
  %s10 = inlined_call_operand.hbm [shape: f32[16,64], index: 10, kind: input, shape index: {}]
  %s11 = inlined_call_operand.hbm [shape: f32[1,64], index: 11, kind: input, shape index: {}]
  %s12 = inlined_call_operand.hbm [shape: bf16[64,32], index: 12, kind: input, shape index: {}]
  %s13 = inlined_call_operand.hbm [shape: bf16[2,8,32], index: 13, kind: output, shape index: {0}, may-alias: {0,13}]
  %s14 = inlined_call_operand.hbm [shape: f32[2,8,32], index: 14, kind: output, shape index: {1}, may-alias: {1,14}]
  %15 = xla_tuple %s13, %s14
  %s16 = sld [smem:[#allocation0]]
  $region149: #{mixer_model_forward.3} parent=0
    _
  %s18 = ssub.s32 1, %s16
  %s19 = scalar_select 0, %s18, %s16
  $region1: #{mixer_model_forward.3} parent=0
    #allocation10 [shape = 'u8[4096]{0}', space=vmem, size = 0x1000, scoped, tag = 'input window, operand 0']
    #allocation11 [shape = 's32[2]{0}', space=sflag, size = 0x8, scoped, tag = 'scoped memory for mixer_model_forward.3']
    #allocation12 [shape = 's32[2]{0}', space=sflag, size = 0x8, scoped, tag = 'scoped memory for mixer_model_forward.3']
    #allocation13 [shape = 'u8[8192]{0}', space=vmem, size = 0x2000, scoped, tag = 'input window, operand 1']
    #allocation14 [shape = 's32[2]{0}', space=sflag, size = 0x8, scoped, tag = 'scoped memory for mixer_model_forward.3']
    #allocation15 [shape = 'u8[512]{0}', space=vmem, size = 0x400, scoped, tag = 'input window, operand 2, single buffered']
    #allocation16 [shape = 'u8[512]{0}', space=vmem, size = 0x400, scoped, tag = 'input window, operand 3, single buffered']
    #allocation17 [shape = 's32[1]{0}', space=sflag, size = 0x4, scoped, tag = 'scoped memory for mixer_model_forward.3']
    #allocation18 [shape = 'u8[8192]{0}', space=vmem, size = 0x2000, scoped, tag = 'input window, operand 4, single buffered']
    #allocation19 [shape = 'u8[2048]{0}', space=vmem, size = 0x800, scoped, tag = 'input window, operand 5, single buffered']
    #allocation20 [shape = 's32[1]{0}', space=sflag, size = 0x4, scoped, tag = 'scoped memory for mixer_model_forward.3']
    #allocation21 [shape = 'u8[512]{0}', space=vmem, size = 0x400, scoped, tag = 'input window, operand 6, single buffered']
    #allocation22 [shape = 'u8[16384]{0}', space=vmem, size = 0x4000, scoped, tag = 'input window, operand 7, single buffered']
    #allocation23 [shape = 's32[1]{0}', space=sflag, size = 0x4, scoped, tag = 'scoped memory for mixer_model_forward.3']
    #allocation24 [shape = 'u8[512]{0}', space=vmem, size = 0x400, scoped, tag = 'input window, operand 8, single buffered']
    #allocation25 [shape = 'u8[512]{0}', space=vmem, size = 0x400, scoped, tag = 'input window, operand 9, single buffered']
    #allocation26 [shape = 's32[1]{0}', space=sflag, size = 0x4, scoped, tag = 'scoped memory for mixer_model_forward.3']
    #allocation27 [shape = 'u8[8192]{0}', space=vmem, size = 0x2000, scoped, tag = 'input window, operand 10, single buffered']
    #allocation28 [shape = 'u8[512]{0}', space=vmem, size = 0x400, scoped, tag = 'input window, operand 11, single buffered']
    #allocation29 [shape = 's32[1]{0}', space=sflag, size = 0x4, scoped, tag = 'scoped memory for mixer_model_forward.3']
    #allocation30 [shape = 'u8[16384]{0}', space=vmem, size = 0x4000, scoped, tag = 'input window, operand 12, single buffered']
    #allocation31 [shape = 'u8[4096]{0}', space=vmem, size = 0x1000, scoped, tag = 'output window, operand 0']
    #allocation32 [shape = 'u8[8192]{0}', space=vmem, size = 0x2000, scoped, tag = 'output window, operand 1']
    #allocation33 [shape = 's32[2]{0}', space=sflag, size = 0x8, scoped, tag = 'scoped memory for mixer_model_forward.3']
    %20 = vsyncpa [#allocation11], 0
    %s21 = scalar_lea.sflag [#allocation11], 1
    %22 = vsyncpa %s21, 0
    %23 = vsyncpa [#allocation14], 0
    %s24 = scalar_lea.sflag [#allocation14], 1
    %25 = vsyncpa %s24, 0
    %26 = vsyncpa [#allocation17], 0
    %27 = vsyncpa [#allocation20], 0
    %28 = vsyncpa [#allocation23], 0
    %29 = vsyncpa [#allocation26], 0
    %30 = vsyncpa [#allocation29], 0
    %31 = vsyncpa [#allocation12], 0
    %s32 = scalar_lea.sflag [#allocation12], 1
    %33 = vsyncpa %s32, 0
    %34 = vsyncpa [#allocation33], 0
    %s35 = scalar_lea.sflag [#allocation33], 1
    %36 = vsyncpa %s35, 0
    loop: start=0, step=1, limit=4
    $region2: #{mixer_model_forward.3} parent=1 // loop_pre_header
      _
    $region3: #{mixer_model_forward.3} parent=1 // loop_header
      %s38 = sphi 0, %s42
      %p39 = scmp.ge.s32.totalorder %s38, 4
      %s45 = sphi 0, %s57
      %s46 = sphi 0, %s53
      %s47 = sphi 0, %s45
      %s48 = sphi 0, %s46
      %s49 = sphi 0, %s47
      %s50 = sphi 0, %s48
      %s62 = sphi 0, %s64
      %s65 = sphi 0, %s62
      %s66 = sphi 0, %s65
      %s82 = sphi 0, %s66
      %s90 = sphi 0, %s92
      %s93 = sphi 0, %s90
      %s94 = sphi 0, %s93
      %s110 = sphi 0, %s94
      %s114 = sphi 0, %s114
      %s116 = sphi 0, %s114
      %s117 = sphi 0, %s116
      %s131 = sphi 0, %s117
      %s135 = sphi 0, %s135
      %s137 = sphi 0, %s135
      %s138 = sphi 0, %s137
      %s152 = sphi 0, %s138
      %s156 = sphi 0, %s156
      %s158 = sphi 0, %s156
      %s159 = sphi 0, %s158
      %s173 = sphi 0, %s159
      %s177 = sphi 0, %s177
      %s179 = sphi 0, %s177
      %s180 = sphi 0, %s179
      %s194 = sphi 0, %s180
      %s198 = sphi 0, %s198
      %s200 = sphi 0, %s198
      %s201 = sphi 0, %s200
      %s215 = sphi 0, %s201
      %s219 = sphi 0, %s219
      %s221 = sphi 0, %s219
      %s222 = sphi 0, %s221
      %s236 = sphi 0, %s222
      %s240 = sphi 0, %s240
      %s242 = sphi 0, %s240
      %s243 = sphi 0, %s242
      %s257 = sphi 0, %s243
      %s261 = sphi 0, %s261
      %s263 = sphi 0, %s261
      %s264 = sphi 0, %s263
      %s278 = sphi 0, %s264
      %s282 = sphi 0, %s282
      %s284 = sphi 0, %s282
      %s285 = sphi 0, %s284
      %s299 = sphi 0, %s285
      %s303 = sphi 0, %s303
      %s305 = sphi 0, %s303
      %s306 = sphi 0, %s305
      %s320 = sphi 0, %s306
      %s324 = sphi 0, %s324
      %s326 = sphi 0, %s324
      %s327 = sphi 0, %s326
      %s341 = sphi 0, %s327
      %s349 = sphi 0, %s351
      %s352 = sphi 0, %s349
      %s353 = sphi 0, %s352
      %s369 = sphi 0, %s353
      %s377 = sphi 0, %s379
      %s380 = sphi 0, %s377
      %s381 = sphi 0, %s380
      %s397 = sphi 0, %s381
    $region4: #{mixer_model_forward.3} parent=1 // loop_header_branch
      %41 = sbr.rel (%p39) target = $region8
    $region5: #{mixer_model_forward.3} parent=1 // loop_body
      %s43 = ssub.s32 %s38, 1
      %s44 = ssub.s32 %s38, 2
      %s51 = sadd.s32 1, %s46
      %p52 = scmp.ge.s32.totalorder %s51, 1
      %s53 = scalar_select %p52, 0, %s51
      %s54 = sadd.s32 1, %s45
      %s55 = scalar_select %p52, %s54, %s45
      %p56 = scmp.ge.s32.totalorder %s55, 2
      %s57 = scalar_select %p56, 0, %s55
      %s58 = ssub.s32 %s45, %s57
      %s59 = ssub.s32 %s46, %s53
      %s60 = sor.u32 %s58, %s59
      %p61 = scmp.eq.s32.totalorder %s60, 0
      %s63 = sadd.s32 %s62, 1
      %s64 = scalar_select %p61, %s62, %s63
      %p67 = pneg %p61
      %p68 = scmp.eq.s32.totalorder %s38, 1
      %p69 = por %p67, %p68
      %p70 = scmp.ne.s32.totalorder %s62, %s65
      %p71 = scmp.eq.s32.totalorder %s38, 0
      %p72 = por %p70, %p71
      %p73 = scmp.ne.s32.totalorder %s62, %s65
      %p74 = scmp.eq.s32.totalorder %s43, 1
      %p75 = por %p73, %p74
      %p76 = scmp.ne.s32.totalorder %s65, %s66
      %p77 = scmp.eq.s32.totalorder %s43, 0
      %p78 = por %p76, %p77
      %p79 = scmp.ne.s32.totalorder %s65, %s66
      %p80 = scmp.eq.s32.totalorder %s44, 1
      %p81 = por %p79, %p80
      %p83 = scmp.ne.s32.totalorder %s66, %s82
      %p84 = scmp.eq.s32.totalorder %s44, 0
      %p85 = por %p83, %p84
      %s86 = ssub.s32 %s45, %s57
      %s87 = ssub.s32 %s46, %s53
      %s88 = sor.u32 %s86, %s87
      %p89 = scmp.eq.s32.totalorder %s88, 0
      %s91 = sadd.s32 %s90, 1
      %s92 = scalar_select %p89, %s90, %s91
      %p95 = pneg %p89
      %p96 = scmp.eq.s32.totalorder %s38, 1
      %p97 = por %p95, %p96
      %p98 = scmp.ne.s32.totalorder %s90, %s93
      %p99 = scmp.eq.s32.totalorder %s38, 0
      %p100 = por %p98, %p99
      %p101 = scmp.ne.s32.totalorder %s90, %s93
      %p102 = scmp.eq.s32.totalorder %s43, 1
      %p103 = por %p101, %p102
      %p104 = scmp.ne.s32.totalorder %s93, %s94
      %p105 = scmp.eq.s32.totalorder %s43, 0
      %p106 = por %p104, %p105
      %p107 = scmp.ne.s32.totalorder %s93, %s94
      %p108 = scmp.eq.s32.totalorder %s44, 1
      %p109 = por %p107, %p108
      %p111 = scmp.ne.s32.totalorder %s94, %s110
      %p112 = scmp.eq.s32.totalorder %s44, 0
      %p113 = por %p111, %p112
      %s115 = sadd.s32 %s114, 1
      %p118 = scmp.eq.s32.totalorder %s38, 1
      %p119 = scmp.ne.s32.totalorder %s114, %s116
      %p120 = scmp.eq.s32.totalorder %s38, 0
      %p121 = por %p119, %p120
      %p122 = scmp.ne.s32.totalorder %s114, %s116
      %p123 = scmp.eq.s32.totalorder %s43, 1
      %p124 = por %p122, %p123
      %p125 = scmp.ne.s32.totalorder %s116, %s117
      %p126 = scmp.eq.s32.totalorder %s43, 0
      %p127 = por %p125, %p126
      %p128 = scmp.ne.s32.totalorder %s116, %s117
      %p129 = scmp.eq.s32.totalorder %s44, 1
      %p130 = por %p128, %p129
      %p132 = scmp.ne.s32.totalorder %s117, %s131
      %p133 = scmp.eq.s32.totalorder %s44, 0
      %p134 = por %p132, %p133
      %s136 = sadd.s32 %s135, 1
      %p139 = scmp.eq.s32.totalorder %s38, 1
      %p140 = scmp.ne.s32.totalorder %s135, %s137
      %p141 = scmp.eq.s32.totalorder %s38, 0
      %p142 = por %p140, %p141
      %p143 = scmp.ne.s32.totalorder %s135, %s137
      %p144 = scmp.eq.s32.totalorder %s43, 1
      %p145 = por %p143, %p144
      %p146 = scmp.ne.s32.totalorder %s137, %s138
      %p147 = scmp.eq.s32.totalorder %s43, 0
      %p148 = por %p146, %p147
      %p149 = scmp.ne.s32.totalorder %s137, %s138
      %p150 = scmp.eq.s32.totalorder %s44, 1
      %p151 = por %p149, %p150
      %p153 = scmp.ne.s32.totalorder %s138, %s152
      %p154 = scmp.eq.s32.totalorder %s44, 0
      %p155 = por %p153, %p154
      %s157 = sadd.s32 %s156, 1
      %p160 = scmp.eq.s32.totalorder %s38, 1
      %p161 = scmp.ne.s32.totalorder %s156, %s158
      %p162 = scmp.eq.s32.totalorder %s38, 0
      %p163 = por %p161, %p162
      %p164 = scmp.ne.s32.totalorder %s156, %s158
      %p165 = scmp.eq.s32.totalorder %s43, 1
      %p166 = por %p164, %p165
      %p167 = scmp.ne.s32.totalorder %s158, %s159
      %p168 = scmp.eq.s32.totalorder %s43, 0
      %p169 = por %p167, %p168
      %p170 = scmp.ne.s32.totalorder %s158, %s159
      %p171 = scmp.eq.s32.totalorder %s44, 1
      %p172 = por %p170, %p171
      %p174 = scmp.ne.s32.totalorder %s159, %s173
      %p175 = scmp.eq.s32.totalorder %s44, 0
      %p176 = por %p174, %p175
      %s178 = sadd.s32 %s177, 1
      %p181 = scmp.eq.s32.totalorder %s38, 1
      %p182 = scmp.ne.s32.totalorder %s177, %s179
      %p183 = scmp.eq.s32.totalorder %s38, 0
      %p184 = por %p182, %p183
      %p185 = scmp.ne.s32.totalorder %s177, %s179
      %p186 = scmp.eq.s32.totalorder %s43, 1
      %p187 = por %p185, %p186
      %p188 = scmp.ne.s32.totalorder %s179, %s180
      %p189 = scmp.eq.s32.totalorder %s43, 0
      %p190 = por %p188, %p189
      %p191 = scmp.ne.s32.totalorder %s179, %s180
      %p192 = scmp.eq.s32.totalorder %s44, 1
      %p193 = por %p191, %p192
      %p195 = scmp.ne.s32.totalorder %s180, %s194
      %p196 = scmp.eq.s32.totalorder %s44, 0
      %p197 = por %p195, %p196
      %s199 = sadd.s32 %s198, 1
      %p202 = scmp.eq.s32.totalorder %s38, 1
      %p203 = scmp.ne.s32.totalorder %s198, %s200
      %p204 = scmp.eq.s32.totalorder %s38, 0
      %p205 = por %p203, %p204
      %p206 = scmp.ne.s32.totalorder %s198, %s200
      %p207 = scmp.eq.s32.totalorder %s43, 1
      %p208 = por %p206, %p207
      %p209 = scmp.ne.s32.totalorder %s200, %s201
      %p210 = scmp.eq.s32.totalorder %s43, 0
      %p211 = por %p209, %p210
      %p212 = scmp.ne.s32.totalorder %s200, %s201
      %p213 = scmp.eq.s32.totalorder %s44, 1
      %p214 = por %p212, %p213
      %p216 = scmp.ne.s32.totalorder %s201, %s215
      %p217 = scmp.eq.s32.totalorder %s44, 0
      %p218 = por %p216, %p217
      %s220 = sadd.s32 %s219, 1
      %p223 = scmp.eq.s32.totalorder %s38, 1
      %p224 = scmp.ne.s32.totalorder %s219, %s221
      %p225 = scmp.eq.s32.totalorder %s38, 0
      %p226 = por %p224, %p225
      %p227 = scmp.ne.s32.totalorder %s219, %s221
      %p228 = scmp.eq.s32.totalorder %s43, 1
      %p229 = por %p227, %p228
      %p230 = scmp.ne.s32.totalorder %s221, %s222
      %p231 = scmp.eq.s32.totalorder %s43, 0
      %p232 = por %p230, %p231
      %p233 = scmp.ne.s32.totalorder %s221, %s222
      %p234 = scmp.eq.s32.totalorder %s44, 1
      %p235 = por %p233, %p234
      %p237 = scmp.ne.s32.totalorder %s222, %s236
      %p238 = scmp.eq.s32.totalorder %s44, 0
      %p239 = por %p237, %p238
      %s241 = sadd.s32 %s240, 1
      %p244 = scmp.eq.s32.totalorder %s38, 1
      %p245 = scmp.ne.s32.totalorder %s240, %s242
      %p246 = scmp.eq.s32.totalorder %s38, 0
      %p247 = por %p245, %p246
      %p248 = scmp.ne.s32.totalorder %s240, %s242
      %p249 = scmp.eq.s32.totalorder %s43, 1
      %p250 = por %p248, %p249
      %p251 = scmp.ne.s32.totalorder %s242, %s243
      %p252 = scmp.eq.s32.totalorder %s43, 0
      %p253 = por %p251, %p252
      %p254 = scmp.ne.s32.totalorder %s242, %s243
      %p255 = scmp.eq.s32.totalorder %s44, 1
      %p256 = por %p254, %p255
      %p258 = scmp.ne.s32.totalorder %s243, %s257
      %p259 = scmp.eq.s32.totalorder %s44, 0
      %p260 = por %p258, %p259
      %s262 = sadd.s32 %s261, 1
      %p265 = scmp.eq.s32.totalorder %s38, 1
      %p266 = scmp.ne.s32.totalorder %s261, %s263
      %p267 = scmp.eq.s32.totalorder %s38, 0
      %p268 = por %p266, %p267
      %p269 = scmp.ne.s32.totalorder %s261, %s263
      %p270 = scmp.eq.s32.totalorder %s43, 1
      %p271 = por %p269, %p270
      %p272 = scmp.ne.s32.totalorder %s263, %s264
      %p273 = scmp.eq.s32.totalorder %s43, 0
      %p274 = por %p272, %p273
      %p275 = scmp.ne.s32.totalorder %s263, %s264
      %p276 = scmp.eq.s32.totalorder %s44, 1
      %p277 = por %p275, %p276
      %p279 = scmp.ne.s32.totalorder %s264, %s278
      %p280 = scmp.eq.s32.totalorder %s44, 0
      %p281 = por %p279, %p280
      %s283 = sadd.s32 %s282, 1
      %p286 = scmp.eq.s32.totalorder %s38, 1
      %p287 = scmp.ne.s32.totalorder %s282, %s284
      %p288 = scmp.eq.s32.totalorder %s38, 0
      %p289 = por %p287, %p288
      %p290 = scmp.ne.s32.totalorder %s282, %s284
      %p291 = scmp.eq.s32.totalorder %s43, 1
      %p292 = por %p290, %p291
      %p293 = scmp.ne.s32.totalorder %s284, %s285
      %p294 = scmp.eq.s32.totalorder %s43, 0
      %p295 = por %p293, %p294
      %p296 = scmp.ne.s32.totalorder %s284, %s285
      %p297 = scmp.eq.s32.totalorder %s44, 1
      %p298 = por %p296, %p297
      %p300 = scmp.ne.s32.totalorder %s285, %s299
      %p301 = scmp.eq.s32.totalorder %s44, 0
      %p302 = por %p300, %p301
      %s304 = sadd.s32 %s303, 1
      %p307 = scmp.eq.s32.totalorder %s38, 1
      %p308 = scmp.ne.s32.totalorder %s303, %s305
      %p309 = scmp.eq.s32.totalorder %s38, 0
      %p310 = por %p308, %p309
      %p311 = scmp.ne.s32.totalorder %s303, %s305
      %p312 = scmp.eq.s32.totalorder %s43, 1
      %p313 = por %p311, %p312
      %p314 = scmp.ne.s32.totalorder %s305, %s306
      %p315 = scmp.eq.s32.totalorder %s43, 0
      %p316 = por %p314, %p315
      %p317 = scmp.ne.s32.totalorder %s305, %s306
      %p318 = scmp.eq.s32.totalorder %s44, 1
      %p319 = por %p317, %p318
      %p321 = scmp.ne.s32.totalorder %s306, %s320
      %p322 = scmp.eq.s32.totalorder %s44, 0
      %p323 = por %p321, %p322
      %s325 = sadd.s32 %s324, 1
      %p328 = scmp.eq.s32.totalorder %s38, 1
      %p329 = scmp.ne.s32.totalorder %s324, %s326
      %p330 = scmp.eq.s32.totalorder %s38, 0
      %p331 = por %p329, %p330
      %p332 = scmp.ne.s32.totalorder %s324, %s326
      %p333 = scmp.eq.s32.totalorder %s43, 1
      %p334 = por %p332, %p333
      %p335 = scmp.ne.s32.totalorder %s326, %s327
      %p336 = scmp.eq.s32.totalorder %s43, 0
      %p337 = por %p335, %p336
      %p338 = scmp.ne.s32.totalorder %s326, %s327
      %p339 = scmp.eq.s32.totalorder %s44, 1
      %p340 = por %p338, %p339
      %p342 = scmp.ne.s32.totalorder %s327, %s341
      %p343 = scmp.eq.s32.totalorder %s44, 0
      %p344 = por %p342, %p343
      %s345 = ssub.s32 %s45, %s57
      %s346 = ssub.s32 %s46, %s53
      %s347 = sor.u32 %s345, %s346
      %p348 = scmp.eq.s32.totalorder %s347, 0
      %s350 = sadd.s32 %s349, 1
      %s351 = scalar_select %p348, %s349, %s350
      %p354 = pneg %p348
      %p355 = scmp.eq.s32.totalorder %s38, 1
      %p356 = por %p354, %p355
      %p357 = scmp.ne.s32.totalorder %s349, %s352
      %p358 = scmp.eq.s32.totalorder %s38, 0
      %p359 = por %p357, %p358
      %p360 = scmp.ne.s32.totalorder %s349, %s352
      %p361 = scmp.eq.s32.totalorder %s43, 1
      %p362 = por %p360, %p361
      %p363 = scmp.ne.s32.totalorder %s352, %s353
      %p364 = scmp.eq.s32.totalorder %s43, 0
      %p365 = por %p363, %p364
      %p366 = scmp.ne.s32.totalorder %s352, %s353
      %p367 = scmp.eq.s32.totalorder %s44, 1
      %p368 = por %p366, %p367
      %p370 = scmp.ne.s32.totalorder %s353, %s369
      %p371 = scmp.eq.s32.totalorder %s44, 0
      %p372 = por %p370, %p371
      %s373 = ssub.s32 %s45, %s57
      %s374 = ssub.s32 %s46, %s53
      %s375 = sor.u32 %s373, %s374
      %p376 = scmp.eq.s32.totalorder %s375, 0
      %s378 = sadd.s32 %s377, 1
      %s379 = scalar_select %p376, %s377, %s378
      %p382 = pneg %p376
      %p383 = scmp.eq.s32.totalorder %s38, 1
      %p384 = por %p382, %p383
      %p385 = scmp.ne.s32.totalorder %s377, %s380
      %p386 = scmp.eq.s32.totalorder %s38, 0
      %p387 = por %p385, %p386
      %p388 = scmp.ne.s32.totalorder %s377, %s380
      %p389 = scmp.eq.s32.totalorder %s43, 1
      %p390 = por %p388, %p389
      %p391 = scmp.ne.s32.totalorder %s380, %s381
      %p392 = scmp.eq.s32.totalorder %s43, 0
      %p393 = por %p391, %p392
      %p394 = scmp.ne.s32.totalorder %s380, %s381
      %p395 = scmp.eq.s32.totalorder %s44, 1
      %p396 = por %p394, %p395
      %p398 = scmp.ne.s32.totalorder %s381, %s397
      %p399 = scmp.eq.s32.totalorder %s44, 0
      %p400 = por %p398, %p399
      %p401 = scmp.le.s32.totalorder 1, %s38
      %p402 = scmp.lt.s32.totalorder %s38, 3
      %p403 = pnand %p401, %p402
      %p404 = pneg %p403
      // Predicated region
      $region9: #{mixer_model_forward.3} parent=5 // pred_check
        _
      $region10: #{mixer_model_forward.3} parent=5 // pred_check_branch
        %406 = sbr.rel (%p403) target = $region12
      $region11: #{mixer_model_forward.3} parent=5 // pred_region
        %s407 = ssub.s32 %s38, 1
        // Predicated region
        $region13: #{mixer_model_forward.3} parent=11 // pred_check
          %p408 = pneg %p127
        $region14: #{mixer_model_forward.3} parent=11 // pred_check_branch
          %410 = sbr.rel (%p408) target = $region16
        $region15: #{mixer_model_forward.3} parent=11 // pred_region
          %s412 = ssub.s32 16, 16
          %413 = vsyncadd [#allocation14], %s412
          %s415 = sshll.u32 [#allocation15], 4
          %s416 = int_to_ptr.vmem [resolvable:$true] %s415
          %418 = dma.hbm_to_vmem [thread:$0]  %s2, 16, %s416, [#allocation14]
        $region16: #{mixer_model_forward.3} parent=11 // pred_fallthru
          _
        // Predicated region
        $region17: #{mixer_model_forward.3} parent=11 // pred_check
          %p419 = pneg %p148
        $region18: #{mixer_model_forward.3} parent=11 // pred_check_branch
          %421 = sbr.rel (%p419) target = $region20
        $region19: #{mixer_model_forward.3} parent=11 // pred_region
          %s423 = ssub.s32 16, 16
          %424 = vsyncadd [#allocation17], %s423
          %s426 = sshll.u32 [#allocation16], 4
          %s427 = int_to_ptr.vmem [resolvable:$true] %s426
          %429 = dma.hbm_to_vmem [thread:$0]  %s3, 16, %s427, [#allocation17]
        $region20: #{mixer_model_forward.3} parent=11 // pred_fallthru
          _
        // Predicated region
        $region21: #{mixer_model_forward.3} parent=11 // pred_check
          %p430 = pneg %p169
        $region22: #{mixer_model_forward.3} parent=11 // pred_check_branch
          %432 = sbr.rel (%p430) target = $region24
        $region23: #{mixer_model_forward.3} parent=11 // pred_region
          %s434 = ssub.s32 256, 256
          %435 = vsyncadd [#allocation17], %s434
          %s436 = sshll.u32 [#allocation18], 4
          %s437 = int_to_ptr.vmem [resolvable:$true] %s436
          %442 = dma.hbm_to_vmem [thread:$0]  %s4, 256, %s437, [#allocation17], 64, 64, 4
        $region24: #{mixer_model_forward.3} parent=11 // pred_fallthru
          _
        // Predicated region
        $region25: #{mixer_model_forward.3} parent=11 // pred_check
          %p443 = pneg %p190
        $region26: #{mixer_model_forward.3} parent=11 // pred_check_branch
          %445 = sbr.rel (%p443) target = $region28
        $region27: #{mixer_model_forward.3} parent=11 // pred_region
          %s447 = ssub.s32 64, 64
          %448 = vsyncadd [#allocation20], %s447
          %s450 = sshll.u32 [#allocation19], 4
          %s451 = int_to_ptr.vmem [resolvable:$true] %s450
          %453 = dma.hbm_to_vmem [thread:$0]  %s5, 64, %s451, [#allocation20]
        $region28: #{mixer_model_forward.3} parent=11 // pred_fallthru
          _
        // Predicated region
        $region29: #{mixer_model_forward.3} parent=11 // pred_check
          %p454 = pneg %p211
        $region30: #{mixer_model_forward.3} parent=11 // pred_check_branch
          %456 = sbr.rel (%p454) target = $region32
        $region31: #{mixer_model_forward.3} parent=11 // pred_region
          %s458 = ssub.s32 16, 16
          %459 = vsyncadd [#allocation20], %s458
          %s461 = sshll.u32 [#allocation21], 4
          %s462 = int_to_ptr.vmem [resolvable:$true] %s461
          %464 = dma.hbm_to_vmem [thread:$0]  %s6, 16, %s462, [#allocation20]
        $region32: #{mixer_model_forward.3} parent=11 // pred_fallthru
          _
        // Predicated region
        $region33: #{mixer_model_forward.3} parent=11 // pred_check
          %p465 = pneg %p232
        $region34: #{mixer_model_forward.3} parent=11 // pred_check_branch
          %467 = sbr.rel (%p465) target = $region36
        $region35: #{mixer_model_forward.3} parent=11 // pred_region
          %s469 = ssub.s32 512, 512
          %470 = vsyncadd [#allocation23], %s469
          %s471 = sshll.u32 [#allocation22], 4
          %s472 = int_to_ptr.vmem [resolvable:$true] %s471
          %477 = dma.hbm_to_vmem [thread:$0]  %s7, 512, %s472, [#allocation23], 64, 64, 4
        $region36: #{mixer_model_forward.3} parent=11 // pred_fallthru
          _
        // Predicated region
        $region37: #{mixer_model_forward.3} parent=11 // pred_check
          %p478 = pneg %p253
        $region38: #{mixer_model_forward.3} parent=11 // pred_check_branch
          %480 = sbr.rel (%p478) target = $region40
        $region39: #{mixer_model_forward.3} parent=11 // pred_region
          %s482 = ssub.s32 16, 16
          %483 = vsyncadd [#allocation23], %s482
          %s485 = sshll.u32 [#allocation24], 4
          %s486 = int_to_ptr.vmem [resolvable:$true] %s485
          %488 = dma.hbm_to_vmem [thread:$0]  %s8, 16, %s486, [#allocation23]
        $region40: #{mixer_model_forward.3} parent=11 // pred_fallthru
          _
        // Predicated region
        $region41: #{mixer_model_forward.3} parent=11 // pred_check
          %p489 = pneg %p274
        $region42: #{mixer_model_forward.3} parent=11 // pred_check_branch
          %491 = sbr.rel (%p489) target = $region44
        $region43: #{mixer_model_forward.3} parent=11 // pred_region
          %s493 = ssub.s32 16, 16
          %494 = vsyncadd [#allocation26], %s493
          %s496 = sshll.u32 [#allocation25], 4
          %s497 = int_to_ptr.vmem [resolvable:$true] %s496
          %499 = dma.hbm_to_vmem [thread:$0]  %s9, 16, %s497, [#allocation26]
        $region44: #{mixer_model_forward.3} parent=11 // pred_fallthru
          _
        // Predicated region
        $region45: #{mixer_model_forward.3} parent=11 // pred_check
          %p500 = pneg %p295
        $region46: #{mixer_model_forward.3} parent=11 // pred_check_branch
          %502 = sbr.rel (%p500) target = $region48
        $region47: #{mixer_model_forward.3} parent=11 // pred_region
          %s504 = ssub.s32 256, 256
          %505 = vsyncadd [#allocation26], %s504
          %s506 = sshll.u32 [#allocation27], 4
          %s507 = int_to_ptr.vmem [resolvable:$true] %s506
          %512 = dma.hbm_to_vmem [thread:$0]  %s10, 256, %s507, [#allocation26], 128, 128, 8
        $region48: #{mixer_model_forward.3} parent=11 // pred_fallthru
          _
        // Predicated region
        $region49: #{mixer_model_forward.3} parent=11 // pred_check
          %p513 = pneg %p316
        $region50: #{mixer_model_forward.3} parent=11 // pred_check_branch
          %515 = sbr.rel (%p513) target = $region52
        $region51: #{mixer_model_forward.3} parent=11 // pred_region
          %s517 = ssub.s32 16, 16
          %518 = vsyncadd [#allocation29], %s517
          %s520 = sshll.u32 [#allocation28], 4
          %s521 = int_to_ptr.vmem [resolvable:$true] %s520
          %523 = dma.hbm_to_vmem [thread:$0]  %s11, 16, %s521, [#allocation29]
        $region52: #{mixer_model_forward.3} parent=11 // pred_fallthru
          _
        // Predicated region
        $region53: #{mixer_model_forward.3} parent=11 // pred_check
          %p524 = pneg %p337
        $region54: #{mixer_model_forward.3} parent=11 // pred_check_branch
          %526 = sbr.rel (%p524) target = $region56
        $region55: #{mixer_model_forward.3} parent=11 // pred_region
          %s528 = ssub.s32 512, 512
          %529 = vsyncadd [#allocation29], %s528
          %s530 = sshll.u32 [#allocation30], 4
          %s531 = int_to_ptr.vmem [resolvable:$true] %s530
          %536 = dma.hbm_to_vmem [thread:$0]  %s12, 512, %s531, [#allocation29], 64, 64, 4
        $region56: #{mixer_model_forward.3} parent=11 // pred_fallthru
          _
      $region12: #{mixer_model_forward.3} parent=5 // pred_fallthru
        _
      %p537 = scmp.lt.s32.totalorder %s38, 2
      // Predicated region
      $region57: #{mixer_model_forward.3} parent=5 // pred_check
        %p538 = pneg %p537
      $region58: #{mixer_model_forward.3} parent=5 // pred_check_branch
        %540 = sbr.rel (%p538) target = $region60
      $region59: #{mixer_model_forward.3} parent=5 // pred_region
        // Predicated region
        $region61: #{mixer_model_forward.3} parent=59 // pred_check
          %p541 = pneg %p72
        $region62: #{mixer_model_forward.3} parent=59 // pred_check_branch
          %543 = sbr.rel (%p541) target = $region64
        $region63: #{mixer_model_forward.3} parent=59 // pred_region
          %s544 = sand.u32 %s62, 1
          %s545 = scalar_lea.sflag [#allocation11], %s544
          %s546 = sand.u32 %s62, 1
          %s547 = smul.addr %s546, 4
          %s548 = scalar_lea.vmem [#allocation10], %s547
          %s550 = ssub.s32 64, 64
          %551 = vsyncadd %s545, %s550
          %s552 = sadd.s32 %s46, %s45
          %s553 = smul.addr %s552, 64
          %s554 = scalar_lea.hbm %s0, %s553
          %s556 = sshll.u32 %s548, 4
          %s557 = int_to_ptr.vmem [resolvable:$true] %s556
          %559 = dma.hbm_to_vmem [thread:$0]  %s554, 64, %s557, %s545
        $region64: #{mixer_model_forward.3} parent=59 // pred_fallthru
          _
        // Predicated region
        $region65: #{mixer_model_forward.3} parent=59 // pred_check
          %p560 = pneg %p100
        $region66: #{mixer_model_forward.3} parent=59 // pred_check_branch
          %562 = sbr.rel (%p560) target = $region68
        $region67: #{mixer_model_forward.3} parent=59 // pred_region
          %s563 = sand.u32 %s38, 1
          %s564 = scalar_lea.sflag [#allocation14], %s563
          %s565 = sand.u32 %s90, 1
          %s566 = smul.addr %s565, 8
          %s567 = scalar_lea.vmem [#allocation13], %s566
          %s569 = ssub.s32 128, 128
          %570 = vsyncadd %s564, %s569
          %s571 = sadd.s32 %s46, %s45
          %s572 = smul.addr %s571, 128
          %s573 = scalar_lea.hbm %s1, %s572
          %s575 = sshll.u32 %s567, 4
          %s576 = int_to_ptr.vmem [resolvable:$true] %s575
          %578 = dma.hbm_to_vmem [thread:$0]  %s573, 128, %s576, %s564
        $region68: #{mixer_model_forward.3} parent=59 // pred_fallthru
          _
      $region60: #{mixer_model_forward.3} parent=5 // pred_fallthru
        _
      %p579 = scmp.le.s32.totalorder 1, %s38
      %p580 = scmp.lt.s32.totalorder %s38, 3
      %p581 = pnand %p579, %p580
      %p582 = pneg %p581
      // Predicated region
      $region69: #{mixer_model_forward.3} parent=5 // pred_check
        _
      $region70: #{mixer_model_forward.3} parent=5 // pred_check_branch
        %584 = sbr.rel (%p581) target = $region72
      $region71: #{mixer_model_forward.3} parent=5 // pred_region
        %s585 = ssub.s32 %s38, 1
        %s586 = sand.u32 %s65, 1
        %s587 = scalar_lea.sflag [#allocation11], %s586
        %s588 = sand.u32 %s65, 1
        %s589 = smul.addr %s588, 4
        %s590 = scalar_lea.vmem [#allocation10], %s589
        // Predicated region
        $region73: #{mixer_model_forward.3} parent=71 // pred_check
          %p591 = pneg %p78
        $region74: #{mixer_model_forward.3} parent=71 // pred_check_branch
          %593 = sbr.rel (%p591) target = $region76
        $region75: #{mixer_model_forward.3} parent=71 // pred_region
          %594 = dma.done %s587, 64
        $region76: #{mixer_model_forward.3} parent=71 // pred_fallthru
          _
        %s595 = sand.u32 %s43, 1
        %s596 = scalar_lea.sflag [#allocation14], %s595
        %s597 = sand.u32 %s93, 1
        %s598 = smul.addr %s597, 8
        %s599 = scalar_lea.vmem [#allocation13], %s598
        // Predicated region
        $region77: #{mixer_model_forward.3} parent=71 // pred_check
          %p600 = pneg %p106
        $region78: #{mixer_model_forward.3} parent=71 // pred_check_branch
          %602 = sbr.rel (%p600) target = $region80
        $region79: #{mixer_model_forward.3} parent=71 // pred_region
          %603 = dma.done %s596, 128
        $region80: #{mixer_model_forward.3} parent=71 // pred_fallthru
          _
        // Predicated region
        $region81: #{mixer_model_forward.3} parent=71 // pred_check
          %p604 = pneg %p127
        $region82: #{mixer_model_forward.3} parent=71 // pred_check_branch
          %606 = sbr.rel (%p604) target = $region84
        $region83: #{mixer_model_forward.3} parent=71 // pred_region
          %607 = dma.done [#allocation14], 16
        $region84: #{mixer_model_forward.3} parent=71 // pred_fallthru
          _
        // Predicated region
        $region85: #{mixer_model_forward.3} parent=71 // pred_check
          %p608 = pneg %p148
        $region86: #{mixer_model_forward.3} parent=71 // pred_check_branch
          %610 = sbr.rel (%p608) target = $region88
        $region87: #{mixer_model_forward.3} parent=71 // pred_region
          %611 = dma.done [#allocation17], 16
        $region88: #{mixer_model_forward.3} parent=71 // pred_fallthru
          _
        // Predicated region
        $region89: #{mixer_model_forward.3} parent=71 // pred_check
          %p612 = pneg %p169
        $region90: #{mixer_model_forward.3} parent=71 // pred_check_branch
          %614 = sbr.rel (%p612) target = $region92
        $region91: #{mixer_model_forward.3} parent=71 // pred_region
          %615 = dma.done [#allocation17], 256
        $region92: #{mixer_model_forward.3} parent=71 // pred_fallthru
          _
        // Predicated region
        $region93: #{mixer_model_forward.3} parent=71 // pred_check
          %p616 = pneg %p190
        $region94: #{mixer_model_forward.3} parent=71 // pred_check_branch
          %618 = sbr.rel (%p616) target = $region96
        $region95: #{mixer_model_forward.3} parent=71 // pred_region
          %619 = dma.done [#allocation20], 64
        $region96: #{mixer_model_forward.3} parent=71 // pred_fallthru
          _
        // Predicated region
        $region97: #{mixer_model_forward.3} parent=71 // pred_check
          %p620 = pneg %p211
        $region98: #{mixer_model_forward.3} parent=71 // pred_check_branch
          %622 = sbr.rel (%p620) target = $region100
        $region99: #{mixer_model_forward.3} parent=71 // pred_region
          %623 = dma.done [#allocation20], 16
        $region100: #{mixer_model_forward.3} parent=71 // pred_fallthru
          _
        // Predicated region
        $region101: #{mixer_model_forward.3} parent=71 // pred_check
          %p624 = pneg %p232
        $region102: #{mixer_model_forward.3} parent=71 // pred_check_branch
          %626 = sbr.rel (%p624) target = $region104
        $region103: #{mixer_model_forward.3} parent=71 // pred_region
          %627 = dma.done [#allocation23], 512
        $region104: #{mixer_model_forward.3} parent=71 // pred_fallthru
          _
        // Predicated region
        $region105: #{mixer_model_forward.3} parent=71 // pred_check
          %p628 = pneg %p253
        $region106: #{mixer_model_forward.3} parent=71 // pred_check_branch
          %630 = sbr.rel (%p628) target = $region108
        $region107: #{mixer_model_forward.3} parent=71 // pred_region
          %631 = dma.done [#allocation23], 16
        $region108: #{mixer_model_forward.3} parent=71 // pred_fallthru
          _
        // Predicated region
        $region109: #{mixer_model_forward.3} parent=71 // pred_check
          %p632 = pneg %p274
        $region110: #{mixer_model_forward.3} parent=71 // pred_check_branch
          %634 = sbr.rel (%p632) target = $region112
        $region111: #{mixer_model_forward.3} parent=71 // pred_region
          %635 = dma.done [#allocation26], 16
        $region112: #{mixer_model_forward.3} parent=71 // pred_fallthru
          _
        // Predicated region
        $region113: #{mixer_model_forward.3} parent=71 // pred_check
          %p636 = pneg %p295
        $region114: #{mixer_model_forward.3} parent=71 // pred_check_branch
          %638 = sbr.rel (%p636) target = $region116
        $region115: #{mixer_model_forward.3} parent=71 // pred_region
          %639 = dma.done [#allocation26], 256
        $region116: #{mixer_model_forward.3} parent=71 // pred_fallthru
          _
        // Predicated region
        $region117: #{mixer_model_forward.3} parent=71 // pred_check
          %p640 = pneg %p316
        $region118: #{mixer_model_forward.3} parent=71 // pred_check_branch
          %642 = sbr.rel (%p640) target = $region120
        $region119: #{mixer_model_forward.3} parent=71 // pred_region
          %643 = dma.done [#allocation29], 16
        $region120: #{mixer_model_forward.3} parent=71 // pred_fallthru
          _
        // Predicated region
        $region121: #{mixer_model_forward.3} parent=71 // pred_check
          %p644 = pneg %p337
        $region122: #{mixer_model_forward.3} parent=71 // pred_check_branch
          %646 = sbr.rel (%p644) target = $region124
        $region123: #{mixer_model_forward.3} parent=71 // pred_region
          %647 = dma.done [#allocation29], 512
        $region124: #{mixer_model_forward.3} parent=71 // pred_fallthru
          _
        %s648 = sand.u32 %s65, 1
        %s649 = scalar_lea.sflag [#allocation11], %s648
        %s650 = sand.u32 %s65, 1
        %s651 = smul.addr %s650, 4
        %s652 = scalar_lea.vmem [#allocation10], %s651
        %p653 = pneg %p78
        %p654 = pneg %p75
        %s655 = sand.u32 %s43, 1
        %s656 = scalar_lea.sflag [#allocation14], %s655
        %s657 = sand.u32 %s93, 1
        %s658 = smul.addr %s657, 8
        %s659 = scalar_lea.vmem [#allocation13], %s658
        %p660 = pneg %p106
        %p661 = pneg %p103
        %p662 = pneg %p127
        %p663 = pneg %p124
        %p664 = pneg %p148
        %p665 = pneg %p145
        %p666 = pneg %p169
        %p667 = pneg %p166
        %p668 = pneg %p190
        %p669 = pneg %p187
        %p670 = pneg %p211
        %p671 = pneg %p208
        %p672 = pneg %p232
        %p673 = pneg %p229
        %p674 = pneg %p253
        %p675 = pneg %p250
        %p676 = pneg %p274
        %p677 = pneg %p271
        %p678 = pneg %p295
        %p679 = pneg %p292
        %p680 = pneg %p316
        %p681 = pneg %p313
        %p682 = pneg %p337
        %p683 = pneg %p334
        %p684 = pneg %p365
        %p685 = pneg %p362
        %s686 = sand.u32 %s352, 1
        %s687 = scalar_lea.sflag [#allocation12], %s686
        %s688 = sand.u32 %s352, 1
        %s689 = smul.addr %s688, 4
        %s690 = scalar_lea.vmem [#allocation31], %s689
        %p691 = pneg %p393
        %p692 = pneg %p390
        %s693 = sand.u32 %s380, 1
        %s694 = scalar_lea.sflag [#allocation33], %s693
        %s695 = sand.u32 %s380, 1
        %s696 = smul.addr %s695, 8
        %s697 = scalar_lea.vmem [#allocation32], %s696
        %p699 = scmp.eq.s32.totalorder %s48, 0
        // Predicated region
        $region125: #{mixer_model_forward.3} parent=71 // pred_check
          %p700 = pneg %p699
        $region126: #{mixer_model_forward.3} parent=71 // pred_check_branch
          %702 = sbr.rel (%p700) target = $region128
        $region127: #{mixer_model_forward.3} parent=71 // pred_region
          %vm703 = vcmask 523264
          %704 = vst.msk [vmem:[#allocation2] sm:$0xff] %vm703, 0.0
          %705 = vst.msk [vmem:[#allocation2 + $0x8] sm:$0xff] %vm703, 0.0
          %706 = vst.msk [vmem:[#allocation3] sm:$0xff] %vm703, 0.0
        $region128: #{mixer_model_forward.3} parent=71 // pred_fallthru
          _
        %v707 = vld [vmem:[%s590] sm:$0xf]
        %v708 = vunpack.c.l.bf16 %v707
        %v709 = vld [vmem:[%s599] sm:$0xff]
        %v710 = vadd.f32 %v708, %v709
        %vm711 = vcmask 261120
        %712 = vst.msk [vmem:[%s697] sm:$0xff] %vm711, %v710
        %v713 = vld [vmem:[#allocation15] sm:$0x1]
        %v714 = vld [vmem:[#allocation16] sm:$0x1]
        %v715 = vsel %vm711, %v710, 0.0
        %716 = vadd.xlane.f32.xlu0 %v715
        %v717 = vpop.xlane.xlu0 %716
        %v718 = vrcp.pop 32.0
        %v719 = vmul.f32 %v717, %v718
        %v720 = vsub.f32 %v710, %v719
        %v721 = vmul.f32 %v720, %v720
        %v722 = vsel %vm711, %v721, 0.0
        %723 = vadd.xlane.f32.xlu0 %v722
        %v724 = vpop.xlane.xlu0 %723
        %v725 = vmul.f32 %v724, %v718
        %v726 = vadd.f32 %v725, 1e-05
        %v727 = vrsqrt.pop %v726
        %v728 = vmul.f32 %v720, %v727
        %v730 = vlaneseq
        %v731 = vshrl.u32 %v730, 7
        %v732 = vsub.s32 0, %v731
        %v733 = vrot.slane %v713, %v732
        %v735 = vmul.f32 %v728, %v733
        %v737 = vlaneseq
        %v738 = vshrl.u32 %v737, 7
        %v739 = vsub.s32 0, %v738
        %v740 = vrot.slane %v714, %v739
        %v742 = vadd.f32 %v735, %v740
        %v743 = vpack.c.bf16 %v742, %v742
        %v744 = vld [vmem:[#allocation18] sm:$0xf]
        %v745 = vld [vmem:[#allocation18 + $0x4] sm:$0xf]
        %v746 = vld [vmem:[#allocation18 + $0x8] sm:$0xf]
        %v747 = vld [vmem:[#allocation18 + $0xc] sm:$0xf]
        %v752 = vunpack.c.l.b16 %v744
        %v753 = vunpack.c.l.b16 %v745
        %v754 = vunpack.c.l.b16 %v746
        %v755 = vunpack.c.l.b16 %v747
        %v756 = vpack.c.b16 %v753, %v752
        %v757 = vpack.c.b16 %v755, %v754
        %v761 = vsel %vm711, %v743, 0
        %763 = vmatprep.subr.bf16.mxu0 0
        %764 = vmatpush1.bf16.msra.mxu0 %v756
        %765 = vmatprep.subr.bf16.mxu0 0
        %766 = vmatpush1.bf16.msra.mxu0 %v757
        %767 = vmatprep.subr.bf16.mxu0 0
        %768 = vmatpush1.bf16.msra.mxu0 0
        %769 = vmatprep.subr.bf16.mxu0 0
        %770 = vmatpush1.bf16.msra.mxu0 0
        %771 = vmatprep.subr.bf16.mxu0 0
        %772 = vmatpush1.bf16.msra.mxu0 0
        %773 = vmatprep.subr.bf16.mxu0 0
        %774 = vmatpush1.bf16.msra.mxu0 0
        %775 = vmatprep.subr.bf16.mxu0 0
        %776 = vmatpush1.bf16.msra.mxu0 0
        %777 = vmatprep.subr.bf16.mxu0 0
        %778 = vmatpush1.bf16.msra.mxu0 0
        %779 = vmatprep.subr.bf16.mxu0 0
        %780 = vmatpush1.bf16.msra.mxu0 0
        %781 = vmatprep.subr.bf16.mxu0 0
        %782 = vmatpush1.bf16.msra.mxu0 0
        %783 = vmatprep.subr.bf16.mxu0 0
        %784 = vmatpush1.bf16.msra.mxu0 0
        %785 = vmatprep.subr.bf16.mxu0 0
        %786 = vmatpush1.bf16.msra.mxu0 0
        %787 = vmatprep.subr.bf16.mxu0 0
        %788 = vmatpush1.bf16.msra.mxu0 0
        %789 = vmatprep.subr.bf16.mxu0 0
        %790 = vmatpush1.bf16.msra.mxu0 0
        %791 = vmatprep.subr.bf16.mxu0 0
        %792 = vmatpush1.bf16.msra.mxu0 0
        %793 = vmatprep.subr.bf16.mxu0 0
        %794 = vmatpush1.bf16.msra.mxu0 0
        %795 = vmatprep.mubr.bf16.mxu0 0
        %796 = vmatmul.mubr.bf16.gmra.mrb[0].mxu0 %v761
        %v797 = vpop.f32.mrb[0].mxu0
        %v798 = vadd.f32 0.0, %v797
        %v799 = vpop.f32.mrb[0].mxu0
        %v800 = vpop.f32.mrb[0].mxu0
        %v801 = vpop.f32.mrb[0].mxu0
        %802 = vdwg.mxu0
        %vm803 = vcmask 523264
        %804 = vst.msk [vmem:[#allocation3 + $0x8] sm:$0xff] %vm803, %v798
        %v805 = vld [vmem:[#allocation3 + $0x5] sm:$0xff]
        %v806 = vld [vmem:[#allocation19] sm:$0x1]
        %v807 = vlaneseq
        %v808 = vshrl.u32 %v807, 7
        %v809 = vsub.s32 0, %v808
        %v810 = vrot.slane %v806, %v809
        %v811 = vmul.f32 %v805, %v810
        %v812 = vadd.f32 %v811, 0.0
        %v813 = vld [vmem:[#allocation3 + $0x6] sm:$0xff]
        %v814 = vld [vmem:[#allocation19 + $0x1] sm:$0x1]
        %v815 = vlaneseq
        %v816 = vshrl.u32 %v815, 7
        %v817 = vsub.s32 0, %v816
        %v818 = vrot.slane %v814, %v817
        %v819 = vmul.f32 %v813, %v818
        %v820 = vadd.f32 %v812, %v819
        %v821 = vld [vmem:[#allocation3 + $0x7] sm:$0xff]
        %v822 = vld [vmem:[#allocation19 + $0x2] sm:$0x1]
        %v823 = vlaneseq
        %v824 = vshrl.u32 %v823, 7
        %v825 = vsub.s32 0, %v824
        %v826 = vrot.slane %v822, %v825
        %v827 = vmul.f32 %v821, %v826
        %v828 = vadd.f32 %v820, %v827
        %v829 = vld [vmem:[#allocation3 + $0x8] sm:$0xff]
        %v830 = vld [vmem:[#allocation19 + $0x3] sm:$0x1]
        %v831 = vlaneseq
        %v832 = vshrl.u32 %v831, 7
        %v833 = vsub.s32 0, %v832
        %v834 = vrot.slane %v830, %v833
        %v835 = vmul.f32 %v829, %v834
        %v836 = vadd.f32 %v828, %v835
        %v837 = vld [vmem:[#allocation3 + $0xd] sm:$0x7]
        %vm838 = vcmask 518144
        %839 = vst.msk [vmem:[#allocation3 + $0x5] sm:$0x7] %vm838, %v837
        %v840 = vld [vmem:[#allocation21] sm:$0x1]
        %v842 = vlaneseq
        %v843 = vshrl.u32 %v842, 7
        %v844 = vsub.s32 0, %v843
        %v845 = vrot.slane %v840, %v844
        %v847 = vadd.f32 %v836, %v845
        %v848 = vsub.f32 0.0, %v847
        %v849 = vmul.f32 %v848, 1.442695
        %v850 = vpow.pop %v849
        %v851 = vadd.f32 %v850, 1.0
        %v852 = vrcp.pop %v851
        %v853 = vmul.f32 %v847, %v852
        %v854 = vpack.c.bf16 %v853, %v853
        %v855 = vld [vmem:[#allocation22] sm:$0xf]
        %v856 = vld [vmem:[#allocation22 + $0x4] sm:$0xf]
        %v857 = vld [vmem:[#allocation22 + $0x8] sm:$0xf]
        %v858 = vld [vmem:[#allocation22 + $0xc] sm:$0xf]
        %v859 = vld [vmem:[#allocation22 + $0x10] sm:$0xf]
        %v860 = vld [vmem:[#allocation22 + $0x14] sm:$0xf]
        %v861 = vld [vmem:[#allocation22 + $0x18] sm:$0xf]
        %v862 = vld [vmem:[#allocation22 + $0x1c] sm:$0xf]
        %v871 = vunpack.c.l.b16 %v855
        %v872 = vunpack.c.l.b16 %v856
        %v873 = vunpack.c.l.b16 %v857
        %v874 = vunpack.c.l.b16 %v858
        %v875 = vunpack.c.l.b16 %v859
        %v876 = vunpack.c.l.b16 %v860
        %v877 = vunpack.c.l.b16 %v861
        %v878 = vunpack.c.l.b16 %v862
        %v879 = vpack.c.b16 %v872, %v871
        %v880 = vpack.c.b16 %v874, %v873
        %v881 = vpack.c.b16 %v876, %v875
        %v882 = vpack.c.b16 %v878, %v877
        %v888 = vsel %vm803, %v854, 0
        %890 = vmatprep.subr.bf16.mxu0 0
        %891 = vmatpush1.bf16.msra.mxu0 %v879
        %892 = vmatprep.subr.bf16.mxu0 0
        %893 = vmatpush1.bf16.msra.mxu0 %v880
        %894 = vmatprep.subr.bf16.mxu0 0
        %895 = vmatpush1.bf16.msra.mxu0 %v881
        %896 = vmatprep.subr.bf16.mxu0 0
        %897 = vmatpush1.bf16.msra.mxu0 %v882
        %898 = vmatprep.subr.bf16.mxu0 0
        %899 = vmatpush1.bf16.msra.mxu0 0
        %900 = vmatprep.subr.bf16.mxu0 0
        %901 = vmatpush1.bf16.msra.mxu0 0
        %902 = vmatprep.subr.bf16.mxu0 0
        %903 = vmatpush1.bf16.msra.mxu0 0
        %904 = vmatprep.subr.bf16.mxu0 0
        %905 = vmatpush1.bf16.msra.mxu0 0
        %906 = vmatprep.subr.bf16.mxu0 0
        %907 = vmatpush1.bf16.msra.mxu0 0
        %908 = vmatprep.subr.bf16.mxu0 0
        %909 = vmatpush1.bf16.msra.mxu0 0
        %910 = vmatprep.subr.bf16.mxu0 0
        %911 = vmatpush1.bf16.msra.mxu0 0
        %912 = vmatprep.subr.bf16.mxu0 0
        %913 = vmatpush1.bf16.msra.mxu0 0
        %914 = vmatprep.subr.bf16.mxu0 0
        %915 = vmatpush1.bf16.msra.mxu0 0
        %916 = vmatprep.subr.bf16.mxu0 0
        %917 = vmatpush1.bf16.msra.mxu0 0
        %918 = vmatprep.subr.bf16.mxu0 0
        %919 = vmatpush1.bf16.msra.mxu0 0
        %920 = vmatprep.subr.bf16.mxu0 0
        %921 = vmatpush1.bf16.msra.mxu0 0
        %922 = vmatprep.mubr.bf16.mxu0 0
        %923 = vmatmul.mubr.bf16.gmra.mrb[0].mxu0 %v888
        %v924 = vpop.f32.mrb[0].mxu0
        %v925 = vadd.f32 0.0, %v924
        %v926 = vpop.f32.mrb[0].mxu0
        %v927 = vpop.f32.mrb[0].mxu0
        %v928 = vpop.f32.mrb[0].mxu0
        %929 = vdwg.mxu0
        %930 = vst.msk [vmem:[#allocation6] sm:$0xff] %vm711, %v925
        %v931 = vpack.c.bf16 %v925, %v925
        %v932 = vld [vmem:[#allocation24] sm:$0x1]
        %v933 = vld [vmem:[#allocation25] sm:$0x1]
        %v935 = vlaneseq
        %v936 = vshrl.u32 %v935, 7
        %v937 = vsub.s32 0, %v936
        %v938 = vrot.slane %v933, %v937
        %941 = vrot.lane.b32.xlu0 %v931, 96
        %v942 = vpop.permute.xlu0 %941
        %vm943 = vcmask 15360
        %v945 = vsel %vm943, %v942, 0
        %vm947 = vcmask 1040384
        %v949 = vsel %vm947, %v932, 0
        %951 = vmatprep.subr.bf16.mxu0 0
        %952 = vmatpush1.bf16.msra.mxu0 %v949
        %953 = vmatprep.subr.bf16.mxu0 0
        %954 = vmatpush1.bf16.msra.mxu0 0
        %955 = vmatprep.subr.bf16.mxu0 0
        %956 = vmatpush1.bf16.msra.mxu0 0
        %957 = vmatprep.subr.bf16.mxu0 0
        %958 = vmatpush1.bf16.msra.mxu0 0
        %959 = vmatprep.subr.bf16.mxu0 0
        %960 = vmatpush1.bf16.msra.mxu0 0
        %961 = vmatprep.subr.bf16.mxu0 0
        %962 = vmatpush1.bf16.msra.mxu0 0
        %963 = vmatprep.subr.bf16.mxu0 0
        %964 = vmatpush1.bf16.msra.mxu0 0
        %965 = vmatprep.subr.bf16.mxu0 0
        %966 = vmatpush1.bf16.msra.mxu0 0
        %967 = vmatprep.subr.bf16.mxu0 0
        %968 = vmatpush1.bf16.msra.mxu0 0
        %969 = vmatprep.subr.bf16.mxu0 0
        %970 = vmatpush1.bf16.msra.mxu0 0
        %971 = vmatprep.subr.bf16.mxu0 0
        %972 = vmatpush1.bf16.msra.mxu0 0
        %973 = vmatprep.subr.bf16.mxu0 0
        %974 = vmatpush1.bf16.msra.mxu0 0
        %975 = vmatprep.subr.bf16.mxu0 0
        %976 = vmatpush1.bf16.msra.mxu0 0
        %977 = vmatprep.subr.bf16.mxu0 0
        %978 = vmatpush1.bf16.msra.mxu0 0
        %979 = vmatprep.subr.bf16.mxu0 0
        %980 = vmatpush1.bf16.msra.mxu0 0
        %981 = vmatprep.subr.bf16.mxu0 0
        %982 = vmatpush1.bf16.msra.mxu0 0
        %983 = vmatprep.mubr.bf16.mxu0 0
        %984 = vmatmul.mubr.bf16.gmra.mrb[0].mxu0 %v945
        %v985 = vpop.f32.mrb[0].mxu0
        %v986 = vadd.f32 %v938, %v985
        %v987 = vpop.f32.mrb[0].mxu0
        %v988 = vpop.f32.mrb[0].mxu0
        %v989 = vpop.f32.mrb[0].mxu0
        %990 = vdwg.mxu0
        %v991 = vmax.f32 %v986, 0.0
        %v992 = vand.u32 2147483647, %v986
        %v993 = vsub.f32 0.0, %v992
        %v994 = vmul.f32 %v993, 1.442695
        %v995 = vpow.pop %v994
        %v996 = vadd.f32 %v995, 1.0
        %v997 = vlog2.pop %v996
        %v998 = vmul.f32 %v997, 0.6931472
        %v999 = vmul.f32 -0.5, %v995
        %v1000 = vadd.f32 %v999, 1.0
        %v1001 = vmul.f32 %v1000, %v995
        %v1002 = vand.u32 2147483647, %v995
        %vm1003 = vcmp.lt.f32.partialorder %v1002, 0.0004427343
        %v1004 = vsel %vm1003, %v1001, %v998
        %v1005 = vadd.f32 %v991, %v1004
        %1006 = vst.msk [vmem:[#allocation4] sm:$0xff] %vm803, %v1005
        %v1007 = vmul.f32 %v1005, %v853
        %1008 = vst.msk [vmem:[#allocation5] sm:$0xff] %vm803, %v1007
        %v1009 = vld [vmem:[#allocation27] sm:$0xff]
        %v1010 = vld [vmem:[#allocation27 + $0x8] sm:$0xff]
        %v1011 = vld [vmem:[#allocation4] sm:$0xff]
        %v1012 = vld [vmem:[#allocation5] sm:$0xff]
        %v1013 = vld [vmem:[#allocation6] sm:$0xff]
        %v1015 = vcombine.high %v1011, %v1011
        %v1017 = vunpack.c.l.s4 1966171168
        %v1018 = vunpack.c.0.s8 %v1017
        %v1019 = vlaneseq
        %v1020 = vshrl.u32 %v1019, 7
        %v1021 = vsub.s32 %v1018, %v1020
        %v1022 = vrot.slane %v1011, %v1021
        %v1024 = vunpack.c.l.s4 1966171168
        %v1025 = vunpack.c.0.s8 %v1024
        %v1026 = vlaneseq
        %v1027 = vshrl.u32 %v1026, 7
        %v1028 = vsub.s32 %v1025, %v1027
        %v1029 = vrot.slane %v1015, %v1028
        %v1030 = vcombine.high %v1022, %v1022
        %v1031 = vcombine.high %v1029, %v1029
        %v1033 = vunpack.c.l.s4 1966171168
        %v1034 = vunpack.c.0.s8 %v1033
        %v1035 = vlaneseq
        %v1036 = vshrl.u32 %v1035, 7
        %v1037 = vsub.s32 %v1034, %v1036
        %v1038 = vrot.slane %v1022, %v1037
        %v1040 = vunpack.c.l.s4 1966171168
        %v1041 = vunpack.c.0.s8 %v1040
        %v1042 = vlaneseq
        %v1043 = vshrl.u32 %v1042, 7
        %v1044 = vsub.s32 %v1041, %v1043
        %v1045 = vrot.slane %v1029, %v1044
        %v1047 = vunpack.c.l.s4 1966171168
        %v1048 = vunpack.c.0.s8 %v1047
        %v1049 = vlaneseq
        %v1050 = vshrl.u32 %v1049, 7
        %v1051 = vsub.s32 %v1048, %v1050
        %v1052 = vrot.slane %v1030, %v1051
        %v1054 = vunpack.c.l.s4 1966171168
        %v1055 = vunpack.c.0.s8 %v1054
        %v1056 = vlaneseq
        %v1057 = vshrl.u32 %v1056, 7
        %v1058 = vsub.s32 %v1055, %v1057
        %v1059 = vrot.slane %v1031, %v1058
        %v1060 = vcombine.high %v1038, %v1038
        %v1061 = vcombine.high %v1045, %v1045
        %v1062 = vcombine.high %v1052, %v1052
        %v1063 = vcombine.high %v1059, %v1059
        %v1064 = vlaneseq
        %v1065 = vshrl.u32 %v1064, 7
        %v1066 = vsub.s32 0, %v1065
        %v1067 = vrot.slane %v1038, %v1066
        %v1068 = vlaneseq
        %v1069 = vshrl.u32 %v1068, 7
        %v1070 = vsub.s32 0, %v1069
        %v1071 = vrot.slane %v1052, %v1070
        %v1072 = vlaneseq
        %v1073 = vshrl.u32 %v1072, 7
        %v1074 = vsub.s32 0, %v1073
        %v1075 = vrot.slane %v1060, %v1074
        %v1076 = vlaneseq
        %v1077 = vshrl.u32 %v1076, 7
        %v1078 = vsub.s32 0, %v1077
        %v1079 = vrot.slane %v1062, %v1078
        %v1080 = vlaneseq
        %v1081 = vshrl.u32 %v1080, 7
        %v1082 = vsub.s32 0, %v1081
        %v1083 = vrot.slane %v1045, %v1082
        %v1084 = vlaneseq
        %v1085 = vshrl.u32 %v1084, 7
        %v1086 = vsub.s32 0, %v1085
        %v1087 = vrot.slane %v1059, %v1086
        %v1088 = vlaneseq
        %v1089 = vshrl.u32 %v1088, 7
        %v1090 = vsub.s32 0, %v1089
        %v1091 = vrot.slane %v1061, %v1090
        %v1092 = vlaneseq
        %v1093 = vshrl.u32 %v1092, 7
        %v1094 = vsub.s32 0, %v1093
        %v1095 = vrot.slane %v1063, %v1094
        %v1104 = vmul.f32 %v1067, %v1009
        %v1105 = vmul.f32 %v1067, %v1010
        %v1106 = vmul.f32 %v1071, %v1009
        %v1107 = vmul.f32 %v1071, %v1010
        %v1108 = vmul.f32 %v1075, %v1009
        %v1109 = vmul.f32 %v1075, %v1010
        %v1110 = vmul.f32 %v1079, %v1009
        %v1111 = vmul.f32 %v1079, %v1010
        %v1112 = vmul.f32 %v1083, %v1009
        %v1113 = vmul.f32 %v1083, %v1010
        %v1114 = vmul.f32 %v1087, %v1009
        %v1115 = vmul.f32 %v1087, %v1010
        %v1116 = vmul.f32 %v1091, %v1009
        %v1117 = vmul.f32 %v1091, %v1010
        %v1118 = vmul.f32 %v1095, %v1009
        %v1119 = vmul.f32 %v1095, %v1010
        %v1120 = vmul.f32 %v1104, 1.442695
        %v1121 = vpow.pop %v1120
        %v1122 = vmul.f32 %v1105, 1.442695
        %v1123 = vpow.pop %v1122
        %v1124 = vmul.f32 %v1106, 1.442695
        %v1125 = vpow.pop %v1124
        %v1126 = vmul.f32 %v1107, 1.442695
        %v1127 = vpow.pop %v1126
        %v1128 = vmul.f32 %v1108, 1.442695
        %v1129 = vpow.pop %v1128
        %v1130 = vmul.f32 %v1109, 1.442695
        %v1131 = vpow.pop %v1130
        %v1132 = vmul.f32 %v1110, 1.442695
        %v1133 = vpow.pop %v1132
        %v1134 = vmul.f32 %v1111, 1.442695
        %v1135 = vpow.pop %v1134
        %v1136 = vmul.f32 %v1112, 1.442695
        %v1137 = vpow.pop %v1136
        %v1138 = vmul.f32 %v1113, 1.442695
        %v1139 = vpow.pop %v1138
        %v1140 = vmul.f32 %v1114, 1.442695
        %v1141 = vpow.pop %v1140
        %v1142 = vmul.f32 %v1115, 1.442695
        %v1143 = vpow.pop %v1142
        %v1144 = vmul.f32 %v1116, 1.442695
        %v1145 = vpow.pop %v1144
        %v1146 = vmul.f32 %v1117, 1.442695
        %v1147 = vpow.pop %v1146
        %v1148 = vmul.f32 %v1118, 1.442695
        %v1149 = vpow.pop %v1148
        %v1150 = vmul.f32 %v1119, 1.442695
        %v1151 = vpow.pop %v1150
        %1152 = vst.msk [vmem:[#allocation7] sm:$0xff] %vm803, %v1121
        %1153 = vst.msk [vmem:[#allocation7 + $0x8] sm:$0xff] %vm803, %v1123
        %1154 = vst.msk [vmem:[#allocation7 + $0x10] sm:$0xff] %vm803, %v1125
        %1155 = vst.msk [vmem:[#allocation7 + $0x18] sm:$0xff] %vm803, %v1127
        %1156 = vst.msk [vmem:[#allocation7 + $0x20] sm:$0xff] %vm803, %v1129
        %1157 = vst.msk [vmem:[#allocation7 + $0x28] sm:$0xff] %vm803, %v1131
        %1158 = vst.msk [vmem:[#allocation7 + $0x30] sm:$0xff] %vm803, %v1133
        %1159 = vst.msk [vmem:[#allocation7 + $0x38] sm:$0xff] %vm803, %v1135
        %1160 = vst.msk [vmem:[#allocation7 + $0x40] sm:$0xff] %vm803, %v1137
        %1161 = vst.msk [vmem:[#allocation7 + $0x48] sm:$0xff] %vm803, %v1139
        %1162 = vst.msk [vmem:[#allocation7 + $0x50] sm:$0xff] %vm803, %v1141
        %1163 = vst.msk [vmem:[#allocation7 + $0x58] sm:$0xff] %vm803, %v1143
        %1164 = vst.msk [vmem:[#allocation7 + $0x60] sm:$0xff] %vm803, %v1145
        %1165 = vst.msk [vmem:[#allocation7 + $0x68] sm:$0xff] %vm803, %v1147
        %1166 = vst.msk [vmem:[#allocation7 + $0x70] sm:$0xff] %vm803, %v1149
        %1167 = vst.msk [vmem:[#allocation7 + $0x78] sm:$0xff] %vm803, %v1151
        %v1169 = vcombine.high %v1012, %v1012
        %v1171 = vunpack.c.l.s4 1966171168
        %v1172 = vunpack.c.0.s8 %v1171
        %v1173 = vlaneseq
        %v1174 = vshrl.u32 %v1173, 7
        %v1175 = vsub.s32 %v1172, %v1174
        %v1176 = vrot.slane %v1012, %v1175
        %v1178 = vunpack.c.l.s4 1966171168
        %v1179 = vunpack.c.0.s8 %v1178
        %v1180 = vlaneseq
        %v1181 = vshrl.u32 %v1180, 7
        %v1182 = vsub.s32 %v1179, %v1181
        %v1183 = vrot.slane %v1169, %v1182
        %v1184 = vcombine.high %v1176, %v1176
        %v1185 = vcombine.high %v1183, %v1183
        %v1187 = vunpack.c.l.s4 1966171168
        %v1188 = vunpack.c.0.s8 %v1187
        %v1189 = vlaneseq
        %v1190 = vshrl.u32 %v1189, 7
        %v1191 = vsub.s32 %v1188, %v1190
        %v1192 = vrot.slane %v1176, %v1191
        %v1194 = vunpack.c.l.s4 1966171168
        %v1195 = vunpack.c.0.s8 %v1194
        %v1196 = vlaneseq
        %v1197 = vshrl.u32 %v1196, 7
        %v1198 = vsub.s32 %v1195, %v1197
        %v1199 = vrot.slane %v1183, %v1198
        %v1201 = vunpack.c.l.s4 1966171168
        %v1202 = vunpack.c.0.s8 %v1201
        %v1203 = vlaneseq
        %v1204 = vshrl.u32 %v1203, 7
        %v1205 = vsub.s32 %v1202, %v1204
        %v1206 = vrot.slane %v1184, %v1205
        %v1208 = vunpack.c.l.s4 1966171168
        %v1209 = vunpack.c.0.s8 %v1208
        %v1210 = vlaneseq
        %v1211 = vshrl.u32 %v1210, 7
        %v1212 = vsub.s32 %v1209, %v1211
        %v1213 = vrot.slane %v1185, %v1212
        %v1214 = vcombine.high %v1192, %v1192
        %v1215 = vcombine.high %v1199, %v1199
        %v1216 = vcombine.high %v1206, %v1206
        %v1217 = vcombine.high %v1213, %v1213
        %v1218 = vlaneseq
        %v1219 = vshrl.u32 %v1218, 7
        %v1220 = vsub.s32 0, %v1219
        %v1221 = vrot.slane %v1013, %v1220
        %1223 = vbcast.lane.b32.xlu0 %v1221, 256
        %v1224 = vpop.permute.xlu0 %1223
        %s1226 = sor.u32 256, 8
        %1227 = vbcast.lane.b32.xlu0 %v1221, %s1226
        %v1228 = vpop.permute.xlu0 %1227
        %v1229 = vlaneseq
        %v1230 = vshrl.u32 %v1229, 7
        %v1231 = vsub.s32 1, %v1230
        %v1232 = vrot.slane %v1013, %v1231
        %1234 = vbcast.lane.b32.xlu0 %v1232, 256
        %v1235 = vpop.permute.xlu0 %1234
        %s1237 = sor.u32 256, 8
        %1238 = vbcast.lane.b32.xlu0 %v1232, %s1237
        %v1239 = vpop.permute.xlu0 %1238
        %v1240 = vlaneseq
        %v1241 = vshrl.u32 %v1240, 7
        %v1242 = vsub.s32 2, %v1241
        %v1243 = vrot.slane %v1013, %v1242
        %1245 = vbcast.lane.b32.xlu0 %v1243, 256
        %v1246 = vpop.permute.xlu0 %1245
        %s1248 = sor.u32 256, 8
        %1249 = vbcast.lane.b32.xlu0 %v1243, %s1248
        %v1250 = vpop.permute.xlu0 %1249
        %v1251 = vlaneseq
        %v1252 = vshrl.u32 %v1251, 7
        %v1253 = vsub.s32 3, %v1252
        %v1254 = vrot.slane %v1013, %v1253
        %1256 = vbcast.lane.b32.xlu0 %v1254, 256
        %v1257 = vpop.permute.xlu0 %1256
        %s1259 = sor.u32 256, 8
        %1260 = vbcast.lane.b32.xlu0 %v1254, %s1259
        %v1261 = vpop.permute.xlu0 %1260
        %v1262 = vlaneseq
        %v1263 = vshrl.u32 %v1262, 7
        %v1264 = vsub.s32 4, %v1263
        %v1265 = vrot.slane %v1013, %v1264
        %1267 = vbcast.lane.b32.xlu0 %v1265, 256
        %v1268 = vpop.permute.xlu0 %1267
        %s1270 = sor.u32 256, 8
        %1271 = vbcast.lane.b32.xlu0 %v1265, %s1270
        %v1272 = vpop.permute.xlu0 %1271
        %v1273 = vlaneseq
        %v1274 = vshrl.u32 %v1273, 7
        %v1275 = vsub.s32 5, %v1274
        %v1276 = vrot.slane %v1013, %v1275
        %1278 = vbcast.lane.b32.xlu0 %v1276, 256
        %v1279 = vpop.permute.xlu0 %1278
        %s1281 = sor.u32 256, 8
        %1282 = vbcast.lane.b32.xlu0 %v1276, %s1281
        %v1283 = vpop.permute.xlu0 %1282
        %v1284 = vlaneseq
        %v1285 = vshrl.u32 %v1284, 7
        %v1286 = vsub.s32 6, %v1285
        %v1287 = vrot.slane %v1013, %v1286
        %1289 = vbcast.lane.b32.xlu0 %v1287, 256
        %v1290 = vpop.permute.xlu0 %1289
        %s1292 = sor.u32 256, 8
        %1293 = vbcast.lane.b32.xlu0 %v1287, %s1292
        %v1294 = vpop.permute.xlu0 %1293
        %v1295 = vlaneseq
        %v1296 = vshrl.u32 %v1295, 7
        %v1297 = vsub.s32 7, %v1296
        %v1298 = vrot.slane %v1013, %v1297
        %1300 = vbcast.lane.b32.xlu0 %v1298, 256
        %v1301 = vpop.permute.xlu0 %1300
        %s1303 = sor.u32 256, 8
        %1304 = vbcast.lane.b32.xlu0 %v1298, %s1303
        %v1305 = vpop.permute.xlu0 %1304
        %v1306 = vlaneseq
        %v1307 = vshrl.u32 %v1306, 7
        %v1308 = vsub.s32 0, %v1307
        %v1309 = vrot.slane %v1192, %v1308
        %v1310 = vlaneseq
        %v1311 = vshrl.u32 %v1310, 7
        %v1312 = vsub.s32 0, %v1311
        %v1313 = vrot.slane %v1206, %v1312
        %v1314 = vlaneseq
        %v1315 = vshrl.u32 %v1314, 7
        %v1316 = vsub.s32 0, %v1315
        %v1317 = vrot.slane %v1214, %v1316
        %v1318 = vlaneseq
        %v1319 = vshrl.u32 %v1318, 7
        %v1320 = vsub.s32 0, %v1319
        %v1321 = vrot.slane %v1216, %v1320
        %v1322 = vlaneseq
        %v1323 = vshrl.u32 %v1322, 7
        %v1324 = vsub.s32 0, %v1323
        %v1325 = vrot.slane %v1199, %v1324
        %v1326 = vlaneseq
        %v1327 = vshrl.u32 %v1326, 7
        %v1328 = vsub.s32 0, %v1327
        %v1329 = vrot.slane %v1213, %v1328
        %v1330 = vlaneseq
        %v1331 = vshrl.u32 %v1330, 7
        %v1332 = vsub.s32 0, %v1331
        %v1333 = vrot.slane %v1215, %v1332
        %v1334 = vlaneseq
        %v1335 = vshrl.u32 %v1334, 7
        %v1336 = vsub.s32 0, %v1335
        %v1337 = vrot.slane %v1217, %v1336
        %v1346 = vmul.f32 %v1309, %v1224
        %v1347 = vmul.f32 %v1309, %v1228
        %v1348 = vmul.f32 %v1313, %v1235
        %v1349 = vmul.f32 %v1313, %v1239
        %v1350 = vmul.f32 %v1317, %v1246
        %v1351 = vmul.f32 %v1317, %v1250
        %v1352 = vmul.f32 %v1321, %v1257
        %v1353 = vmul.f32 %v1321, %v1261
        %v1354 = vmul.f32 %v1325, %v1268
        %v1355 = vmul.f32 %v1325, %v1272
        %v1356 = vmul.f32 %v1329, %v1279
        %v1357 = vmul.f32 %v1329, %v1283
        %v1358 = vmul.f32 %v1333, %v1290
        %v1359 = vmul.f32 %v1333, %v1294
        %v1360 = vmul.f32 %v1337, %v1301
        %v1361 = vmul.f32 %v1337, %v1305
        %1362 = vst.msk [vmem:[#allocation8] sm:$0xff] %vm803, %v1346
        %1363 = vst.msk [vmem:[#allocation8 + $0x8] sm:$0xff] %vm803, %v1347
        %1364 = vst.msk [vmem:[#allocation8 + $0x10] sm:$0xff] %vm803, %v1348
        %1365 = vst.msk [vmem:[#allocation8 + $0x18] sm:$0xff] %vm803, %v1349
        %1366 = vst.msk [vmem:[#allocation8 + $0x20] sm:$0xff] %vm803, %v1350
        %1367 = vst.msk [vmem:[#allocation8 + $0x28] sm:$0xff] %vm803, %v1351
        %1368 = vst.msk [vmem:[#allocation8 + $0x30] sm:$0xff] %vm803, %v1352
        %1369 = vst.msk [vmem:[#allocation8 + $0x38] sm:$0xff] %vm803, %v1353
        %1370 = vst.msk [vmem:[#allocation8 + $0x40] sm:$0xff] %vm803, %v1354
        %1371 = vst.msk [vmem:[#allocation8 + $0x48] sm:$0xff] %vm803, %v1355
        %1372 = vst.msk [vmem:[#allocation8 + $0x50] sm:$0xff] %vm803, %v1356
        %1373 = vst.msk [vmem:[#allocation8 + $0x58] sm:$0xff] %vm803, %v1357
        %1374 = vst.msk [vmem:[#allocation8 + $0x60] sm:$0xff] %vm803, %v1358
        %1375 = vst.msk [vmem:[#allocation8 + $0x68] sm:$0xff] %vm803, %v1359
        %1376 = vst.msk [vmem:[#allocation8 + $0x70] sm:$0xff] %vm803, %v1360
        %1377 = vst.msk [vmem:[#allocation8 + $0x78] sm:$0xff] %vm803, %v1361
        %s1379 = sor.u32 256, 16
        %1380 = vbcast.lane.b32.xlu0 %v1221, %s1379
        %v1381 = vpop.permute.xlu0 %1380
        %s1383 = sor.u32 256, 24
        %1384 = vbcast.lane.b32.xlu0 %v1221, %s1383
        %v1385 = vpop.permute.xlu0 %1384
        %s1387 = sor.u32 256, 16
        %1388 = vbcast.lane.b32.xlu0 %v1232, %s1387
        %v1389 = vpop.permute.xlu0 %1388
        %s1391 = sor.u32 256, 24
        %1392 = vbcast.lane.b32.xlu0 %v1232, %s1391
        %v1393 = vpop.permute.xlu0 %1392
        %s1395 = sor.u32 256, 16
        %1396 = vbcast.lane.b32.xlu0 %v1243, %s1395
        %v1397 = vpop.permute.xlu0 %1396
        %s1399 = sor.u32 256, 24
        %1400 = vbcast.lane.b32.xlu0 %v1243, %s1399
        %v1401 = vpop.permute.xlu0 %1400
        %s1403 = sor.u32 256, 16
        %1404 = vbcast.lane.b32.xlu0 %v1254, %s1403
        %v1405 = vpop.permute.xlu0 %1404
        %s1407 = sor.u32 256, 24
        %1408 = vbcast.lane.b32.xlu0 %v1254, %s1407
        %v1409 = vpop.permute.xlu0 %1408
        %s1411 = sor.u32 256, 16
        %1412 = vbcast.lane.b32.xlu0 %v1265, %s1411
        %v1413 = vpop.permute.xlu0 %1412
        %s1415 = sor.u32 256, 24
        %1416 = vbcast.lane.b32.xlu0 %v1265, %s1415
        %v1417 = vpop.permute.xlu0 %1416
        %s1419 = sor.u32 256, 16
        %1420 = vbcast.lane.b32.xlu0 %v1276, %s1419
        %v1421 = vpop.permute.xlu0 %1420
        %s1423 = sor.u32 256, 24
        %1424 = vbcast.lane.b32.xlu0 %v1276, %s1423
        %v1425 = vpop.permute.xlu0 %1424
        %s1427 = sor.u32 256, 16
        %1428 = vbcast.lane.b32.xlu0 %v1287, %s1427
        %v1429 = vpop.permute.xlu0 %1428
        %s1431 = sor.u32 256, 24
        %1432 = vbcast.lane.b32.xlu0 %v1287, %s1431
        %v1433 = vpop.permute.xlu0 %1432
        %s1435 = sor.u32 256, 16
        %1436 = vbcast.lane.b32.xlu0 %v1298, %s1435
        %v1437 = vpop.permute.xlu0 %1436
        %s1439 = sor.u32 256, 24
        %1440 = vbcast.lane.b32.xlu0 %v1298, %s1439
        %v1441 = vpop.permute.xlu0 %1440
        %1442 = vst.msk [vmem:[#allocation9] sm:$0xff] %vm803, %v1381
        %1443 = vst.msk [vmem:[#allocation9 + $0x8] sm:$0xff] %vm803, %v1385
        %1444 = vst.msk [vmem:[#allocation9 + $0x10] sm:$0xff] %vm803, %v1389
        %1445 = vst.msk [vmem:[#allocation9 + $0x18] sm:$0xff] %vm803, %v1393
        %1446 = vst.msk [vmem:[#allocation9 + $0x20] sm:$0xff] %vm803, %v1397
        %1447 = vst.msk [vmem:[#allocation9 + $0x28] sm:$0xff] %vm803, %v1401
        %1448 = vst.msk [vmem:[#allocation9 + $0x30] sm:$0xff] %vm803, %v1405
        %1449 = vst.msk [vmem:[#allocation9 + $0x38] sm:$0xff] %vm803, %v1409
        %1450 = vst.msk [vmem:[#allocation9 + $0x40] sm:$0xff] %vm803, %v1413
        %1451 = vst.msk [vmem:[#allocation9 + $0x48] sm:$0xff] %vm803, %v1417
        %1452 = vst.msk [vmem:[#allocation9 + $0x50] sm:$0xff] %vm803, %v1421
        %1453 = vst.msk [vmem:[#allocation9 + $0x58] sm:$0xff] %vm803, %v1425
        %1454 = vst.msk [vmem:[#allocation9 + $0x60] sm:$0xff] %vm803, %v1429
        %1455 = vst.msk [vmem:[#allocation9 + $0x68] sm:$0xff] %vm803, %v1433
        %1456 = vst.msk [vmem:[#allocation9 + $0x70] sm:$0xff] %vm803, %v1437
        %1457 = vst.msk [vmem:[#allocation9 + $0x78] sm:$0xff] %vm803, %v1441
        %v1458 = vld [vmem:[#allocation7] sm:$0xff]
        %v1459 = vld [vmem:[#allocation7 + $0x8] sm:$0xff]
        %v1460 = vld [vmem:[#allocation2] sm:$0xff]
        %v1461 = vld [vmem:[#allocation2 + $0x8] sm:$0xff]
        %v1462 = vmul.f32 %v1458, %v1460
        %v1463 = vmul.f32 %v1459, %v1461
        %v1464 = vld [vmem:[#allocation8] sm:$0xff]
        %v1465 = vld [vmem:[#allocation8 + $0x8] sm:$0xff]
        %v1466 = vadd.f32 %v1462, %v1464
        %v1467 = vadd.f32 %v1463, %v1465
        %1468 = vst.msk [vmem:[#allocation2] sm:$0xff] %vm803, %v1466
        %1469 = vst.msk [vmem:[#allocation2 + $0x8] sm:$0xff] %vm803, %v1467
        %v1470 = vld [vmem:[#allocation9] sm:$0xff]
        %v1471 = vld [vmem:[#allocation9 + $0x8] sm:$0xff]
        %v1472 = vmul.f32 %v1466, %v1470
        %v1473 = vmul.f32 %v1467, %v1471
        %v1474 = vsel %vm803, %v1472, 0.0
        %v1475 = vsel %vm803, %v1473, 0.0
        %v1476 = vadd.f32 %v1474, %v1475
        %v1477 = vrot.slane %v1476, 4
        %v1478 = vadd.f32 %v1476, %v1477
        %v1479 = vrot.slane %v1478, 2
        %v1480 = vadd.f32 %v1478, %v1479
        %v1481 = vrot.slane %v1480, 1
        %v1482 = vadd.f32 %v1480, %v1481
        %vm1483 = vcmask 516096
        %1484 = vst.msk [vmem:[#allocation5] sm:$0x1] %vm1483, %v1482
        %s1485 = scalar_lea.vmem [#allocation7], 16
        %v1486 = vld [vmem:[%s1485] sm:$0xff]
        %v1487 = vld [vmem:[%s1485 + $0x8] sm:$0xff]
        %v1488 = vld [vmem:[#allocation2] sm:$0xff]
        %v1489 = vld [vmem:[#allocation2 + $0x8] sm:$0xff]
        %v1490 = vmul.f32 %v1486, %v1488
        %v1491 = vmul.f32 %v1487, %v1489
        %s1492 = scalar_lea.vmem [#allocation8], 16
        %v1493 = vld [vmem:[%s1492] sm:$0xff]
        %v1494 = vld [vmem:[%s1492 + $0x8] sm:$0xff]
        %v1495 = vadd.f32 %v1490, %v1493
        %v1496 = vadd.f32 %v1491, %v1494
        %1497 = vst.msk [vmem:[#allocation2] sm:$0xff] %vm803, %v1495
        %1498 = vst.msk [vmem:[#allocation2 + $0x8] sm:$0xff] %vm803, %v1496
        %s1499 = scalar_lea.vmem [#allocation9], 16
        %v1500 = vld [vmem:[%s1499] sm:$0xff]
        %v1501 = vld [vmem:[%s1499 + $0x8] sm:$0xff]
        %v1502 = vmul.f32 %v1495, %v1500
        %v1503 = vmul.f32 %v1496, %v1501
        %v1504 = vsel %vm803, %v1502, 0.0
        %v1505 = vsel %vm803, %v1503, 0.0
        %v1506 = vadd.f32 %v1504, %v1505
        %v1507 = vrot.slane %v1506, 4
        %v1508 = vadd.f32 %v1506, %v1507
        %v1509 = vrot.slane %v1508, 2
        %v1510 = vadd.f32 %v1508, %v1509
        %v1511 = vrot.slane %v1510, 1
        %v1512 = vadd.f32 %v1510, %v1511
        %s1513 = sadd.s32 0, 1
        %s1514 = scalar_lea.vmem [#allocation5], %s1513
        %1515 = vst.msk [vmem:[%s1514] sm:$0x1] %vm1483, %v1512
        %s1516 = scalar_lea.vmem [#allocation7], 32
        %v1517 = vld [vmem:[%s1516] sm:$0xff]
        %v1518 = vld [vmem:[%s1516 + $0x8] sm:$0xff]
        %v1519 = vld [vmem:[#allocation2] sm:$0xff]
        %v1520 = vld [vmem:[#allocation2 + $0x8] sm:$0xff]
        %v1521 = vmul.f32 %v1517, %v1519
        %v1522 = vmul.f32 %v1518, %v1520
        %s1523 = scalar_lea.vmem [#allocation8], 32
        %v1524 = vld [vmem:[%s1523] sm:$0xff]
        %v1525 = vld [vmem:[%s1523 + $0x8] sm:$0xff]
        %v1526 = vadd.f32 %v1521, %v1524
        %v1527 = vadd.f32 %v1522, %v1525
        %1528 = vst.msk [vmem:[#allocation2] sm:$0xff] %vm803, %v1526
        %1529 = vst.msk [vmem:[#allocation2 + $0x8] sm:$0xff] %vm803, %v1527
        %s1530 = scalar_lea.vmem [#allocation9], 32
        %v1531 = vld [vmem:[%s1530] sm:$0xff]
        %v1532 = vld [vmem:[%s1530 + $0x8] sm:$0xff]
        %v1533 = vmul.f32 %v1526, %v1531
        %v1534 = vmul.f32 %v1527, %v1532
        %v1535 = vsel %vm803, %v1533, 0.0
        %v1536 = vsel %vm803, %v1534, 0.0
        %v1537 = vadd.f32 %v1535, %v1536
        %v1538 = vrot.slane %v1537, 4
        %v1539 = vadd.f32 %v1537, %v1538
        %v1540 = vrot.slane %v1539, 2
        %v1541 = vadd.f32 %v1539, %v1540
        %v1542 = vrot.slane %v1541, 1
        %v1543 = vadd.f32 %v1541, %v1542
        %s1544 = sadd.s32 0, 2
        %s1545 = scalar_lea.vmem [#allocation5], %s1544
        %1546 = vst.msk [vmem:[%s1545] sm:$0x1] %vm1483, %v1543
        %s1547 = scalar_lea.vmem [#allocation7], 48
        %v1548 = vld [vmem:[%s1547] sm:$0xff]
        %v1549 = vld [vmem:[%s1547 + $0x8] sm:$0xff]
        %v1550 = vld [vmem:[#allocation2] sm:$0xff]
        %v1551 = vld [vmem:[#allocation2 + $0x8] sm:$0xff]
        %v1552 = vmul.f32 %v1548, %v1550
        %v1553 = vmul.f32 %v1549, %v1551
        %s1554 = scalar_lea.vmem [#allocation8], 48
        %v1555 = vld [vmem:[%s1554] sm:$0xff]
        %v1556 = vld [vmem:[%s1554 + $0x8] sm:$0xff]
        %v1557 = vadd.f32 %v1552, %v1555
        %v1558 = vadd.f32 %v1553, %v1556
        %1559 = vst.msk [vmem:[#allocation2] sm:$0xff] %vm803, %v1557
        %1560 = vst.msk [vmem:[#allocation2 + $0x8] sm:$0xff] %vm803, %v1558
        %s1561 = scalar_lea.vmem [#allocation9], 48
        %v1562 = vld [vmem:[%s1561] sm:$0xff]
        %v1563 = vld [vmem:[%s1561 + $0x8] sm:$0xff]
        %v1564 = vmul.f32 %v1557, %v1562
        %v1565 = vmul.f32 %v1558, %v1563
        %v1566 = vsel %vm803, %v1564, 0.0
        %v1567 = vsel %vm803, %v1565, 0.0
        %v1568 = vadd.f32 %v1566, %v1567
        %v1569 = vrot.slane %v1568, 4
        %v1570 = vadd.f32 %v1568, %v1569
        %v1571 = vrot.slane %v1570, 2
        %v1572 = vadd.f32 %v1570, %v1571
        %v1573 = vrot.slane %v1572, 1
        %v1574 = vadd.f32 %v1572, %v1573
        %s1575 = sadd.s32 0, 3
        %s1576 = scalar_lea.vmem [#allocation5], %s1575
        %1577 = vst.msk [vmem:[%s1576] sm:$0x1] %vm1483, %v1574
        %s1578 = scalar_lea.vmem [#allocation7], 64
        %v1579 = vld [vmem:[%s1578] sm:$0xff]
        %v1580 = vld [vmem:[%s1578 + $0x8] sm:$0xff]
        %v1581 = vld [vmem:[#allocation2] sm:$0xff]
        %v1582 = vld [vmem:[#allocation2 + $0x8] sm:$0xff]
        %v1583 = vmul.f32 %v1579, %v1581
        %v1584 = vmul.f32 %v1580, %v1582
        %s1585 = scalar_lea.vmem [#allocation8], 64
        %v1586 = vld [vmem:[%s1585] sm:$0xff]
        %v1587 = vld [vmem:[%s1585 + $0x8] sm:$0xff]
        %v1588 = vadd.f32 %v1583, %v1586
        %v1589 = vadd.f32 %v1584, %v1587
        %1590 = vst.msk [vmem:[#allocation2] sm:$0xff] %vm803, %v1588
        %1591 = vst.msk [vmem:[#allocation2 + $0x8] sm:$0xff] %vm803, %v1589
        %s1592 = scalar_lea.vmem [#allocation9], 64
        %v1593 = vld [vmem:[%s1592] sm:$0xff]
        %v1594 = vld [vmem:[%s1592 + $0x8] sm:$0xff]
        %v1595 = vmul.f32 %v1588, %v1593
        %v1596 = vmul.f32 %v1589, %v1594
        %v1597 = vsel %vm803, %v1595, 0.0
        %v1598 = vsel %vm803, %v1596, 0.0
        %v1599 = vadd.f32 %v1597, %v1598
        %v1600 = vrot.slane %v1599, 4
        %v1601 = vadd.f32 %v1599, %v1600
        %v1602 = vrot.slane %v1601, 2
        %v1603 = vadd.f32 %v1601, %v1602
        %v1604 = vrot.slane %v1603, 1
        %v1605 = vadd.f32 %v1603, %v1604
        %s1606 = sadd.s32 0, 4
        %s1607 = scalar_lea.vmem [#allocation5], %s1606
        %1608 = vst.msk [vmem:[%s1607] sm:$0x1] %vm1483, %v1605
        %s1609 = scalar_lea.vmem [#allocation7], 80
        %v1610 = vld [vmem:[%s1609] sm:$0xff]
        %v1611 = vld [vmem:[%s1609 + $0x8] sm:$0xff]
        %v1612 = vld [vmem:[#allocation2] sm:$0xff]
        %v1613 = vld [vmem:[#allocation2 + $0x8] sm:$0xff]
        %v1614 = vmul.f32 %v1610, %v1612
        %v1615 = vmul.f32 %v1611, %v1613
        %s1616 = scalar_lea.vmem [#allocation8], 80
        %v1617 = vld [vmem:[%s1616] sm:$0xff]
        %v1618 = vld [vmem:[%s1616 + $0x8] sm:$0xff]
        %v1619 = vadd.f32 %v1614, %v1617
        %v1620 = vadd.f32 %v1615, %v1618
        %1621 = vst.msk [vmem:[#allocation2] sm:$0xff] %vm803, %v1619
        %1622 = vst.msk [vmem:[#allocation2 + $0x8] sm:$0xff] %vm803, %v1620
        %s1623 = scalar_lea.vmem [#allocation9], 80
        %v1624 = vld [vmem:[%s1623] sm:$0xff]
        %v1625 = vld [vmem:[%s1623 + $0x8] sm:$0xff]
        %v1626 = vmul.f32 %v1619, %v1624
        %v1627 = vmul.f32 %v1620, %v1625
        %v1628 = vsel %vm803, %v1626, 0.0
        %v1629 = vsel %vm803, %v1627, 0.0
        %v1630 = vadd.f32 %v1628, %v1629
        %v1631 = vrot.slane %v1630, 4
        %v1632 = vadd.f32 %v1630, %v1631
        %v1633 = vrot.slane %v1632, 2
        %v1634 = vadd.f32 %v1632, %v1633
        %v1635 = vrot.slane %v1634, 1
        %v1636 = vadd.f32 %v1634, %v1635
        %s1637 = sadd.s32 0, 5
        %s1638 = scalar_lea.vmem [#allocation5], %s1637
        %1639 = vst.msk [vmem:[%s1638] sm:$0x1] %vm1483, %v1636
        %s1640 = scalar_lea.vmem [#allocation7], 96
        %v1641 = vld [vmem:[%s1640] sm:$0xff]
        %v1642 = vld [vmem:[%s1640 + $0x8] sm:$0xff]
        %v1643 = vld [vmem:[#allocation2] sm:$0xff]
        %v1644 = vld [vmem:[#allocation2 + $0x8] sm:$0xff]
        %v1645 = vmul.f32 %v1641, %v1643
        %v1646 = vmul.f32 %v1642, %v1644
        %s1647 = scalar_lea.vmem [#allocation8], 96
        %v1648 = vld [vmem:[%s1647] sm:$0xff]
        %v1649 = vld [vmem:[%s1647 + $0x8] sm:$0xff]
        %v1650 = vadd.f32 %v1645, %v1648
        %v1651 = vadd.f32 %v1646, %v1649
        %1652 = vst.msk [vmem:[#allocation2] sm:$0xff] %vm803, %v1650
        %1653 = vst.msk [vmem:[#allocation2 + $0x8] sm:$0xff] %vm803, %v1651
        %s1654 = scalar_lea.vmem [#allocation9], 96
        %v1655 = vld [vmem:[%s1654] sm:$0xff]
        %v1656 = vld [vmem:[%s1654 + $0x8] sm:$0xff]
        %v1657 = vmul.f32 %v1650, %v1655
        %v1658 = vmul.f32 %v1651, %v1656
        %v1659 = vsel %vm803, %v1657, 0.0
        %v1660 = vsel %vm803, %v1658, 0.0
        %v1661 = vadd.f32 %v1659, %v1660
        %v1662 = vrot.slane %v1661, 4
        %v1663 = vadd.f32 %v1661, %v1662
        %v1664 = vrot.slane %v1663, 2
        %v1665 = vadd.f32 %v1663, %v1664
        %v1666 = vrot.slane %v1665, 1
        %v1667 = vadd.f32 %v1665, %v1666
        %s1668 = sadd.s32 0, 6
        %s1669 = scalar_lea.vmem [#allocation5], %s1668
        %1670 = vst.msk [vmem:[%s1669] sm:$0x1] %vm1483, %v1667
        %s1671 = scalar_lea.vmem [#allocation7], 112
        %v1672 = vld [vmem:[%s1671] sm:$0xff]
        %v1673 = vld [vmem:[%s1671 + $0x8] sm:$0xff]
        %v1674 = vld [vmem:[#allocation2] sm:$0xff]
        %v1675 = vld [vmem:[#allocation2 + $0x8] sm:$0xff]
        %v1676 = vmul.f32 %v1672, %v1674
        %v1677 = vmul.f32 %v1673, %v1675
        %s1678 = scalar_lea.vmem [#allocation8], 112
        %v1679 = vld [vmem:[%s1678] sm:$0xff]
        %v1680 = vld [vmem:[%s1678 + $0x8] sm:$0xff]
        %v1681 = vadd.f32 %v1676, %v1679
        %v1682 = vadd.f32 %v1677, %v1680
        %1683 = vst.msk [vmem:[#allocation2] sm:$0xff] %vm803, %v1681
        %1684 = vst.msk [vmem:[#allocation2 + $0x8] sm:$0xff] %vm803, %v1682
        %s1685 = scalar_lea.vmem [#allocation9], 112
        %v1686 = vld [vmem:[%s1685] sm:$0xff]
        %v1687 = vld [vmem:[%s1685 + $0x8] sm:$0xff]
        %v1688 = vmul.f32 %v1681, %v1686
        %v1689 = vmul.f32 %v1682, %v1687
        %v1690 = vsel %vm803, %v1688, 0.0
        %v1691 = vsel %vm803, %v1689, 0.0
        %v1692 = vadd.f32 %v1690, %v1691
        %v1693 = vrot.slane %v1692, 4
        %v1694 = vadd.f32 %v1692, %v1693
        %v1695 = vrot.slane %v1694, 2
        %v1696 = vadd.f32 %v1694, %v1695
        %v1697 = vrot.slane %v1696, 1
        %v1698 = vadd.f32 %v1696, %v1697
        %s1699 = sadd.s32 0, 7
        %s1700 = scalar_lea.vmem [#allocation5], %s1699
        %1701 = vst.msk [vmem:[%s1700] sm:$0x1] %vm1483, %v1698
        %v1702 = vld [vmem:[#allocation5] sm:$0xff]
        %v1703 = vld [vmem:[#allocation28] sm:$0x1]
        %v1705 = vlaneseq
        %v1706 = vshrl.u32 %v1705, 7
        %v1707 = vsub.s32 0, %v1706
        %v1708 = vrot.slane %v1703, %v1707
        %v1710 = vmul.f32 %v853, %v1708
        %v1711 = vadd.f32 %v1702, %v1710
        %v1712 = vsub.f32 0.0, %v798
        %v1713 = vmul.f32 %v1712, 1.442695
        %v1714 = vpow.pop %v1713
        %v1715 = vadd.f32 %v1714, 1.0
        %v1716 = vrcp.pop %v1715
        %v1717 = vmul.f32 %v798, %v1716
        %1719 = vrot.lane.b32.xlu0 %v1717, 64
        %v1720 = vpop.permute.xlu0 %1719
        %v1722 = vmul.f32 %v1711, %v1720
        %v1723 = vpack.c.bf16 %v1722, %v1722
        %v1724 = vld [vmem:[#allocation30] sm:$0xf]
        %v1725 = vld [vmem:[#allocation30 + $0x4] sm:$0xf]
        %v1726 = vld [vmem:[#allocation30 + $0x8] sm:$0xf]
        %v1727 = vld [vmem:[#allocation30 + $0xc] sm:$0xf]
        %v1728 = vld [vmem:[#allocation30 + $0x10] sm:$0xf]
        %v1729 = vld [vmem:[#allocation30 + $0x14] sm:$0xf]
        %v1730 = vld [vmem:[#allocation30 + $0x18] sm:$0xf]
        %v1731 = vld [vmem:[#allocation30 + $0x1c] sm:$0xf]
        %v1740 = vunpack.c.l.b16 %v1724
        %v1741 = vunpack.c.l.b16 %v1725
        %v1742 = vunpack.c.l.b16 %v1726
        %v1743 = vunpack.c.l.b16 %v1727
        %v1744 = vunpack.c.l.b16 %v1728
        %v1745 = vunpack.c.l.b16 %v1729
        %v1746 = vunpack.c.l.b16 %v1730
        %v1747 = vunpack.c.l.b16 %v1731
        %v1748 = vpack.c.b16 %v1741, %v1740
        %v1749 = vpack.c.b16 %v1743, %v1742
        %v1750 = vpack.c.b16 %v1745, %v1744
        %v1751 = vpack.c.b16 %v1747, %v1746
        %v1757 = vsel %vm803, %v1723, 0
        %1759 = vmatprep.subr.bf16.mxu0 0
        %1760 = vmatpush1.bf16.msra.mxu0 %v1748
        %1761 = vmatprep.subr.bf16.mxu0 0
        %1762 = vmatpush1.bf16.msra.mxu0 %v1749
        %1763 = vmatprep.subr.bf16.mxu0 0
        %1764 = vmatpush1.bf16.msra.mxu0 %v1750
        %1765 = vmatprep.subr.bf16.mxu0 0
        %1766 = vmatpush1.bf16.msra.mxu0 %v1751
        %1767 = vmatprep.subr.bf16.mxu0 0
        %1768 = vmatpush1.bf16.msra.mxu0 0
        %1769 = vmatprep.subr.bf16.mxu0 0
        %1770 = vmatpush1.bf16.msra.mxu0 0
        %1771 = vmatprep.subr.bf16.mxu0 0
        %1772 = vmatpush1.bf16.msra.mxu0 0
        %1773 = vmatprep.subr.bf16.mxu0 0
        %1774 = vmatpush1.bf16.msra.mxu0 0
        %1775 = vmatprep.subr.bf16.mxu0 0
        %1776 = vmatpush1.bf16.msra.mxu0 0
        %1777 = vmatprep.subr.bf16.mxu0 0
        %1778 = vmatpush1.bf16.msra.mxu0 0
        %1779 = vmatprep.subr.bf16.mxu0 0
        %1780 = vmatpush1.bf16.msra.mxu0 0
        %1781 = vmatprep.subr.bf16.mxu0 0
        %1782 = vmatpush1.bf16.msra.mxu0 0
        %1783 = vmatprep.subr.bf16.mxu0 0
        %1784 = vmatpush1.bf16.msra.mxu0 0
        %1785 = vmatprep.subr.bf16.mxu0 0
        %1786 = vmatpush1.bf16.msra.mxu0 0
        %1787 = vmatprep.subr.bf16.mxu0 0
        %1788 = vmatpush1.bf16.msra.mxu0 0
        %1789 = vmatprep.subr.bf16.mxu0 0
        %1790 = vmatpush1.bf16.msra.mxu0 0
        %1791 = vmatprep.mubr.bf16.mxu0 0
        %1792 = vmatmul.mubr.bf16.gmra.mrb[0].mxu0 %v1757
        %v1793 = vpop.f32.mrb[0].mxu0
        %v1794 = vadd.f32 0.0, %v1793
        %v1795 = vpop.f32.mrb[0].mxu0
        %v1796 = vpop.f32.mrb[0].mxu0
        %v1797 = vpop.f32.mrb[0].mxu0
        %1798 = vdwg.mxu0
        %v1799 = vpack.c.bf16 %v1794, %v1794
        %vm1800 = vcmask 257024
        %1801 = vst.msk [vmem:[%s690] sm:$0xf] %vm1800, %v1799
        %s1802 = sand.u32 %s352, 1
        %s1803 = scalar_lea.sflag [#allocation12], %s1802
        %s1804 = sand.u32 %s352, 1
        %s1805 = smul.addr %s1804, 4
        %s1806 = scalar_lea.vmem [#allocation31], %s1805
        %s1807 = sand.u32 %s380, 1
        %s1808 = scalar_lea.sflag [#allocation33], %s1807
        %s1809 = sand.u32 %s380, 1
        %s1810 = smul.addr %s1809, 8
        %s1811 = scalar_lea.vmem [#allocation32], %s1810
        // Predicated region
        $region129: #{mixer_model_forward.3} parent=71 // pred_check
          %p1812 = pneg %p362
        $region130: #{mixer_model_forward.3} parent=71 // pred_check_branch
          %1814 = sbr.rel (%p1812) target = $region132
        $region131: #{mixer_model_forward.3} parent=71 // pred_region
          %s1816 = ssub.s32 64, 64
          %1817 = vsyncadd %s1803, %s1816
          %s1818 = sadd.s32 %s48, %s47
          %s1819 = smul.addr %s1818, 64
          %s1820 = scalar_lea.hbm %s13, %s1819
          %s1822 = sshll.u32 %s1806, 4
          %s1823 = int_to_ptr.vmem [resolvable:$true] %s1822
          %1825 = dma.vmem_to_hbm [thread:$0]  %s1823, 64, %s1820, %s1803
        $region132: #{mixer_model_forward.3} parent=71 // pred_fallthru
          _
        // Predicated region
        $region133: #{mixer_model_forward.3} parent=71 // pred_check
          %p1826 = pneg %p390
        $region134: #{mixer_model_forward.3} parent=71 // pred_check_branch
          %1828 = sbr.rel (%p1826) target = $region136
        $region135: #{mixer_model_forward.3} parent=71 // pred_region
          %s1830 = ssub.s32 128, 128
          %1831 = vsyncadd %s1808, %s1830
          %s1832 = sadd.s32 %s48, %s47
          %s1833 = smul.addr %s1832, 128
          %s1834 = scalar_lea.hbm %s14, %s1833
          %s1836 = sshll.u32 %s1811, 4
          %s1837 = int_to_ptr.vmem [resolvable:$true] %s1836
          %1839 = dma.vmem_to_hbm [thread:$0]  %s1837, 128, %s1834, %s1808
        $region136: #{mixer_model_forward.3} parent=71 // pred_fallthru
          _
      $region72: #{mixer_model_forward.3} parent=5 // pred_fallthru
        _
      %p1840 = scmp.le.s32.totalorder 2, %s38
      // Predicated region
      $region137: #{mixer_model_forward.3} parent=5 // pred_check
        %p1841 = pneg %p1840
      $region138: #{mixer_model_forward.3} parent=5 // pred_check_branch
        %1843 = sbr.rel (%p1841) target = $region140
      $region139: #{mixer_model_forward.3} parent=5 // pred_region
        %s1844 = ssub.s32 %s38, 2
        // Predicated region
        $region141: #{mixer_model_forward.3} parent=139 // pred_check
          %p1845 = pneg %p368
        $region142: #{mixer_model_forward.3} parent=139 // pred_check_branch
          %1847 = sbr.rel (%p1845) target = $region144
        $region143: #{mixer_model_forward.3} parent=139 // pred_region
          %s1848 = sand.u32 %s353, 1
          %s1849 = scalar_lea.sflag [#allocation12], %s1848
          %s1850 = sand.u32 %s353, 1
          %s1851 = smul.addr %s1850, 4
          %s1852 = scalar_lea.vmem [#allocation31], %s1851
          %1853 = dma.done %s1849, 64
        $region144: #{mixer_model_forward.3} parent=139 // pred_fallthru
          _
        // Predicated region
        $region145: #{mixer_model_forward.3} parent=139 // pred_check
          %p1854 = pneg %p396
        $region146: #{mixer_model_forward.3} parent=139 // pred_check_branch
          %1856 = sbr.rel (%p1854) target = $region148
        $region147: #{mixer_model_forward.3} parent=139 // pred_region
          %s1857 = sand.u32 %s381, 1
          %s1858 = scalar_lea.sflag [#allocation33], %s1857
          %s1859 = sand.u32 %s381, 1
          %s1860 = smul.addr %s1859, 8
          %s1861 = scalar_lea.vmem [#allocation32], %s1860
          %1862 = dma.done %s1858, 128
        $region148: #{mixer_model_forward.3} parent=139 // pred_fallthru
          _
      $region140: #{mixer_model_forward.3} parent=5 // pred_fallthru
        _
    $region6: #{mixer_model_forward.3} parent=1 // loop_footer
      %s42 = sadd.s32 1, %s38
    $region7: #{mixer_model_forward.3} parent=1 // loop_footer_branch
      %37 = sbr.rel target = $region3
    $region8: #{mixer_model_forward.3} parent=1 // loop_exit
      _
    %1863 = vsyncpa [#allocation11], 1
    %s1864 = scalar_lea.sflag [#allocation11], 1
    %1865 = vsyncpa %s1864, 1
    %1866 = vsyncpa [#allocation14], 1
    %s1867 = scalar_lea.sflag [#allocation14], 1
    %1868 = vsyncpa %s1867, 1
    %1869 = vsyncpa [#allocation17], 1
    %1870 = vsyncpa [#allocation20], 1
    %1871 = vsyncpa [#allocation23], 1
    %1872 = vsyncpa [#allocation26], 1
    %1873 = vsyncpa [#allocation29], 1
    %1874 = vsyncpa [#allocation12], 1
    %s1875 = scalar_lea.sflag [#allocation12], 1
    %1876 = vsyncpa %s1875, 1
    %1877 = vsyncpa [#allocation33], 1
    %s1878 = scalar_lea.sflag [#allocation33], 1
    %1879 = vsyncpa %s1878, 1

</llo_original>
